<compile_context>
chip_gen: v6e
topology: v6e:2x2x1
jax: 0.10.0
libtpu: 0.0.40
codegen_flags: <defaults>
</compile_context>

<pallas_src>
import functools

import jax
import jax.numpy as jnp
from jax import lax
from jax.experimental import pallas as pl
from jax.experimental.pallas import tpu as pltpu


LANES = 128


def _round_up(x, m):
    return ((x + m - 1) // m) * m


def _vmem_limit(block_bytes, scratch_bytes):
    # BlockSpec inputs/outputs are double-buffered (x2); add compute-temp
    # headroom and clamp below v7x's 64 MiB physical VMEM per TensorCore
    # (still above the 16 MiB v5e / 32 MiB v6e-v7x default scoped budgets
    # whenever the footprint needs it).
    need = 2 * block_bytes + scratch_bytes + (4 << 20)
    return int(min(max(need, 24 << 20), 56 << 20))


# -----------------------------------------------------------------------------
# Kernel P: phoneme-level fused kernel, grid=(B, S/tS), both axes "parallel"
# -----------------------------------------------------------------------------
def _phoneme_kernel(lens_ref, geo_ref, enc_ref, spk_ref, refs_ref, emb4_ref,
                    w1_ref, b1_ref, w2_ref, b2_ref, rhs_ref, slab_ref):
    b = pl.program_id(0)
    s_blk = pl.program_id(1)

    enc = enc_ref[0]            # (tS, D) f32
    geo = geo_ref[0]            # (tS, 8) f32: col0 = start frame, col1 = end
    refs = refs_ref[0]          # (Tpad, 8) f32: col0 = pitch, col1 = energy
    spk = spk_ref[...]          # (1, D) f32
    emb4 = emb4_ref[...]        # (4, D) f32: [pitch_w, pitch_b, energy_w, energy_b]

    tS, D = enc.shape
    T = refs.shape[0]
    LAN = w2_ref.shape[1]

    start = geo[:, 0:1]
    end = geo[:, 1:2]
    src_len_b = lens_ref[2 * b]                        # SMEM scalar (prefetched)

    # Padding mask computed in-kernel from iota (no (.., 1) mask DMA).
    s_ids = lax.broadcasted_iota(jnp.int32, (tS, 1), 0) + s_blk * tS
    pad = s_ids >= src_len_b                           # True = padded phoneme

    # Alignment tile (tS, Tpad) rebuilt in VMEM from start/end (never read
    # back from HBM); tiling S keeps this bounded to 256 x Tpad.
    t_ids = lax.broadcasted_iota(jnp.int32, (tS, T), 1).astype(jnp.float32)
    A = jnp.where((t_ids >= start) & (t_ids < end), 1.0, 0.0)

    # Per-phoneme pitch/energy sums in one MXU pass (tiny N=8; kept f32 for
    # exactness — switch to bf16 A + hi/lo refs only if this shows up).
    pe_sum = jnp.dot(A, refs, preferred_element_type=jnp.float32)    # (tS, 8)

    # Duration clamped to >= 1: a valid phoneme with zero frames yields 0
    # (pe_sum row is already 0) instead of 0/0 NaN.  Reciprocal on the EUP.
    dur = jnp.maximum(end - start, 1.0)
    inv_dur = pl.reciprocal(dur, approx=True)          # small-int durations
    pitch_pho = pe_sum[:, 0:1] * inv_dur               # (tS, 1)
    energy_pho = pe_sum[:, 1:2] * inv_dur

    # Fused 3-head predictor MLP (duration / pitch / energy decoders).
    tp = enc + spk                                                     # (tS, D)
    h = jnp.dot(tp.astype(jnp.bfloat16), w1_ref[...],
                preferred_element_type=jnp.float32) + b1_ref[...]      # (tS, 3H)
    h = jnp.maximum(h, 0.0)
    preds = jnp.dot(h.astype(jnp.bfloat16), w2_ref[...],
                    preferred_element_type=jnp.float32) + b2_ref[...]  # (tS, 128)

    # Lane-dense scalar slab (unmasked 128-lane stores):
    #   col0=ref_pitch_pho, col1=ref_energy_pho, col2=d_prediction,
    #   col3=post_pitch, col4=post_energy, cols>=5 zero.
    # W2/b2 cols 0,1,5.. are zero by construction (see pack_params), so adding
    # the averages into lanes 0/1 keeps the columns disjoint.
    lane = lax.broadcasted_iota(jnp.int32, (tS, LAN), 1)
    slab = (preds
            + jnp.where(lane == 0, pitch_pho, 0.0)
            + jnp.where(lane == 1, energy_pho, 0.0))
    slab_ref[0] = jnp.where(pad, 0.0, slab)

    # Linear(1, D) pitch / energy embeddings and the upsample input.
    p_emb = pitch_pho * emb4[0:1, :] + emb4[1:2, :]
    e_emb = energy_pho * emb4[2:3, :] + emb4[3:4, :]
    ups = tp + p_emb + e_emb

    # bf16 RHS slab for the frame kernel: [ups | enc] (128-lane-aligned halves).
    rhs_ref[0, :, 0:D] = ups.astype(jnp.bfloat16)
    rhs_ref[0, :, D:2 * D] = enc.astype(jnp.bfloat16)


def phoneme_pass(lens, geo, enc, spk, refs, emb4, w1s, b1s, w2p, b2p, *, tS=256):
    B, Spad, D = enc.shape
    Tpad = refs.shape[1]
    H3 = w1s.shape[1]
    LAN = w2p.shape[1]
    nS = Spad // tS

    per_bs = lambda b, s, lens_ref: (b, s, 0)
    per_b = lambda b, s, lens_ref: (b, 0, 0)
    shared = lambda b, s, lens_ref: (0, 0)

    block_bytes = ((tS * 8 + tS * D + Tpad * 8 + D + 4 * D + H3 + LAN
                    + tS * LAN) * 4
                   + (D * H3 + H3 * LAN + tS * 2 * D) * 2)
    scratch_bytes = tS * Tpad * 4 + tS * (2 * D + LAN) * 4

    return pl.pallas_call(
        _phoneme_kernel,
        out_shape=(
            jax.ShapeDtypeStruct((B, Spad, 2 * D), jnp.bfloat16),   # [ups | enc]
            jax.ShapeDtypeStruct((B, Spad, LAN), jnp.float32),      # scalar slab
        ),
        grid_spec=pltpu.PrefetchScalarGridSpec(
            num_scalar_prefetch=1,                                   # lens (2B,) i32
            grid=(B, nS),
            in_specs=[
                pl.BlockSpec((1, tS, 8), per_bs),        # geometry [start|end]
                pl.BlockSpec((1, tS, D), per_bs),        # encoder_output
                pl.BlockSpec((1, D), shared),            # spk
                pl.BlockSpec((1, Tpad, 8), per_b),       # pitch/energy refs
                pl.BlockSpec((4, D), shared),            # packed emb params
                pl.BlockSpec((D, H3), shared),           # stacked predictor W1 (bf16)
                pl.BlockSpec((1, H3), shared),           # stacked predictor b1
                pl.BlockSpec((H3, LAN), shared),         # block-diag W2 (bf16, 128 lanes)
                pl.BlockSpec((1, LAN), shared),          # predictor b2 (128 lanes)
            ],
            out_specs=[
                pl.BlockSpec((1, tS, 2 * D), per_bs),
                pl.BlockSpec((1, tS, LAN), per_bs),
            ],
        ),
        compiler_params=pltpu.CompilerParams(
            dimension_semantics=("parallel", "parallel"),
            vmem_limit_bytes=_vmem_limit(block_bytes, scratch_bytes)),
    )(lens, geo, enc, spk, refs, emb4, w1s, b1s, w2p, b2p)


# -----------------------------------------------------------------------------
# Kernel F: frame-level fused kernel (A^T matmul + mel projection), tiled in T
# -----------------------------------------------------------------------------
def _frame_kernel(lens_ref, geo_ref, rhs_ref, dw_ref, db_ref,
                  uptext_ref, mel_ref):
    b = pl.program_id(0)
    tT = uptext_ref.shape[1]
    D = uptext_ref.shape[2]
    S = rhs_ref.shape[1]

    geo = geo_ref[0]                        # (8, Spad): row0 = start, row1 = end
    start = geo[0:1, :]
    end = geo[1:2, :]
    mel_len_b = lens_ref[2 * b + 1]         # SMEM scalar (prefetched)

    t0 = pl.program_id(1) * tT
    t_ids = (lax.broadcasted_iota(jnp.int32, (tT, S), 0) + t0).astype(jnp.float32)
    # Transposed alignment block (tT, Spad) built directly; bf16 exact for 0/1.
    At = jnp.where((t_ids >= start) & (t_ids < end), 1.0, 0.0).astype(jnp.bfloat16)

    # Single MXU pass over the alignment: A^T @ [ups | enc] -> (tT, 2D) f32.
    big = jnp.dot(At, rhs_ref[0], preferred_element_type=jnp.float32)

    # up_text_emb written back in bf16 (halves the largest HBM writeback).
    uptext_ref[0] = big[:, D:2 * D].astype(jnp.bfloat16)

    # Fused decoder projection (D -> 128-lane-padded n_mels); padded frames -> 0,
    # mask computed in-kernel from mel_len (no melmask DMA).
    mel = jnp.dot(big[:, 0:D].astype(jnp.bfloat16), dw_ref[...],
                  preferred_element_type=jnp.float32) + db_ref[...]
    f_ids = lax.broadcasted_iota(jnp.int32, (tT, 1), 0) + t0
    mel_ref[0] = jnp.where(f_ids >= mel_len_b, 0.0, mel)


def frame_pass(lens, geo_t, rhs, dec_w, dec_b, *, Tpad, tT=256):
    B, Spad, D2 = rhs.shape
    D = D2 // 2
    Mpad = dec_w.shape[1]
    nT = pl.cdiv(Tpad, tT)

    block_bytes = (8 * Spad * 4 + Spad * D2 * 2 + D * Mpad * 2 + Mpad * 4
                   + tT * D * 2 + tT * Mpad * 4)
    scratch_bytes = tT * Spad * 4 + tT * D2 * 4

    return pl.pallas_call(
        _frame_kernel,
        out_shape=(
            jax.ShapeDtypeStruct((B, Tpad, D), jnp.bfloat16),       # up_text_emb
            jax.ShapeDtypeStruct((B, Tpad, Mpad), jnp.float32),     # mel (padded)
        ),
        grid_spec=pltpu.PrefetchScalarGridSpec(
            num_scalar_prefetch=1,                                   # lens (2B,) i32
            grid=(B, nT),
            in_specs=[
                pl.BlockSpec((1, 8, Spad), lambda b, t, lens_ref: (b, 0, 0)),
                pl.BlockSpec((1, Spad, D2), lambda b, t, lens_ref: (b, 0, 0)),
                pl.BlockSpec((D, Mpad), lambda b, t, lens_ref: (0, 0)),
                pl.BlockSpec((1, Mpad), lambda b, t, lens_ref: (0, 0)),
            ],
            out_specs=[
                pl.BlockSpec((1, tT, D), lambda b, t, lens_ref: (b, t, 0)),
                pl.BlockSpec((1, tT, Mpad), lambda b, t, lens_ref: (b, t, 0)),
            ],
        ),
        compiler_params=pltpu.CompilerParams(
            dimension_semantics=("parallel", "parallel"),
            vmem_limit_bytes=_vmem_limit(block_bytes, scratch_bytes)),
    )(lens, geo_t, rhs, dec_w, dec_b)


# -----------------------------------------------------------------------------
# Plain-JAX glue (masks, embedding lookup, synthetic alignment, param packing)
# -----------------------------------------------------------------------------
def get_mask_from_lengths(lengths, max_len):
    ids = jnp.arange(max_len, dtype=lengths.dtype)[None, :]
    return ids >= lengths[:, None]                               # True = padding


def synth_alignment(src_len, mel_len, S, T):
    # TODO(synk): VarianceAdaptor's learned aligner is not in the provided
    # source; a deterministic uniform monotonic alignment is synthesized.
    s_ids = jnp.arange(S, dtype=jnp.int32)[None, :]
    base = mel_len // src_len
    rem = mel_len % src_len
    dur = base[:, None] + (s_ids < rem[:, None]).astype(jnp.int32)
    dur = jnp.where(s_ids < src_len[:, None], dur, 0)            # (B, S)
    cum = jnp.cumsum(dur, axis=1)
    start = cum - dur
    # hard_A is materialized ONLY because forward() must return it; the Pallas
    # kernels regenerate the tile in VMEM from start/end and never re-read it.
    t_ids = jnp.arange(T, dtype=jnp.int32)[None, None, :]
    hard_A = ((t_ids >= start[:, :, None]) & (t_ids < cum[:, :, None]))
    hard_A = hard_A.astype(jnp.float32)                          # (B, S, T)
    duration_target = jnp.where(s_ids < src_len[:, None], dur, 1).astype(jnp.float32)
    return hard_A, duration_target, start.astype(jnp.float32), cum.astype(jnp.float32)


def init_params(key, vocab, D, H, M):
    ks = jax.random.split(key, 16)
    n = lambda k, shape, s=0.05: jax.random.normal(k, shape, jnp.float32) * s
    p = {
        "embed": n(ks[0], (vocab, D), 0.02),
        "pitch_emb_w": n(ks[1], (1, D)), "pitch_emb_b": n(ks[2], (1, D)),
        "energy_emb_w": n(ks[3], (1, D)), "energy_emb_b": n(ks[4], (1, D)),
        "dec_w": n(ks[5], (D, M)), "dec_b": n(ks[6], (1, M)),
    }
    for name, i in (("dur", 7), ("pitch_dec", 10), ("energy_dec", 13)):
        kk = jax.random.split(ks[i], 4)
        p[name] = {"w1": n(kk[0], (D, H)), "b1": n(kk[1], (1, H)),
                   "w2": n(kk[2], (H, 1)), "b2": n(kk[3], (1, 1))}
    return p


def pack_params(params):
    """Parameter-only packing, hoisted out of the per-call forward."""
    D = params["embed"].shape[1]
    H = params["dur"]["w1"].shape[1]
    M = params["dec_w"].shape[1]
    Mpad = _round_up(M, LANES)

    # Stacked first layer (D, 3H); 128-lane-padded block-diagonal second layer.
    # Output columns: 2=duration, 3=post_pitch, 4=post_energy.  Columns 0/1
    # MUST stay zero — the kernel adds the phoneme pitch/energy averages there.
    w1s = jnp.concatenate([params["dur"]["w1"], params["pitch_dec"]["w1"],
                           params["energy_dec"]["w1"]], axis=1)
    b1s = jnp.concatenate([params["dur"]["b1"], params["pitch_dec"]["b1"],
                           params["energy_dec"]["b1"]], axis=1)
    w2p = jnp.zeros((3 * H, LANES), jnp.float32)
    w2p = w2p.at[0:H, 2].set(params["dur"]["w2"][:, 0])
    w2p = w2p.at[H:2 * H, 3].set(params["pitch_dec"]["w2"][:, 0])
    w2p = w2p.at[2 * H:3 * H, 4].set(params["energy_dec"]["w2"][:, 0])
    b2p = jnp.zeros((1, LANES), jnp.float32)
    b2p = b2p.at[0, 2].set(params["dur"]["b2"][0, 0])
    b2p = b2p.at[0, 3].set(params["pitch_dec"]["b2"][0, 0])
    b2p = b2p.at[0, 4].set(params["energy_dec"]["b2"][0, 0])

    # Four (1, D) pitch/energy-embedding params packed into one (4, D) array.
    emb4 = jnp.concatenate([params["pitch_emb_w"], params["pitch_emb_b"],
                            params["energy_emb_w"], params["energy_emb_b"]], axis=0)

    dec_w = jnp.zeros((D, Mpad), jnp.float32).at[:, :M].set(params["dec_w"])
    dec_b = jnp.zeros((1, Mpad), jnp.float32).at[:, :M].set(params["dec_b"])

    return {"w1s": w1s.astype(jnp.bfloat16), "b1s": b1s,
            "w2p": w2p.astype(jnp.bfloat16), "b2p": b2p,
            "emb4": emb4,
            "dec_w": dec_w.astype(jnp.bfloat16), "dec_b": dec_b}


@functools.partial(jax.jit, static_argnames=("max_src_len", "max_mel_len"))
def frontend_forward(params, packed, spk_emb, src_seq, src_len, ref_pitch,
                     ref_energy, mel, mel_len, max_src_len, max_mel_len):
    B, S = src_seq.shape
    T = max_mel_len
    D = params["embed"].shape[1]
    Spad = _round_up(max(S, 1), 256)   # K dim of A^T @ [ups|enc]: 256-aligned (v6e/v7x MXU)
    Tpad = _round_up(max(T, 1), 256)   # frame tiles of 256; padded frames are masked

    src_mask = get_mask_from_lengths(src_len, max_src_len)       # (B, S) bool
    mel_mask = get_mask_from_lengths(mel_len, max_mel_len)       # (B, T) bool

    # Encoder stand-in: token embedding lookup (gather).
    # TODO(synk): full transformer Encoder internals not in provided source.
    encoder_output = jnp.take(params["embed"], src_seq, axis=0)  # (B, S, D)
    enc_attns = ()

    # spk_emb (D,): torch path spk_emb.unsqueeze(0).unsqueeze(1).expand(...)
    spk = spk_emb[None, :].astype(jnp.float32)                   # (1, D)

    # VarianceAdaptor alignment (synthetic, deterministic); `mel` unused here.
    hard_A, duration_target, start, end = synth_alignment(src_len, mel_len, S, T)
    soft_A = hard_A
    perf_mask = src_mask

    # ---- per-call tensors packed into lane-friendly slabs -------------------
    enc_pad = jnp.zeros((B, Spad, D), jnp.float32).at[:, :S, :].set(encoder_output)
    start_p = jnp.zeros((B, Spad), jnp.float32).at[:, :S].set(start)
    end_p = jnp.zeros((B, Spad), jnp.float32).at[:, :S].set(end)
    geo_p = (jnp.zeros((B, Spad, 8), jnp.float32)
             .at[:, :, 0].set(start_p).at[:, :, 1].set(end_p))   # phoneme-major
    geo_t = (jnp.zeros((B, 8, Spad), jnp.float32)
             .at[:, 0, :].set(start_p).at[:, 1, :].set(end_p))   # frame-kernel rows
    refs8 = (jnp.zeros((B, Tpad, 8), jnp.float32)
             .at[:, :T, 0].set(ref_pitch).at[:, :T, 1].set(ref_energy))
    lens = jnp.stack([src_len.astype(jnp.int32),
                      mel_len.astype(jnp.int32)], axis=1).reshape(-1)  # (2B,) SMEM

    # ---- Kernel P: phoneme-level fused pass ---------------------------------
    rhs, slab = phoneme_pass(lens, geo_p, enc_pad, spk, refs8,
                             packed["emb4"], packed["w1s"], packed["b1s"],
                             packed["w2p"], packed["b2p"],
                             tS=min(Spad, 256))

    ref_pitch_pho = slab[:, :S, 0]
    ref_energy_pho = slab[:, :S, 1]
    d_prediction = slab[:, :S, 2]
    post_pitch = slab[:, :S, 3]
    post_energy = slab[:, :S, 4]

    # ---- Kernel F: frame-level fused pass (A^T matmul + mel decoder) --------
    up_text_emb, mel_output = frame_pass(lens, geo_t, rhs,
                                         packed["dec_w"], packed["dec_b"],
                                         Tpad=Tpad, tT=256)
    # up_text_emb is bf16; mel_output keeps its 128-lane padding (columns
    # >= n_mels are zero) so no extra HBM narrowing pass is issued.  Choose
    # max_mel_len as a multiple of 256 to also avoid the frame-axis trim below.
    if Tpad != T:
        up_text_emb = up_text_emb[:, :T]
        mel_output = mel_output[:, :T]

    return (up_text_emb, mel_output, d_prediction, src_mask, mel_mask, mel_len,
            enc_attns, soft_A, hard_A, duration_target, perf_mask,
            post_pitch, post_energy, ref_pitch_pho, ref_energy_pho)


if __name__ == "__main__":
    B, S, T, D, H, M, V = 2, 16, 256, 128, 64, 80, 40

    key = jax.random.PRNGKey(0)
    k_par, k_seq, k_p, k_e, k_mel, k_spk = jax.random.split(key, 6)

    params = init_params(k_par, V, D, H, M)
    packed = pack_params(params)          # hoisted: packed once, reused per call

    src_seq = jax.random.randint(k_seq, (B, S), 0, V, dtype=jnp.int32)
    src_len = jnp.array([16, 12], dtype=jnp.int32)
    mel_len = jnp.array([256, 192], dtype=jnp.int32)
    ref_pitch = jax.random.normal(k_p, (B, T), jnp.float32)
    ref_energy = jax.random.normal(k_e, (B, T), jnp.float32)
    mel = jax.random.normal(k_mel, (B, T, M), jnp.float32)
    spk_emb = jax.random.normal(k_spk, (D,), jnp.float32)

    outs = frontend_forward(params, packed, spk_emb, src_seq, src_len,
                            ref_pitch, ref_energy, mel, mel_len,
                            max_src_len=S, max_mel_len=T)

    jax.block_until_ready([o for o in outs if isinstance(o, jax.Array)])
    print("KERNEL_OK")
</pallas_src>

<mosaic_0001>
module attributes {stable_mosaic.version = 11 : i64} {
  func.func @_phoneme_kernel(%arg0: i32, %arg1: i32, %arg2: memref<4xi32, #tpu.memory_space<smem>>, %arg3: memref<1x256x8xf32, #tpu.memory_space<vmem>>, %arg4: memref<1x256x128xf32, #tpu.memory_space<vmem>>, %arg5: memref<1x128xf32, #tpu.memory_space<vmem>>, %arg6: memref<1x256x8xf32, #tpu.memory_space<vmem>>, %arg7: memref<4x128xf32, #tpu.memory_space<vmem>>, %arg8: memref<128x192xbf16, #tpu.memory_space<vmem>>, %arg9: memref<1x192xf32, #tpu.memory_space<vmem>>, %arg10: memref<192x128xbf16, #tpu.memory_space<vmem>>, %arg11: memref<1x128xf32, #tpu.memory_space<vmem>>, %arg12: memref<1x256x256xbf16, #tpu.memory_space<vmem>>, %arg13: memref<1x256x128xf32, #tpu.memory_space<vmem>>) attributes {dimension_semantics = [#tpu.dimension_semantics<parallel>, #tpu.dimension_semantics<parallel>], iteration_bounds = array<i64: 2, 1>, scalar_prefetch = 1 : i64, scratch_operands = 0 : i64, tpu.core_type = #tpu.core_type<tc>, window_params = [{transform_indices = @transform_0, window_bounds = array<i64: 1, 256, 8>}, {transform_indices = @transform_1, window_bounds = array<i64: 1, 256, 128>}, {pipeline_mode = #tpu.pipeline_mode<synchronous>, transform_indices = @transform_2, window_bounds = array<i64: 1, 128>}, {transform_indices = @transform_3, window_bounds = array<i64: 1, 256, 8>}, {pipeline_mode = #tpu.pipeline_mode<synchronous>, transform_indices = @transform_4, window_bounds = array<i64: 4, 128>}, {pipeline_mode = #tpu.pipeline_mode<synchronous>, transform_indices = @transform_5, window_bounds = array<i64: 128, 192>}, {pipeline_mode = #tpu.pipeline_mode<synchronous>, transform_indices = @transform_6, window_bounds = array<i64: 1, 192>}, {pipeline_mode = #tpu.pipeline_mode<synchronous>, transform_indices = @transform_7, window_bounds = array<i64: 192, 128>}, {pipeline_mode = #tpu.pipeline_mode<synchronous>, transform_indices = @transform_8, window_bounds = array<i64: 1, 128>}, {transform_indices = @transform_9, window_bounds = array<i64: 1, 256, 256>}, {transform_indices = @transform_10, window_bounds = array<i64: 1, 256, 128>}]} {
    %c0 = arith.constant 0 : index
    %c0_0 = arith.constant 0 : index
    %c0_1 = arith.constant 0 : index
    %0 = vector.load %arg4[%c0, %c0_0, %c0_1] : memref<1x256x128xf32, #tpu.memory_space<vmem>>, vector<1x256x128xf32>
    %1 = vector.shape_cast %0 : vector<1x256x128xf32> to vector<256x128xf32>
    %c0_2 = arith.constant 0 : index
    %c0_3 = arith.constant 0 : index
    %c0_4 = arith.constant 0 : index
    %2 = vector.load %arg3[%c0_2, %c0_3, %c0_4] : memref<1x256x8xf32, #tpu.memory_space<vmem>>, vector<1x256x8xf32>
    %3 = vector.shape_cast %2 : vector<1x256x8xf32> to vector<256x8xf32>
    %c0_5 = arith.constant 0 : index
    %c0_6 = arith.constant 0 : index
    %c0_7 = arith.constant 0 : index
    %4 = vector.load %arg6[%c0_5, %c0_6, %c0_7] : memref<1x256x8xf32, #tpu.memory_space<vmem>>, vector<1x256x8xf32>
    %5 = vector.shape_cast %4 : vector<1x256x8xf32> to vector<256x8xf32>
    %c0_8 = arith.constant 0 : index
    %c0_9 = arith.constant 0 : index
    %6 = vector.load %arg5[%c0_8, %c0_9] : memref<1x128xf32, #tpu.memory_space<vmem>>, vector<1x128xf32>
    %c0_10 = arith.constant 0 : index
    %c0_11 = arith.constant 0 : index
    %7 = vector.load %arg7[%c0_10, %c0_11] : memref<4x128xf32, #tpu.memory_space<vmem>>, vector<4x128xf32>
    %8 = vector.extract_strided_slice %3 {offsets = [0, 0], sizes = [256, 1], strides = [1, 1]} : vector<256x8xf32> to vector<256x1xf32>
    %9 = vector.extract_strided_slice %3 {offsets = [0, 1], sizes = [256, 1], strides = [1, 1]} : vector<256x8xf32> to vector<256x1xf32>
    %c2_i32 = arith.constant 2 : i32
    %10 = arith.muli %c2_i32, %arg0 : i32
    %11 = arith.index_cast %10 : i32 to index
    %12 = memref.load %arg2[%11] : memref<4xi32, #tpu.memory_space<smem>>
    %13 = tpu.iota {dimensions = array<i32: 0>} : vector<256x1xi32>
    %c256_i32 = arith.constant 256 : i32
    %14 = arith.muli %arg1, %c256_i32 : i32
    %15 = vector.broadcast %14 : i32 to vector<256x1xi32>
    %16 = arith.addi %13, %15 : vector<256x1xi32>
    %17 = vector.broadcast %12 : i32 to vector<256x1xi32>
    %18 = arith.cmpi sge, %16, %17 : vector<256x1xi32>
    %19 = tpu.iota {dimensions = array<i32: 1>} : vector<256x256xi32>
    %20 = arith.sitofp %19 : vector<256x256xi32> to vector<256x256xf32>
    %21 = vector.broadcast %8 : vector<256x1xf32> to vector<256x256xf32>
    %22 = arith.cmpf oge, %20, %21 : vector<256x256xf32>
    %23 = vector.broadcast %9 : vector<256x1xf32> to vector<256x256xf32>
    %24 = arith.cmpf olt, %20, %23 : vector<256x256xf32>
    %25 = arith.andi %22, %24 : vector<256x256xi1>
    %cst = arith.constant 1.000000e+00 : f32
    %cst_12 = arith.constant 0.000000e+00 : f32
    %26 = vector.broadcast %cst : f32 to vector<256x256xf32>
    %27 = vector.broadcast %cst_12 : f32 to vector<256x256xf32>
    %28 = arith.select %25, %26, %27 : vector<256x256xi1>, vector<256x256xf32>
    %cst_13 = arith.constant dense<0.000000e+00> : vector<256x8xf32>
    %29 = tpu.matmul %28, %5, %cst_13 {dimension_numbers = #tpu.dot_dimension_numbers<[1], [0], [0], [1], [0, 0, 1, 1], [], []>} : vector<256x256xf32>, vector<256x8xf32>, vector<256x8xf32> -> vector<256x8xf32>
    %30 = arith.subf %9, %8 : vector<256x1xf32>
    %cst_14 = arith.constant 1.000000e+00 : f32
    %31 = vector.broadcast %cst_14 : f32 to vector<256x1xf32>
    %32 = arith.maximumf %30, %31 : vector<256x1xf32>
    %33 = tpu.reciprocal %32 {approx = true} : vector<256x1xf32> -> vector<256x1xf32>
    %34 = vector.extract_strided_slice %29 {offsets = [0, 0], sizes = [256, 1], strides = [1, 1]} : vector<256x8xf32> to vector<256x1xf32>
    %35 = arith.mulf %34, %33 : vector<256x1xf32>
    %36 = vector.extract_strided_slice %29 {offsets = [0, 1], sizes = [256, 1], strides = [1, 1]} : vector<256x8xf32> to vector<256x1xf32>
    %37 = arith.mulf %36, %33 : vector<256x1xf32>
    %38 = vector.broadcast %6 : vector<1x128xf32> to vector<256x128xf32>
    %39 = arith.addf %1, %38 : vector<256x128xf32>
    %40 = arith.truncf %39 : vector<256x128xf32> to vector<256x128xbf16>
    %c0_15 = arith.constant 0 : index
    %c0_16 = arith.constant 0 : index
    %41 = vector.load %arg8[%c0_15, %c0_16] : memref<128x192xbf16, #tpu.memory_space<vmem>>, vector<128x192xbf16>
    %cst_17 = arith.constant dense<0.000000e+00> : vector<256x192xf32>
    %42 = tpu.matmul %40, %41, %cst_17 {dimension_numbers = #tpu.dot_dimension_numbers<[1], [0], [0], [1], [0, 0, 1, 1], [], []>} : vector<256x128xbf16>, vector<128x192xbf16>, vector<256x192xf32> -> vector<256x192xf32>
    %c0_18 = arith.constant 0 : index
    %c0_19 = arith.constant 0 : index
    %43 = vector.load %arg9[%c0_18, %c0_19] : memref<1x192xf32, #tpu.memory_space<vmem>>, vector<1x192xf32>
    %44 = vector.broadcast %43 : vector<1x192xf32> to vector<256x192xf32>
    %45 = arith.addf %42, %44 : vector<256x192xf32>
    %cst_20 = arith.constant 0.000000e+00 : f32
    %46 = vector.broadcast %cst_20 : f32 to vector<256x192xf32>
    %47 = arith.maximumf %45, %46 : vector<256x192xf32>
    %48 = arith.truncf %47 : vector<256x192xf32> to vector<256x192xbf16>
    %c0_21 = arith.constant 0 : index
    %c0_22 = arith.constant 0 : index
    %49 = vector.load %arg10[%c0_21, %c0_22] : memref<192x128xbf16, #tpu.memory_space<vmem>>, vector<192x128xbf16>
    %cst_23 = arith.constant dense<0.000000e+00> : vector<256x128xf32>
    %50 = tpu.matmul %48, %49, %cst_23 {dimension_numbers = #tpu.dot_dimension_numbers<[1], [0], [0], [1], [0, 0, 1, 1], [], []>} : vector<256x192xbf16>, vector<192x128xbf16>, vector<256x128xf32> -> vector<256x128xf32>
    %c0_24 = arith.constant 0 : index
    %c0_25 = arith.constant 0 : index
    %51 = vector.load %arg11[%c0_24, %c0_25] : memref<1x128xf32, #tpu.memory_space<vmem>>, vector<1x128xf32>
    %52 = vector.broadcast %51 : vector<1x128xf32> to vector<256x128xf32>
    %53 = arith.addf %50, %52 : vector<256x128xf32>
    %54 = tpu.iota {dimensions = array<i32: 1>} : vector<256x128xi32>
    %c0_i32 = arith.constant 0 : i32
    %55 = vector.broadcast %c0_i32 : i32 to vector<256x128xi32>
    %56 = arith.cmpi eq, %54, %55 : vector<256x128xi32>
    %cst_26 = arith.constant 0.000000e+00 : f32
    %57 = vector.shape_cast %35 : vector<256x1xf32> to vector<256x1xf32>
    %58 = vector.broadcast %57 : vector<256x1xf32> to vector<256x128xf32>
    %59 = vector.broadcast %cst_26 : f32 to vector<256x128xf32>
    %60 = arith.select %56, %58, %59 : vector<256x128xi1>, vector<256x128xf32>
    %61 = arith.addf %53, %60 : vector<256x128xf32>
    %c1_i32 = arith.constant 1 : i32
    %62 = vector.broadcast %c1_i32 : i32 to vector<256x128xi32>
    %63 = arith.cmpi eq, %54, %62 : vector<256x128xi32>
    %cst_27 = arith.constant 0.000000e+00 : f32
    %64 = vector.shape_cast %37 : vector<256x1xf32> to vector<256x1xf32>
    %65 = vector.broadcast %64 : vector<256x1xf32> to vector<256x128xf32>
    %66 = vector.broadcast %cst_27 : f32 to vector<256x128xf32>
    %67 = arith.select %63, %65, %66 : vector<256x128xi1>, vector<256x128xf32>
    %68 = arith.addf %61, %67 : vector<256x128xf32>
    %cst_28 = arith.constant 0.000000e+00 : f32
    %69 = vector.shape_cast %18 : vector<256x1xi1> to vector<256x1xi1>
    %70 = vector.broadcast %69 : vector<256x1xi1> to vector<256x128xi1>
    %71 = vector.broadcast %cst_28 : f32 to vector<256x128xf32>
    %72 = arith.select %70, %71, %68 : vector<256x128xi1>, vector<256x128xf32>
    %c0_29 = arith.constant 0 : index
    %c0_30 = arith.constant 0 : index
    %c0_31 = arith.constant 0 : index
    %73 = vector.load %arg13[%c0_29, %c0_30, %c0_31] : memref<1x256x128xf32, #tpu.memory_space<vmem>>, vector<1x256x128xf32>
    %74 = vector.shape_cast %73 : vector<1x256x128xf32> to vector<256x128xf32>
    %75 = vector.shape_cast %72 : vector<256x128xf32> to vector<1x256x128xf32>
    tpu.vector_store %arg13[%c0_29, %c0_30, %c0_31], %75 {strides = array<i32>} : memref<1x256x128xf32, #tpu.memory_space<vmem>>, vector<1x256x128xf32>,
    %76 = vector.extract_strided_slice %7 {offsets = [0, 0], sizes = [1, 128], strides = [1, 1]} : vector<4x128xf32> to vector<1x128xf32>
    %77 = vector.broadcast %35 : vector<256x1xf32> to vector<256x128xf32>
    %78 = vector.broadcast %76 : vector<1x128xf32> to vector<256x128xf32>
    %79 = arith.mulf %77, %78 : vector<256x128xf32>
    %80 = vector.extract_strided_slice %7 {offsets = [1, 0], sizes = [1, 128], strides = [1, 1]} : vector<4x128xf32> to vector<1x128xf32>
    %81 = vector.broadcast %80 : vector<1x128xf32> to vector<256x128xf32>
    %82 = arith.addf %79, %81 : vector<256x128xf32>
    %83 = vector.extract_strided_slice %7 {offsets = [2, 0], sizes = [1, 128], strides = [1, 1]} : vector<4x128xf32> to vector<1x128xf32>
    %84 = vector.broadcast %37 : vector<256x1xf32> to vector<256x128xf32>
    %85 = vector.broadcast %83 : vector<1x128xf32> to vector<256x128xf32>
    %86 = arith.mulf %84, %85 : vector<256x128xf32>
    %87 = vector.extract_strided_slice %7 {offsets = [3, 0], sizes = [1, 128], strides = [1, 1]} : vector<4x128xf32> to vector<1x128xf32>
    %88 = vector.broadcast %87 : vector<1x128xf32> to vector<256x128xf32>
    %89 = arith.addf %86, %88 : vector<256x128xf32>
    %90 = arith.addf %39, %82 : vector<256x128xf32>
    %91 = arith.addf %90, %89 : vector<256x128xf32>
    %92 = arith.truncf %91 : vector<256x128xf32> to vector<256x128xbf16>
    %c0_32 = arith.constant 0 : index
    %c0_33 = arith.constant 0 : index
    %c0_34 = arith.constant 0 : index
    %93 = vector.load %arg12[%c0_32, %c0_33, %c0_34] : memref<1x256x256xbf16, #tpu.memory_space<vmem>>, vector<1x256x128xbf16>
    %94 = vector.shape_cast %93 : vector<1x256x128xbf16> to vector<256x128xbf16>
    %95 = vector.shape_cast %92 : vector<256x128xbf16> to vector<1x256x128xbf16>
    tpu.vector_store %arg12[%c0_32, %c0_33, %c0_34], %95 {strides = array<i32>} : memref<1x256x256xbf16, #tpu.memory_space<vmem>>, vector<1x256x128xbf16>,
    %96 = arith.truncf %1 : vector<256x128xf32> to vector<256x128xbf16>
    %c0_35 = arith.constant 0 : index
    %c0_36 = arith.constant 0 : index
    %c128 = arith.constant 128 : index
    %97 = vector.load %arg12[%c0_35, %c0_36, %c128] : memref<1x256x256xbf16, #tpu.memory_space<vmem>>, vector<1x256x128xbf16>
    %98 = vector.shape_cast %97 : vector<1x256x128xbf16> to vector<256x128xbf16>
    %99 = vector.shape_cast %96 : vector<256x128xbf16> to vector<1x256x128xbf16>
    tpu.vector_store %arg12[%c0_35, %c0_36, %c128], %99 {strides = array<i32>} : memref<1x256x256xbf16, #tpu.memory_space<vmem>>, vector<1x256x128xbf16>,
    return
  }
  func.func @transform_0(%arg0: i32, %arg1: i32, %arg2: memref<4xi32, #tpu.memory_space<smem>>) -> (i32, i32, i32) {
    %c0_i32 = arith.constant 0 : i32
    %c0_i32_0 = arith.constant 0 : i32
    return %arg0, %arg1, %c0_i32 : i32, i32, i32
  }
  func.func @transform_1(%arg0: i32, %arg1: i32, %arg2: memref<4xi32, #tpu.memory_space<smem>>) -> (i32, i32, i32) {
    %c0_i32 = arith.constant 0 : i32
    %c0_i32_0 = arith.constant 0 : i32
    return %arg0, %arg1, %c0_i32 : i32, i32, i32
  }
  func.func @transform_2(%arg0: i32, %arg1: i32, %arg2: memref<4xi32, #tpu.memory_space<smem>>) -> (i32, i32) {
    %c0_i32 = arith.constant 0 : i32
    %c0_i32_0 = arith.constant 0 : i32
    %c0_i32_1 = arith.constant 0 : i32
    return %c0_i32, %c0_i32_0 : i32, i32
  }
  func.func @transform_3(%arg0: i32, %arg1: i32, %arg2: memref<4xi32, #tpu.memory_space<smem>>) -> (i32, i32, i32) {
    %c0_i32 = arith.constant 0 : i32
    %c0_i32_0 = arith.constant 0 : i32
    %c0_i32_1 = arith.constant 0 : i32
    return %arg0, %c0_i32, %c0_i32_0 : i32, i32, i32
  }
  func.func @transform_4(%arg0: i32, %arg1: i32, %arg2: memref<4xi32, #tpu.memory_space<smem>>) -> (i32, i32) {
    %c0_i32 = arith.constant 0 : i32
    %c0_i32_0 = arith.constant 0 : i32
    %c0_i32_1 = arith.constant 0 : i32
    return %c0_i32, %c0_i32_0 : i32, i32
  }
  func.func @transform_5(%arg0: i32, %arg1: i32, %arg2: memref<4xi32, #tpu.memory_space<smem>>) -> (i32, i32) {
    %c0_i32 = arith.constant 0 : i32
    %c0_i32_0 = arith.constant 0 : i32
    %c0_i32_1 = arith.constant 0 : i32
    return %c0_i32, %c0_i32_0 : i32, i32
  }
  func.func @transform_6(%arg0: i32, %arg1: i32, %arg2: memref<4xi32, #tpu.memory_space<smem>>) -> (i32, i32) {
    %c0_i32 = arith.constant 0 : i32
    %c0_i32_0 = arith.constant 0 : i32
    %c0_i32_1 = arith.constant 0 : i32
    return %c0_i32, %c0_i32_0 : i32, i32
  }
  func.func @transform_7(%arg0: i32, %arg1: i32, %arg2: memref<4xi32, #tpu.memory_space<smem>>) -> (i32, i32) {
    %c0_i32 = arith.constant 0 : i32
    %c0_i32_0 = arith.constant 0 : i32
    %c0_i32_1 = arith.constant 0 : i32
    return %c0_i32, %c0_i32_0 : i32, i32
  }
  func.func @transform_8(%arg0: i32, %arg1: i32, %arg2: memref<4xi32, #tpu.memory_space<smem>>) -> (i32, i32) {
    %c0_i32 = arith.constant 0 : i32
    %c0_i32_0 = arith.constant 0 : i32
    %c0_i32_1 = arith.constant 0 : i32
    return %c0_i32, %c0_i32_0 : i32, i32
  }
  func.func @transform_9(%arg0: i32, %arg1: i32, %arg2: memref<4xi32, #tpu.memory_space<smem>>) -> (i32, i32, i32) {
    %c0_i32 = arith.constant 0 : i32
    %c0_i32_0 = arith.constant 0 : i32
    return %arg0, %arg1, %c0_i32 : i32, i32, i32
  }
  func.func @transform_10(%arg0: i32, %arg1: i32, %arg2: memref<4xi32, #tpu.memory_space<smem>>) -> (i32, i32, i32) {
    %c0_i32 = arith.constant 0 : i32
    %c0_i32_0 = arith.constant 0 : i32
    return %arg0, %arg1, %c0_i32 : i32, i32, i32
  }
}

module attributes {stable_mosaic.version = 11 : i64} {
  func.func @_frame_kernel(%arg0: i32, %arg1: i32, %arg2: memref<4xi32, #tpu.memory_space<smem>>, %arg3: memref<1x8x256xf32, #tpu.memory_space<vmem>>, %arg4: memref<1x256x256xbf16, #tpu.memory_space<vmem>>, %arg5: memref<128x128xbf16, #tpu.memory_space<vmem>>, %arg6: memref<1x128xf32, #tpu.memory_space<vmem>>, %arg7: memref<1x256x128xbf16, #tpu.memory_space<vmem>>, %arg8: memref<1x256x128xf32, #tpu.memory_space<vmem>>) attributes {dimension_semantics = [#tpu.dimension_semantics<parallel>, #tpu.dimension_semantics<parallel>], iteration_bounds = array<i64: 2, 1>, scalar_prefetch = 1 : i64, scratch_operands = 0 : i64, tpu.core_type = #tpu.core_type<tc>, window_params = [{transform_indices = @transform_0, window_bounds = array<i64: 1, 8, 256>}, {transform_indices = @transform_1, window_bounds = array<i64: 1, 256, 256>}, {pipeline_mode = #tpu.pipeline_mode<synchronous>, transform_indices = @transform_2, window_bounds = array<i64: 128, 128>}, {pipeline_mode = #tpu.pipeline_mode<synchronous>, transform_indices = @transform_3, window_bounds = array<i64: 1, 128>}, {transform_indices = @transform_4, window_bounds = array<i64: 1, 256, 128>}, {transform_indices = @transform_5, window_bounds = array<i64: 1, 256, 128>}]} {
    %c0 = arith.constant 0 : index
    %c0_0 = arith.constant 0 : index
    %c0_1 = arith.constant 0 : index
    %0 = vector.load %arg3[%c0, %c0_0, %c0_1] : memref<1x8x256xf32, #tpu.memory_space<vmem>>, vector<1x8x256xf32>
    %1 = vector.shape_cast %0 : vector<1x8x256xf32> to vector<8x256xf32>
    %2 = vector.extract_strided_slice %1 {offsets = [0, 0], sizes = [1, 256], strides = [1, 1]} : vector<8x256xf32> to vector<1x256xf32>
    %3 = vector.extract_strided_slice %1 {offsets = [1, 0], sizes = [1, 256], strides = [1, 1]} : vector<8x256xf32> to vector<1x256xf32>
    %c2_i32 = arith.constant 2 : i32
    %4 = arith.muli %c2_i32, %arg0 : i32
    %c1_i32 = arith.constant 1 : i32
    %5 = arith.addi %4, %c1_i32 : i32
    %6 = arith.index_cast %5 : i32 to index
    %7 = memref.load %arg2[%6] : memref<4xi32, #tpu.memory_space<smem>>
    %c256_i32 = arith.constant 256 : i32
    %8 = arith.muli %arg1, %c256_i32 : i32
    %9 = tpu.iota {dimensions = array<i32: 0>} : vector<256x256xi32>
    %10 = vector.broadcast %8 : i32 to vector<256x256xi32>
    %11 = arith.addi %9, %10 : vector<256x256xi32>
    %12 = arith.sitofp %11 : vector<256x256xi32> to vector<256x256xf32>
    %13 = vector.broadcast %2 : vector<1x256xf32> to vector<256x256xf32>
    %14 = arith.cmpf oge, %12, %13 : vector<256x256xf32>
    %15 = vector.broadcast %3 : vector<1x256xf32> to vector<256x256xf32>
    %16 = arith.cmpf olt, %12, %15 : vector<256x256xf32>
    %17 = arith.andi %14, %16 : vector<256x256xi1>
    %cst = arith.constant 1.000000e+00 : f32
    %cst_2 = arith.constant 0.000000e+00 : f32
    %18 = vector.broadcast %cst : f32 to vector<256x256xf32>
    %19 = vector.broadcast %cst_2 : f32 to vector<256x256xf32>
    %20 = arith.select %17, %18, %19 : vector<256x256xi1>, vector<256x256xf32>
    %21 = arith.truncf %20 : vector<256x256xf32> to vector<256x256xbf16>
    %c0_3 = arith.constant 0 : index
    %c0_4 = arith.constant 0 : index
    %c0_5 = arith.constant 0 : index
    %22 = vector.load %arg4[%c0_3, %c0_4, %c0_5] : memref<1x256x256xbf16, #tpu.memory_space<vmem>>, vector<1x256x256xbf16>
    %23 = vector.shape_cast %22 : vector<1x256x256xbf16> to vector<256x256xbf16>
    %cst_6 = arith.constant dense<0.000000e+00> : vector<256x256xf32>
    %24 = tpu.matmul %21, %23, %cst_6 {dimension_numbers = #tpu.dot_dimension_numbers<[1], [0], [0], [1], [0, 0, 1, 1], [], []>} : vector<256x256xbf16>, vector<256x256xbf16>, vector<256x256xf32> -> vector<256x256xf32>
    %25 = vector.extract_strided_slice %24 {offsets = [0, 128], sizes = [256, 128], strides = [1, 1]} : vector<256x256xf32> to vector<256x128xf32>
    %26 = arith.truncf %25 : vector<256x128xf32> to vector<256x128xbf16>
    %c0_7 = arith.constant 0 : index
    %c0_8 = arith.constant 0 : index
    %c0_9 = arith.constant 0 : index
    %27 = vector.load %arg7[%c0_7, %c0_8, %c0_9] : memref<1x256x128xbf16, #tpu.memory_space<vmem>>, vector<1x256x128xbf16>
    %28 = vector.shape_cast %27 : vector<1x256x128xbf16> to vector<256x128xbf16>
    %29 = vector.shape_cast %26 : vector<256x128xbf16> to vector<1x256x128xbf16>
    tpu.vector_store %arg7[%c0_7, %c0_8, %c0_9], %29 {strides = array<i32>} : memref<1x256x128xbf16, #tpu.memory_space<vmem>>, vector<1x256x128xbf16>,
    %30 = vector.extract_strided_slice %24 {offsets = [0, 0], sizes = [256, 128], strides = [1, 1]} : vector<256x256xf32> to vector<256x128xf32>
    %31 = arith.truncf %30 : vector<256x128xf32> to vector<256x128xbf16>
    %c0_10 = arith.constant 0 : index
    %c0_11 = arith.constant 0 : index
    %32 = vector.load %arg5[%c0_10, %c0_11] : memref<128x128xbf16, #tpu.memory_space<vmem>>, vector<128x128xbf16>
    %cst_12 = arith.constant dense<0.000000e+00> : vector<256x128xf32>
    %33 = tpu.matmul %31, %32, %cst_12 {dimension_numbers = #tpu.dot_dimension_numbers<[1], [0], [0], [1], [0, 0, 1, 1], [], []>} : vector<256x128xbf16>, vector<128x128xbf16>, vector<256x128xf32> -> vector<256x128xf32>
    %c0_13 = arith.constant 0 : index
    %c0_14 = arith.constant 0 : index
    %34 = vector.load %arg6[%c0_13, %c0_14] : memref<1x128xf32, #tpu.memory_space<vmem>>, vector<1x128xf32>
    %35 = vector.broadcast %34 : vector<1x128xf32> to vector<256x128xf32>
    %36 = arith.addf %33, %35 : vector<256x128xf32>
    %37 = tpu.iota {dimensions = array<i32: 0>} : vector<256x1xi32>
    %38 = vector.broadcast %8 : i32 to vector<256x1xi32>
    %39 = arith.addi %37, %38 : vector<256x1xi32>
    %40 = vector.broadcast %7 : i32 to vector<256x1xi32>
    %41 = arith.cmpi sge, %39, %40 : vector<256x1xi32>
    %cst_15 = arith.constant 0.000000e+00 : f32
    %42 = vector.shape_cast %41 : vector<256x1xi1> to vector<256x1xi1>
    %43 = vector.broadcast %42 : vector<256x1xi1> to vector<256x128xi1>
    %44 = vector.broadcast %cst_15 : f32 to vector<256x128xf32>
    %45 = arith.select %43, %44, %36 : vector<256x128xi1>, vector<256x128xf32>
    %c0_16 = arith.constant 0 : index
    %c0_17 = arith.constant 0 : index
    %c0_18 = arith.constant 0 : index
    %46 = vector.load %arg8[%c0_16, %c0_17, %c0_18] : memref<1x256x128xf32, #tpu.memory_space<vmem>>, vector<1x256x128xf32>
    %47 = vector.shape_cast %46 : vector<1x256x128xf32> to vector<256x128xf32>
    %48 = vector.shape_cast %45 : vector<256x128xf32> to vector<1x256x128xf32>
    tpu.vector_store %arg8[%c0_16, %c0_17, %c0_18], %48 {strides = array<i32>} : memref<1x256x128xf32, #tpu.memory_space<vmem>>, vector<1x256x128xf32>,
    return
  }
  func.func @transform_0(%arg0: i32, %arg1: i32, %arg2: memref<4xi32, #tpu.memory_space<smem>>) -> (i32, i32, i32) {
    %c0_i32 = arith.constant 0 : i32
    %c0_i32_0 = arith.constant 0 : i32
    %c0_i32_1 = arith.constant 0 : i32
    return %arg0, %c0_i32, %c0_i32_0 : i32, i32, i32
  }
  func.func @transform_1(%arg0: i32, %arg1: i32, %arg2: memref<4xi32, #tpu.memory_space<smem>>) -> (i32, i32, i32) {
    %c0_i32 = arith.constant 0 : i32
    %c0_i32_0 = arith.constant 0 : i32
    %c0_i32_1 = arith.constant 0 : i32
    return %arg0, %c0_i32, %c0_i32_0 : i32, i32, i32
  }
  func.func @transform_2(%arg0: i32, %arg1: i32, %arg2: memref<4xi32, #tpu.memory_space<smem>>) -> (i32, i32) {
    %c0_i32 = arith.constant 0 : i32
    %c0_i32_0 = arith.constant 0 : i32
    %c0_i32_1 = arith.constant 0 : i32
    return %c0_i32, %c0_i32_0 : i32, i32
  }
  func.func @transform_3(%arg0: i32, %arg1: i32, %arg2: memref<4xi32, #tpu.memory_space<smem>>) -> (i32, i32) {
    %c0_i32 = arith.constant 0 : i32
    %c0_i32_0 = arith.constant 0 : i32
    %c0_i32_1 = arith.constant 0 : i32
    return %c0_i32, %c0_i32_0 : i32, i32
  }
  func.func @transform_4(%arg0: i32, %arg1: i32, %arg2: memref<4xi32, #tpu.memory_space<smem>>) -> (i32, i32, i32) {
    %c0_i32 = arith.constant 0 : i32
    %c0_i32_0 = arith.constant 0 : i32
    return %arg0, %arg1, %c0_i32 : i32, i32, i32
  }
  func.func @transform_5(%arg0: i32, %arg1: i32, %arg2: memref<4xi32, #tpu.memory_space<smem>>) -> (i32, i32, i32) {
    %c0_i32 = arith.constant 0 : i32
    %c0_i32_0 = arith.constant 0 : i32
    return %arg0, %arg1, %c0_i32 : i32, i32, i32
  }
}

</mosaic_0001>

<llo_original>
// kernel: frontend_forward.3
$region0: #{frontend_forward.3}
  #allocation0 [shape = 'u32[]', space=smem, size = 0x4, offset = 0x4, fixed_abs, tag = 'smem constant byte address 0x4 - core index']
  #allocation1 [shape = 'u32[144,128]{1,0:T(1,128)}', space=vmem, size = 0x12000, scoped, tag = 'internal scratch']
  #allocation2 [shape = 's32[1]{0}', space=sflag, size = 0x4, scoped, tag = 'scoped memory for frontend_forward.3']
  #allocation3 [shape = 'u8[512]{0}', space=smem, size = 0x200, scoped, tag = 'prefetched SMEM operand 0']
  %s0 = inlined_call_operand.vmem [shape: s32[4], index: 0, kind: input, shape index: {}]
  %s1 = inlined_call_operand.vmem [shape: f32[2,8,256], index: 1, kind: input, shape index: {}]
  %s2 = inlined_call_operand.vmem [shape: bf16[2,256,256], index: 2, kind: input, shape index: {}]
  %s3 = inlined_call_operand.vmem [shape: bf16[128,128], index: 3, kind: input, shape index: {}]
  %s4 = inlined_call_operand.vmem [shape: f32[1,128], index: 4, kind: input, shape index: {}]
  %s5 = inlined_call_operand.hbm [shape: bf16[2,256,128], index: 5, kind: output, shape index: {0}]
  %s6 = inlined_call_operand.hbm [shape: f32[2,256,128], index: 6, kind: output, shape index: {1}]
  %7 = xla_tuple %s5, %s6
  %s8 = sld [smem:[#allocation0]]
  $region57: #{frontend_forward.3} parent=0
    _
  %s10 = ssub.s32 1, %s8
  %s11 = scalar_select 0, %s10, %s8
  %s12 = sshll.u32 %s0, 4
  %s13 = int_to_ptr.vmem [resolvable:$true] %s12
  %15 = dma.vmem_to_smem %s13, 16, [#allocation3], [#allocation2]
  %16 = dma.done [#allocation2], 16
  %17 = sfence
  $region1: #{frontend_forward.3} parent=0
    #allocation4 [shape = 'u8[131072]{0}', space=vmem, size = 0x20000, scoped, tag = 'output window, operand 0']
    #allocation5 [shape = 's32[2]{0}', space=sflag, size = 0x8, scoped, tag = 'scoped memory for frontend_forward.3']
    #allocation6 [shape = 'u8[262144]{0}', space=vmem, size = 0x40000, scoped, tag = 'output window, operand 1']
    #allocation7 [shape = 's32[2]{0}', space=sflag, size = 0x8, scoped, tag = 'scoped memory for frontend_forward.3']
    %18 = vsyncpa [#allocation5], 0
    %s19 = scalar_lea.sflag [#allocation5], 1
    %20 = vsyncpa %s19, 0
    %21 = vsyncpa [#allocation7], 0
    %s22 = scalar_lea.sflag [#allocation7], 1
    %23 = vsyncpa %s22, 0
    loop: start=0, step=1, limit=4
    $region2: #{frontend_forward.3} parent=1 // loop_pre_header
      _
    $region3: #{frontend_forward.3} parent=1 // loop_header
      %s25 = sphi 0, %s29
      %p26 = scmp.ge.s32.totalorder %s25, 4
      %s32 = sphi 0, %s44
      %s33 = sphi 0, %s40
      %s34 = sphi 0, %s32
      %s35 = sphi 0, %s33
      %s36 = sphi 0, %s34
      %s37 = sphi 0, %s35
      %s47 = sphi 0, %s49
      %s50 = sphi 0, %s47
      %s51 = sphi 0, %s50
      %s67 = sphi 0, %s51
      %s73 = sphi 0, %s75
      %s76 = sphi 0, %s73
      %s77 = sphi 0, %s76
      %s93 = sphi 0, %s77
      %s97 = sphi 0, %s97
      %s99 = sphi 0, %s97
      %s100 = sphi 0, %s99
      %s114 = sphi 0, %s100
      %s118 = sphi 0, %s118
      %s120 = sphi 0, %s118
      %s121 = sphi 0, %s120
      %s135 = sphi 0, %s121
      %s143 = sphi 0, %s145
      %s146 = sphi 0, %s143
      %s147 = sphi 0, %s146
      %s163 = sphi 0, %s147
      %s171 = sphi 0, %s173
      %s174 = sphi 0, %s171
      %s175 = sphi 0, %s174
      %s191 = sphi 0, %s175
    $region4: #{frontend_forward.3} parent=1 // loop_header_branch
      %28 = sbr.rel (%p26) target = $region8
    $region5: #{frontend_forward.3} parent=1 // loop_body
      %s30 = ssub.s32 %s25, 1
      %s31 = ssub.s32 %s25, 2
      %s38 = sadd.s32 1, %s33
      %p39 = scmp.ge.s32.totalorder %s38, 1
      %s40 = scalar_select %p39, 0, %s38
      %s41 = sadd.s32 1, %s32
      %s42 = scalar_select %p39, %s41, %s32
      %p43 = scmp.ge.s32.totalorder %s42, 2
      %s44 = scalar_select %p43, 0, %s42
      %s45 = ssub.s32 %s32, %s44
      %p46 = scmp.eq.s32.totalorder %s45, 0
      %s48 = sadd.s32 %s47, 1
      %s49 = scalar_select %p46, %s47, %s48
      %p52 = pneg %p46
      %p53 = scmp.eq.s32.totalorder %s25, 1
      %p54 = por %p52, %p53
      %p55 = scmp.ne.s32.totalorder %s47, %s50
      %p56 = scmp.eq.s32.totalorder %s25, 0
      %p57 = por %p55, %p56
      %p58 = scmp.ne.s32.totalorder %s47, %s50
      %p59 = scmp.eq.s32.totalorder %s30, 1
      %p60 = por %p58, %p59
      %p61 = scmp.ne.s32.totalorder %s50, %s51
      %p62 = scmp.eq.s32.totalorder %s30, 0
      %p63 = por %p61, %p62
      %p64 = scmp.ne.s32.totalorder %s50, %s51
      %p65 = scmp.eq.s32.totalorder %s31, 1
      %p66 = por %p64, %p65
      %p68 = scmp.ne.s32.totalorder %s51, %s67
      %p69 = scmp.eq.s32.totalorder %s31, 0
      %p70 = por %p68, %p69
      %s71 = ssub.s32 %s32, %s44
      %p72 = scmp.eq.s32.totalorder %s71, 0
      %s74 = sadd.s32 %s73, 1
      %s75 = scalar_select %p72, %s73, %s74
      %p78 = pneg %p72
      %p79 = scmp.eq.s32.totalorder %s25, 1
      %p80 = por %p78, %p79
      %p81 = scmp.ne.s32.totalorder %s73, %s76
      %p82 = scmp.eq.s32.totalorder %s25, 0
      %p83 = por %p81, %p82
      %p84 = scmp.ne.s32.totalorder %s73, %s76
      %p85 = scmp.eq.s32.totalorder %s30, 1
      %p86 = por %p84, %p85
      %p87 = scmp.ne.s32.totalorder %s76, %s77
      %p88 = scmp.eq.s32.totalorder %s30, 0
      %p89 = por %p87, %p88
      %p90 = scmp.ne.s32.totalorder %s76, %s77
      %p91 = scmp.eq.s32.totalorder %s31, 1
      %p92 = por %p90, %p91
      %p94 = scmp.ne.s32.totalorder %s77, %s93
      %p95 = scmp.eq.s32.totalorder %s31, 0
      %p96 = por %p94, %p95
      %s98 = sadd.s32 %s97, 1
      %p101 = scmp.eq.s32.totalorder %s25, 1
      %p102 = scmp.ne.s32.totalorder %s97, %s99
      %p103 = scmp.eq.s32.totalorder %s25, 0
      %p104 = por %p102, %p103
      %p105 = scmp.ne.s32.totalorder %s97, %s99
      %p106 = scmp.eq.s32.totalorder %s30, 1
      %p107 = por %p105, %p106
      %p108 = scmp.ne.s32.totalorder %s99, %s100
      %p109 = scmp.eq.s32.totalorder %s30, 0
      %p110 = por %p108, %p109
      %p111 = scmp.ne.s32.totalorder %s99, %s100
      %p112 = scmp.eq.s32.totalorder %s31, 1
      %p113 = por %p111, %p112
      %p115 = scmp.ne.s32.totalorder %s100, %s114
      %p116 = scmp.eq.s32.totalorder %s31, 0
      %p117 = por %p115, %p116
      %s119 = sadd.s32 %s118, 1
      %p122 = scmp.eq.s32.totalorder %s25, 1
      %p123 = scmp.ne.s32.totalorder %s118, %s120
      %p124 = scmp.eq.s32.totalorder %s25, 0
      %p125 = por %p123, %p124
      %p126 = scmp.ne.s32.totalorder %s118, %s120
      %p127 = scmp.eq.s32.totalorder %s30, 1
      %p128 = por %p126, %p127
      %p129 = scmp.ne.s32.totalorder %s120, %s121
      %p130 = scmp.eq.s32.totalorder %s30, 0
      %p131 = por %p129, %p130
      %p132 = scmp.ne.s32.totalorder %s120, %s121
      %p133 = scmp.eq.s32.totalorder %s31, 1
      %p134 = por %p132, %p133
      %p136 = scmp.ne.s32.totalorder %s121, %s135
      %p137 = scmp.eq.s32.totalorder %s31, 0
      %p138 = por %p136, %p137
      %s139 = ssub.s32 %s32, %s44
      %s140 = ssub.s32 %s33, %s40
      %s141 = sor.u32 %s139, %s140
      %p142 = scmp.eq.s32.totalorder %s141, 0
      %s144 = sadd.s32 %s143, 1
      %s145 = scalar_select %p142, %s143, %s144
      %p148 = pneg %p142
      %p149 = scmp.eq.s32.totalorder %s25, 1
      %p150 = por %p148, %p149
      %p151 = scmp.ne.s32.totalorder %s143, %s146
      %p152 = scmp.eq.s32.totalorder %s25, 0
      %p153 = por %p151, %p152
      %p154 = scmp.ne.s32.totalorder %s143, %s146
      %p155 = scmp.eq.s32.totalorder %s30, 1
      %p156 = por %p154, %p155
      %p157 = scmp.ne.s32.totalorder %s146, %s147
      %p158 = scmp.eq.s32.totalorder %s30, 0
      %p159 = por %p157, %p158
      %p160 = scmp.ne.s32.totalorder %s146, %s147
      %p161 = scmp.eq.s32.totalorder %s31, 1
      %p162 = por %p160, %p161
      %p164 = scmp.ne.s32.totalorder %s147, %s163
      %p165 = scmp.eq.s32.totalorder %s31, 0
      %p166 = por %p164, %p165
      %s167 = ssub.s32 %s32, %s44
      %s168 = ssub.s32 %s33, %s40
      %s169 = sor.u32 %s167, %s168
      %p170 = scmp.eq.s32.totalorder %s169, 0
      %s172 = sadd.s32 %s171, 1
      %s173 = scalar_select %p170, %s171, %s172
      %p176 = pneg %p170
      %p177 = scmp.eq.s32.totalorder %s25, 1
      %p178 = por %p176, %p177
      %p179 = scmp.ne.s32.totalorder %s171, %s174
      %p180 = scmp.eq.s32.totalorder %s25, 0
      %p181 = por %p179, %p180
      %p182 = scmp.ne.s32.totalorder %s171, %s174
      %p183 = scmp.eq.s32.totalorder %s30, 1
      %p184 = por %p182, %p183
      %p185 = scmp.ne.s32.totalorder %s174, %s175
      %p186 = scmp.eq.s32.totalorder %s30, 0
      %p187 = por %p185, %p186
      %p188 = scmp.ne.s32.totalorder %s174, %s175
      %p189 = scmp.eq.s32.totalorder %s31, 1
      %p190 = por %p188, %p189
      %p192 = scmp.ne.s32.totalorder %s175, %s191
      %p193 = scmp.eq.s32.totalorder %s31, 0
      %p194 = por %p192, %p193
      %p195 = scmp.le.s32.totalorder 1, %s25
      %p196 = scmp.lt.s32.totalorder %s25, 3
      %p197 = pnand %p195, %p196
      %p198 = pneg %p197
      // Predicated region
      $region9: #{frontend_forward.3} parent=5 // pred_check
        _
      $region10: #{frontend_forward.3} parent=5 // pred_check_branch
        %200 = sbr.rel (%p197) target = $region12
      $region11: #{frontend_forward.3} parent=5 // pred_region
        %s201 = ssub.s32 %s25, 1
        // Predicated region
        $region13: #{frontend_forward.3} parent=11 // pred_check
          %p202 = pneg %p110
        $region14: #{frontend_forward.3} parent=11 // pred_check_branch
          %204 = sbr.rel (%p202) target = $region16
        $region15: #{frontend_forward.3} parent=11 // pred_region
          _
        $region16: #{frontend_forward.3} parent=11 // pred_fallthru
          _
        // Predicated region
        $region17: #{frontend_forward.3} parent=11 // pred_check
          %p205 = pneg %p131
        $region18: #{frontend_forward.3} parent=11 // pred_check_branch
          %207 = sbr.rel (%p205) target = $region20
        $region19: #{frontend_forward.3} parent=11 // pred_region
          _
        $region20: #{frontend_forward.3} parent=11 // pred_fallthru
          _
      $region12: #{frontend_forward.3} parent=5 // pred_fallthru
        _
      %p208 = scmp.lt.s32.totalorder %s25, 2
      // Predicated region
      $region21: #{frontend_forward.3} parent=5 // pred_check
        %p209 = pneg %p208
      $region22: #{frontend_forward.3} parent=5 // pred_check_branch
        %211 = sbr.rel (%p209) target = $region24
      $region23: #{frontend_forward.3} parent=5 // pred_region
        // Predicated region
        $region25: #{frontend_forward.3} parent=23 // pred_check
          %p212 = pneg %p57
        $region26: #{frontend_forward.3} parent=23 // pred_check_branch
          %214 = sbr.rel (%p212) target = $region28
        $region27: #{frontend_forward.3} parent=23 // pred_region
          %p215 = scmp.lt.s32.totalorder %s32, 1
          %s216 = scalar_select %p215, %s32, 1
          %s217 = smul.addr %s216, 2
          %s218 = smul.addr %s217, 8
          %s219 = scalar_lea.vmem %s1, %s218
        $region28: #{frontend_forward.3} parent=23 // pred_fallthru
          _
        // Predicated region
        $region29: #{frontend_forward.3} parent=23 // pred_check
          %p220 = pneg %p83
        $region30: #{frontend_forward.3} parent=23 // pred_check_branch
          %222 = sbr.rel (%p220) target = $region32
        $region31: #{frontend_forward.3} parent=23 // pred_region
          %p223 = scmp.lt.s32.totalorder %s32, 1
          %s224 = scalar_select %p223, %s32, 1
          %s225 = smul.addr %s224, 64
          %s226 = smul.addr %s225, 4
          %s227 = scalar_lea.vmem %s2, %s226
        $region32: #{frontend_forward.3} parent=23 // pred_fallthru
          _
      $region24: #{frontend_forward.3} parent=5 // pred_fallthru
        _
      %p228 = scmp.le.s32.totalorder 1, %s25
      %p229 = scmp.lt.s32.totalorder %s25, 3
      %p230 = pnand %p228, %p229
      %p231 = pneg %p230
      // Predicated region
      $region33: #{frontend_forward.3} parent=5 // pred_check
        _
      $region34: #{frontend_forward.3} parent=5 // pred_check_branch
        %233 = sbr.rel (%p230) target = $region36
      $region35: #{frontend_forward.3} parent=5 // pred_region
        %s234 = ssub.s32 %s25, 1
        %p235 = scmp.lt.s32.totalorder %s34, 1
        %s236 = scalar_select %p235, %s34, 1
        %s237 = smul.addr %s236, 2
        %s238 = smul.addr %s237, 8
        %s239 = scalar_lea.vmem %s1, %s238
        %p240 = pneg %p63
        %p241 = pneg %p60
        %p242 = scmp.lt.s32.totalorder %s34, 1
        %s243 = scalar_select %p242, %s34, 1
        %s244 = smul.addr %s243, 64
        %s245 = smul.addr %s244, 4
        %s246 = scalar_lea.vmem %s2, %s245
        %p247 = pneg %p89
        %p248 = pneg %p86
        %p249 = pneg %p110
        %p250 = pneg %p107
        %p251 = pneg %p131
        %p252 = pneg %p128
        %p253 = pneg %p159
        %p254 = pneg %p156
        %s255 = sand.u32 %s146, 1
        %s256 = scalar_lea.sflag [#allocation5], %s255
        %s257 = sand.u32 %s146, 1
        %s258 = smul.addr %s257, 128
        %s259 = scalar_lea.vmem [#allocation4], %s258
        %p260 = pneg %p187
        %p261 = pneg %p184
        %s262 = sand.u32 %s174, 1
        %s263 = scalar_lea.sflag [#allocation7], %s262
        %s264 = sand.u32 %s174, 1
        %s265 = smul.addr %s264, 256
        %s266 = scalar_lea.vmem [#allocation6], %s265
        %p267 = scmp.lt.s32.totalorder %s34, 1
        %s268 = scalar_select %p267, %s34, 1
        %s269 = smul.addr %s268, 2
        %s270 = smul.addr %s269, 8
        %s271 = scalar_lea.vmem %s1, %s270
        %p272 = scmp.lt.s32.totalorder %s34, 1
        %s273 = scalar_select %p272, %s34, 1
        %s274 = smul.addr %s273, 64
        %s275 = smul.addr %s274, 4
        %s276 = scalar_lea.vmem %s2, %s275
        %s277 = smul.u32 32, %s35
        %s278 = smul.u32 32, %s35
        %v280 = vld [vmem:[%s271] sm:$0xff]
        %v281 = vld [vmem:[%s271 + $0x8] sm:$0xff]
        %s282 = smul.u32 %s34, 2
        %s283 = sadd.s32 %s282, 1
        %s284 = sld [smem:[#allocation3 + %s283]]
        %s285 = smul.u32 %s35, 256
        %v286 = vlaneseq
        %v287 = vshrl.u32 %v286, 7
        %v288 = vadd.s32 %v287, 8
        %v289 = vadd.s32 %v287, 16
        %v290 = vadd.s32 %v287, 24
        %v291 = vadd.s32 %v287, 32
        %v292 = vadd.s32 %v287, 40
        %v293 = vadd.s32 %v287, 48
        %v294 = vadd.s32 %v287, 56
        %v295 = vadd.s32 %v287, 64
        %v296 = vadd.s32 %v287, 72
        %v297 = vadd.s32 %v287, 80
        %v298 = vadd.s32 %v287, 88
        %v299 = vadd.s32 %v287, 96
        %v300 = vadd.s32 %v287, 104
        %v301 = vadd.s32 %v287, 112
        %v302 = vadd.s32 %v287, 120
        %v303 = vadd.s32 %v287, 128
        %v304 = vadd.s32 %v287, 136
        %v305 = vadd.s32 %v287, 144
        %v306 = vadd.s32 %v287, 152
        %v307 = vadd.s32 %v287, 160
        %v308 = vadd.s32 %v287, 168
        %v309 = vadd.s32 %v287, 176
        %v310 = vadd.s32 %v287, 184
        %v311 = vadd.s32 %v287, 192
        %v312 = vadd.s32 %v287, 200
        %v313 = vadd.s32 %v287, 208
        %v314 = vadd.s32 %v287, 216
        %v315 = vadd.s32 %v287, 224
        %v316 = vadd.s32 %v287, 232
        %v317 = vadd.s32 %v287, 240
        %v318 = vadd.s32 %v287, 248
        %v319 = vstv %s285
        %v320 = vadd.s32 %v287, %v319
        %v321 = vadd.s32 %v288, %v319
        %v322 = vadd.s32 %v289, %v319
        %v323 = vadd.s32 %v290, %v319
        %v324 = vadd.s32 %v291, %v319
        %v325 = vadd.s32 %v292, %v319
        %v326 = vadd.s32 %v293, %v319
        %v327 = vadd.s32 %v294, %v319
        %v328 = vadd.s32 %v295, %v319
        %v329 = vadd.s32 %v296, %v319
        %v330 = vadd.s32 %v297, %v319
        %v331 = vadd.s32 %v298, %v319
        %v332 = vadd.s32 %v299, %v319
        %v333 = vadd.s32 %v300, %v319
        %v334 = vadd.s32 %v301, %v319
        %v335 = vadd.s32 %v302, %v319
        %v336 = vadd.s32 %v303, %v319
        %v337 = vadd.s32 %v304, %v319
        %v338 = vadd.s32 %v305, %v319
        %v339 = vadd.s32 %v306, %v319
        %v340 = vadd.s32 %v307, %v319
        %v341 = vadd.s32 %v308, %v319
        %v342 = vadd.s32 %v309, %v319
        %v343 = vadd.s32 %v310, %v319
        %v344 = vadd.s32 %v311, %v319
        %v345 = vadd.s32 %v312, %v319
        %v346 = vadd.s32 %v313, %v319
        %v347 = vadd.s32 %v314, %v319
        %v348 = vadd.s32 %v315, %v319
        %v349 = vadd.s32 %v316, %v319
        %v350 = vadd.s32 %v317, %v319
        %v351 = vadd.s32 %v318, %v319
        %v352 = vcvt.s32.f32 %v320
        %v353 = vcvt.s32.f32 %v321
        %v354 = vcvt.s32.f32 %v322
        %v355 = vcvt.s32.f32 %v323
        %v356 = vcvt.s32.f32 %v324
        %v357 = vcvt.s32.f32 %v325
        %v358 = vcvt.s32.f32 %v326
        %v359 = vcvt.s32.f32 %v327
        %v360 = vcvt.s32.f32 %v328
        %v361 = vcvt.s32.f32 %v329
        %v362 = vcvt.s32.f32 %v330
        %v363 = vcvt.s32.f32 %v331
        %v364 = vcvt.s32.f32 %v332
        %v365 = vcvt.s32.f32 %v333
        %v366 = vcvt.s32.f32 %v334
        %v367 = vcvt.s32.f32 %v335
        %v368 = vcvt.s32.f32 %v336
        %v369 = vcvt.s32.f32 %v337
        %v370 = vcvt.s32.f32 %v338
        %v371 = vcvt.s32.f32 %v339
        %v372 = vcvt.s32.f32 %v340
        %v373 = vcvt.s32.f32 %v341
        %v374 = vcvt.s32.f32 %v342
        %v375 = vcvt.s32.f32 %v343
        %v376 = vcvt.s32.f32 %v344
        %v377 = vcvt.s32.f32 %v345
        %v378 = vcvt.s32.f32 %v346
        %v379 = vcvt.s32.f32 %v347
        %v380 = vcvt.s32.f32 %v348
        %v381 = vcvt.s32.f32 %v349
        %v382 = vcvt.s32.f32 %v350
        %v383 = vcvt.s32.f32 %v351
        %v384 = vlaneseq
        %v385 = vshrl.u32 %v384, 7
        %v386 = vsub.s32 0, %v385
        %v387 = vrot.slane %v280, %v386
        %v388 = vlaneseq
        %v389 = vshrl.u32 %v388, 7
        %v390 = vsub.s32 0, %v389
        %v391 = vrot.slane %v281, %v390
        %vm392 = vcmp.ge.f32.partialorder %v352, %v387
        %vm393 = vcmp.ge.f32.partialorder %v352, %v391
        %vm394 = vcmp.ge.f32.partialorder %v353, %v387
        %vm395 = vcmp.ge.f32.partialorder %v353, %v391
        %vm396 = vcmp.ge.f32.partialorder %v354, %v387
        %vm397 = vcmp.ge.f32.partialorder %v354, %v391
        %vm398 = vcmp.ge.f32.partialorder %v355, %v387
        %vm399 = vcmp.ge.f32.partialorder %v355, %v391
        %vm400 = vcmp.ge.f32.partialorder %v356, %v387
        %vm401 = vcmp.ge.f32.partialorder %v356, %v391
        %vm402 = vcmp.ge.f32.partialorder %v357, %v387
        %vm403 = vcmp.ge.f32.partialorder %v357, %v391
        %vm404 = vcmp.ge.f32.partialorder %v358, %v387
        %vm405 = vcmp.ge.f32.partialorder %v358, %v391
        %vm406 = vcmp.ge.f32.partialorder %v359, %v387
        %vm407 = vcmp.ge.f32.partialorder %v359, %v391
        %vm408 = vcmp.ge.f32.partialorder %v360, %v387
        %vm409 = vcmp.ge.f32.partialorder %v360, %v391
        %vm410 = vcmp.ge.f32.partialorder %v361, %v387
        %vm411 = vcmp.ge.f32.partialorder %v361, %v391
        %vm412 = vcmp.ge.f32.partialorder %v362, %v387
        %vm413 = vcmp.ge.f32.partialorder %v362, %v391
        %vm414 = vcmp.ge.f32.partialorder %v363, %v387
        %vm415 = vcmp.ge.f32.partialorder %v363, %v391
        %vm416 = vcmp.ge.f32.partialorder %v364, %v387
        %vm417 = vcmp.ge.f32.partialorder %v364, %v391
        %vm418 = vcmp.ge.f32.partialorder %v365, %v387
        %vm419 = vcmp.ge.f32.partialorder %v365, %v391
        %vm420 = vcmp.ge.f32.partialorder %v366, %v387
        %vm421 = vcmp.ge.f32.partialorder %v366, %v391
        %vm422 = vcmp.ge.f32.partialorder %v367, %v387
        %vm423 = vcmp.ge.f32.partialorder %v367, %v391
        %vm424 = vcmp.ge.f32.partialorder %v368, %v387
        %vm425 = vcmp.ge.f32.partialorder %v368, %v391
        %vm426 = vcmp.ge.f32.partialorder %v369, %v387
        %vm427 = vcmp.ge.f32.partialorder %v369, %v391
        %vm428 = vcmp.ge.f32.partialorder %v370, %v387
        %vm429 = vcmp.ge.f32.partialorder %v370, %v391
        %vm430 = vcmp.ge.f32.partialorder %v371, %v387
        %vm431 = vcmp.ge.f32.partialorder %v371, %v391
        %vm432 = vcmp.ge.f32.partialorder %v372, %v387
        %vm433 = vcmp.ge.f32.partialorder %v372, %v391
        %vm434 = vcmp.ge.f32.partialorder %v373, %v387
        %vm435 = vcmp.ge.f32.partialorder %v373, %v391
        %vm436 = vcmp.ge.f32.partialorder %v374, %v387
        %vm437 = vcmp.ge.f32.partialorder %v374, %v391
        %vm438 = vcmp.ge.f32.partialorder %v375, %v387
        %vm439 = vcmp.ge.f32.partialorder %v375, %v391
        %vm440 = vcmp.ge.f32.partialorder %v376, %v387
        %vm441 = vcmp.ge.f32.partialorder %v376, %v391
        %vm442 = vcmp.ge.f32.partialorder %v377, %v387
        %vm443 = vcmp.ge.f32.partialorder %v377, %v391
        %vm444 = vcmp.ge.f32.partialorder %v378, %v387
        %vm445 = vcmp.ge.f32.partialorder %v378, %v391
        %vm446 = vcmp.ge.f32.partialorder %v379, %v387
        %vm447 = vcmp.ge.f32.partialorder %v379, %v391
        %vm448 = vcmp.ge.f32.partialorder %v380, %v387
        %vm449 = vcmp.ge.f32.partialorder %v380, %v391
        %vm450 = vcmp.ge.f32.partialorder %v381, %v387
        %vm451 = vcmp.ge.f32.partialorder %v381, %v391
        %vm452 = vcmp.ge.f32.partialorder %v382, %v387
        %vm453 = vcmp.ge.f32.partialorder %v382, %v391
        %vm454 = vcmp.ge.f32.partialorder %v383, %v387
        %vm455 = vcmp.ge.f32.partialorder %v383, %v391
        %v456 = vlaneseq
        %v457 = vshrl.u32 %v456, 7
        %v458 = vsub.s32 1, %v457
        %v459 = vrot.slane %v280, %v458
        %v460 = vlaneseq
        %v461 = vshrl.u32 %v460, 7
        %v462 = vsub.s32 1, %v461
        %v463 = vrot.slane %v281, %v462
        %vm464 = vcmp.lt.f32.partialorder %v352, %v459
        %vm465 = vcmp.lt.f32.partialorder %v352, %v463
        %vm466 = vcmp.lt.f32.partialorder %v353, %v459
        %vm467 = vcmp.lt.f32.partialorder %v353, %v463
        %vm468 = vcmp.lt.f32.partialorder %v354, %v459
        %vm469 = vcmp.lt.f32.partialorder %v354, %v463
        %vm470 = vcmp.lt.f32.partialorder %v355, %v459
        %vm471 = vcmp.lt.f32.partialorder %v355, %v463
        %vm472 = vcmp.lt.f32.partialorder %v356, %v459
        %vm473 = vcmp.lt.f32.partialorder %v356, %v463
        %vm474 = vcmp.lt.f32.partialorder %v357, %v459
        %vm475 = vcmp.lt.f32.partialorder %v357, %v463
        %vm476 = vcmp.lt.f32.partialorder %v358, %v459
        %vm477 = vcmp.lt.f32.partialorder %v358, %v463
        %vm478 = vcmp.lt.f32.partialorder %v359, %v459
        %vm479 = vcmp.lt.f32.partialorder %v359, %v463
        %vm480 = vcmp.lt.f32.partialorder %v360, %v459
        %vm481 = vcmp.lt.f32.partialorder %v360, %v463
        %vm482 = vcmp.lt.f32.partialorder %v361, %v459
        %vm483 = vcmp.lt.f32.partialorder %v361, %v463
        %vm484 = vcmp.lt.f32.partialorder %v362, %v459
        %vm485 = vcmp.lt.f32.partialorder %v362, %v463
        %vm486 = vcmp.lt.f32.partialorder %v363, %v459
        %vm487 = vcmp.lt.f32.partialorder %v363, %v463
        %vm488 = vcmp.lt.f32.partialorder %v364, %v459
        %vm489 = vcmp.lt.f32.partialorder %v364, %v463
        %vm490 = vcmp.lt.f32.partialorder %v365, %v459
        %vm491 = vcmp.lt.f32.partialorder %v365, %v463
        %vm492 = vcmp.lt.f32.partialorder %v366, %v459
        %vm493 = vcmp.lt.f32.partialorder %v366, %v463
        %vm494 = vcmp.lt.f32.partialorder %v367, %v459
        %vm495 = vcmp.lt.f32.partialorder %v367, %v463
        %vm496 = vcmp.lt.f32.partialorder %v368, %v459
        %vm497 = vcmp.lt.f32.partialorder %v368, %v463
        %vm498 = vcmp.lt.f32.partialorder %v369, %v459
        %vm499 = vcmp.lt.f32.partialorder %v369, %v463
        %vm500 = vcmp.lt.f32.partialorder %v370, %v459
        %vm501 = vcmp.lt.f32.partialorder %v370, %v463
        %vm502 = vcmp.lt.f32.partialorder %v371, %v459
        %vm503 = vcmp.lt.f32.partialorder %v371, %v463
        %vm504 = vcmp.lt.f32.partialorder %v372, %v459
        %vm505 = vcmp.lt.f32.partialorder %v372, %v463
        %vm506 = vcmp.lt.f32.partialorder %v373, %v459
        %vm507 = vcmp.lt.f32.partialorder %v373, %v463
        %vm508 = vcmp.lt.f32.partialorder %v374, %v459
        %vm509 = vcmp.lt.f32.partialorder %v374, %v463
        %vm510 = vcmp.lt.f32.partialorder %v375, %v459
        %vm511 = vcmp.lt.f32.partialorder %v375, %v463
        %vm512 = vcmp.lt.f32.partialorder %v376, %v459
        %vm513 = vcmp.lt.f32.partialorder %v376, %v463
        %vm514 = vcmp.lt.f32.partialorder %v377, %v459
        %vm515 = vcmp.lt.f32.partialorder %v377, %v463
        %vm516 = vcmp.lt.f32.partialorder %v378, %v459
        %vm517 = vcmp.lt.f32.partialorder %v378, %v463
        %vm518 = vcmp.lt.f32.partialorder %v379, %v459
        %vm519 = vcmp.lt.f32.partialorder %v379, %v463
        %vm520 = vcmp.lt.f32.partialorder %v380, %v459
        %vm521 = vcmp.lt.f32.partialorder %v380, %v463
        %vm522 = vcmp.lt.f32.partialorder %v381, %v459
        %vm523 = vcmp.lt.f32.partialorder %v381, %v463
        %vm524 = vcmp.lt.f32.partialorder %v382, %v459
        %vm525 = vcmp.lt.f32.partialorder %v382, %v463
        %vm526 = vcmp.lt.f32.partialorder %v383, %v459
        %vm527 = vcmp.lt.f32.partialorder %v383, %v463
        %vm528 = vmand %vm392, %vm464
        %vm529 = vmand %vm393, %vm465
        %vm530 = vmand %vm394, %vm466
        %vm531 = vmand %vm395, %vm467
        %vm532 = vmand %vm396, %vm468
        %vm533 = vmand %vm397, %vm469
        %vm534 = vmand %vm398, %vm470
        %vm535 = vmand %vm399, %vm471
        %vm536 = vmand %vm400, %vm472
        %vm537 = vmand %vm401, %vm473
        %vm538 = vmand %vm402, %vm474
        %vm539 = vmand %vm403, %vm475
        %vm540 = vmand %vm404, %vm476
        %vm541 = vmand %vm405, %vm477
        %vm542 = vmand %vm406, %vm478
        %vm543 = vmand %vm407, %vm479
        %vm544 = vmand %vm408, %vm480
        %vm545 = vmand %vm409, %vm481
        %vm546 = vmand %vm410, %vm482
        %vm547 = vmand %vm411, %vm483
        %vm548 = vmand %vm412, %vm484
        %vm549 = vmand %vm413, %vm485
        %vm550 = vmand %vm414, %vm486
        %vm551 = vmand %vm415, %vm487
        %vm552 = vmand %vm416, %vm488
        %vm553 = vmand %vm417, %vm489
        %vm554 = vmand %vm418, %vm490
        %vm555 = vmand %vm419, %vm491
        %vm556 = vmand %vm420, %vm492
        %vm557 = vmand %vm421, %vm493
        %vm558 = vmand %vm422, %vm494
        %vm559 = vmand %vm423, %vm495
        %vm560 = vmand %vm424, %vm496
        %vm561 = vmand %vm425, %vm497
        %vm562 = vmand %vm426, %vm498
        %vm563 = vmand %vm427, %vm499
        %vm564 = vmand %vm428, %vm500
        %vm565 = vmand %vm429, %vm501
        %vm566 = vmand %vm430, %vm502
        %vm567 = vmand %vm431, %vm503
        %vm568 = vmand %vm432, %vm504
        %vm569 = vmand %vm433, %vm505
        %vm570 = vmand %vm434, %vm506
        %vm571 = vmand %vm435, %vm507
        %vm572 = vmand %vm436, %vm508
        %vm573 = vmand %vm437, %vm509
        %vm574 = vmand %vm438, %vm510
        %vm575 = vmand %vm439, %vm511
        %vm576 = vmand %vm440, %vm512
        %vm577 = vmand %vm441, %vm513
        %vm578 = vmand %vm442, %vm514
        %vm579 = vmand %vm443, %vm515
        %vm580 = vmand %vm444, %vm516
        %vm581 = vmand %vm445, %vm517
        %vm582 = vmand %vm446, %vm518
        %vm583 = vmand %vm447, %vm519
        %vm584 = vmand %vm448, %vm520
        %vm585 = vmand %vm449, %vm521
        %vm586 = vmand %vm450, %vm522
        %vm587 = vmand %vm451, %vm523
        %vm588 = vmand %vm452, %vm524
        %vm589 = vmand %vm453, %vm525
        %vm590 = vmand %vm454, %vm526
        %vm591 = vmand %vm455, %vm527
        %v592 = vsel %vm528, 1.0, 0.0
        %v593 = vsel %vm529, 1.0, 0.0
        %v594 = vsel %vm530, 1.0, 0.0
        %v595 = vsel %vm531, 1.0, 0.0
        %v596 = vsel %vm532, 1.0, 0.0
        %v597 = vsel %vm533, 1.0, 0.0
        %v598 = vsel %vm534, 1.0, 0.0
        %v599 = vsel %vm535, 1.0, 0.0
        %v600 = vsel %vm536, 1.0, 0.0
        %v601 = vsel %vm537, 1.0, 0.0
        %v602 = vsel %vm538, 1.0, 0.0
        %v603 = vsel %vm539, 1.0, 0.0
        %v604 = vsel %vm540, 1.0, 0.0
        %v605 = vsel %vm541, 1.0, 0.0
        %v606 = vsel %vm542, 1.0, 0.0
        %v607 = vsel %vm543, 1.0, 0.0
        %v608 = vsel %vm544, 1.0, 0.0
        %v609 = vsel %vm545, 1.0, 0.0
        %v610 = vsel %vm546, 1.0, 0.0
        %v611 = vsel %vm547, 1.0, 0.0
        %v612 = vsel %vm548, 1.0, 0.0
        %v613 = vsel %vm549, 1.0, 0.0
        %v614 = vsel %vm550, 1.0, 0.0
        %v615 = vsel %vm551, 1.0, 0.0
        %v616 = vsel %vm552, 1.0, 0.0
        %v617 = vsel %vm553, 1.0, 0.0
        %v618 = vsel %vm554, 1.0, 0.0
        %v619 = vsel %vm555, 1.0, 0.0
        %v620 = vsel %vm556, 1.0, 0.0
        %v621 = vsel %vm557, 1.0, 0.0
        %v622 = vsel %vm558, 1.0, 0.0
        %v623 = vsel %vm559, 1.0, 0.0
        %v624 = vsel %vm560, 1.0, 0.0
        %v625 = vsel %vm561, 1.0, 0.0
        %v626 = vsel %vm562, 1.0, 0.0
        %v627 = vsel %vm563, 1.0, 0.0
        %v628 = vsel %vm564, 1.0, 0.0
        %v629 = vsel %vm565, 1.0, 0.0
        %v630 = vsel %vm566, 1.0, 0.0
        %v631 = vsel %vm567, 1.0, 0.0
        %v632 = vsel %vm568, 1.0, 0.0
        %v633 = vsel %vm569, 1.0, 0.0
        %v634 = vsel %vm570, 1.0, 0.0
        %v635 = vsel %vm571, 1.0, 0.0
        %v636 = vsel %vm572, 1.0, 0.0
        %v637 = vsel %vm573, 1.0, 0.0
        %v638 = vsel %vm574, 1.0, 0.0
        %v639 = vsel %vm575, 1.0, 0.0
        %v640 = vsel %vm576, 1.0, 0.0
        %v641 = vsel %vm577, 1.0, 0.0
        %v642 = vsel %vm578, 1.0, 0.0
        %v643 = vsel %vm579, 1.0, 0.0
        %v644 = vsel %vm580, 1.0, 0.0
        %v645 = vsel %vm581, 1.0, 0.0
        %v646 = vsel %vm582, 1.0, 0.0
        %v647 = vsel %vm583, 1.0, 0.0
        %v648 = vsel %vm584, 1.0, 0.0
        %v649 = vsel %vm585, 1.0, 0.0
        %v650 = vsel %vm586, 1.0, 0.0
        %v651 = vsel %vm587, 1.0, 0.0
        %v652 = vsel %vm588, 1.0, 0.0
        %v653 = vsel %vm589, 1.0, 0.0
        %v654 = vsel %vm590, 1.0, 0.0
        %v655 = vsel %vm591, 1.0, 0.0
        %v656 = vpack.c.bf16 %v594, %v592
        %v657 = vpack.c.bf16 %v595, %v593
        %v658 = vpack.c.bf16 %v598, %v596
        %v659 = vpack.c.bf16 %v599, %v597
        %v660 = vpack.c.bf16 %v602, %v600
        %v661 = vpack.c.bf16 %v603, %v601
        %v662 = vpack.c.bf16 %v606, %v604
        %v663 = vpack.c.bf16 %v607, %v605
        %v664 = vpack.c.bf16 %v610, %v608
        %v665 = vpack.c.bf16 %v611, %v609
        %v666 = vpack.c.bf16 %v614, %v612
        %v667 = vpack.c.bf16 %v615, %v613
        %v668 = vpack.c.bf16 %v618, %v616
        %v669 = vpack.c.bf16 %v619, %v617
        %v670 = vpack.c.bf16 %v622, %v620
        %v671 = vpack.c.bf16 %v623, %v621
        %v672 = vpack.c.bf16 %v626, %v624
        %v673 = vpack.c.bf16 %v627, %v625
        %v674 = vpack.c.bf16 %v630, %v628
        %v675 = vpack.c.bf16 %v631, %v629
        %v676 = vpack.c.bf16 %v634, %v632
        %v677 = vpack.c.bf16 %v635, %v633
        %v678 = vpack.c.bf16 %v638, %v636
        %v679 = vpack.c.bf16 %v639, %v637
        %v680 = vpack.c.bf16 %v642, %v640
        %v681 = vpack.c.bf16 %v643, %v641
        %v682 = vpack.c.bf16 %v646, %v644
        %v683 = vpack.c.bf16 %v647, %v645
        %v684 = vpack.c.bf16 %v650, %v648
        %v685 = vpack.c.bf16 %v651, %v649
        %v686 = vpack.c.bf16 %v654, %v652
        %v687 = vpack.c.bf16 %v655, %v653
        %v688 = vld [vmem:[%s276] sm:$0xff]
        %v689 = vld [vmem:[%s276 + $0x8] sm:$0xff]
        %v690 = vld [vmem:[%s276 + $0x10] sm:$0xff]
        %v691 = vld [vmem:[%s276 + $0x18] sm:$0xff]
        %v692 = vld [vmem:[%s276 + $0x20] sm:$0xff]
        %v693 = vld [vmem:[%s276 + $0x28] sm:$0xff]
        %v694 = vld [vmem:[%s276 + $0x30] sm:$0xff]
        %v695 = vld [vmem:[%s276 + $0x38] sm:$0xff]
        %v696 = vld [vmem:[%s276 + $0x40] sm:$0xff]
        %v697 = vld [vmem:[%s276 + $0x48] sm:$0xff]
        %v698 = vld [vmem:[%s276 + $0x50] sm:$0xff]
        %v699 = vld [vmem:[%s276 + $0x58] sm:$0xff]
        %v700 = vld [vmem:[%s276 + $0x60] sm:$0xff]
        %v701 = vld [vmem:[%s276 + $0x68] sm:$0xff]
        %v702 = vld [vmem:[%s276 + $0x70] sm:$0xff]
        %v703 = vld [vmem:[%s276 + $0x78] sm:$0xff]
        %v704 = vld [vmem:[%s276 + $0x80] sm:$0xff]
        %v705 = vld [vmem:[%s276 + $0x88] sm:$0xff]
        %v706 = vld [vmem:[%s276 + $0x90] sm:$0xff]
        %v707 = vld [vmem:[%s276 + $0x98] sm:$0xff]
        %v708 = vld [vmem:[%s276 + $0xa0] sm:$0xff]
        %v709 = vld [vmem:[%s276 + $0xa8] sm:$0xff]
        %v710 = vld [vmem:[%s276 + $0xb0] sm:$0xff]
        %v711 = vld [vmem:[%s276 + $0xb8] sm:$0xff]
        %v712 = vld [vmem:[%s276 + $0xc0] sm:$0xff]
        %v713 = vld [vmem:[%s276 + $0xc8] sm:$0xff]
        %v714 = vld [vmem:[%s276 + $0xd0] sm:$0xff]
        %v715 = vld [vmem:[%s276 + $0xd8] sm:$0xff]
        %v716 = vld [vmem:[%s276 + $0xe0] sm:$0xff]
        %v717 = vld [vmem:[%s276 + $0xe8] sm:$0xff]
        %v718 = vld [vmem:[%s276 + $0xf0] sm:$0xff]
        %v719 = vld [vmem:[%s276 + $0xf8] sm:$0xff]
        %v752 = vunpack.c.l.b16 %v688
        %v753 = vunpack.c.h.b16 %v688
        %v754 = vunpack.c.l.b16 %v689
        %v755 = vunpack.c.h.b16 %v689
        %v756 = vunpack.c.l.b16 %v690
        %v757 = vunpack.c.h.b16 %v690
        %v758 = vunpack.c.l.b16 %v691
        %v759 = vunpack.c.h.b16 %v691
        %v760 = vunpack.c.l.b16 %v692
        %v761 = vunpack.c.h.b16 %v692
        %v762 = vunpack.c.l.b16 %v693
        %v763 = vunpack.c.h.b16 %v693
        %v764 = vunpack.c.l.b16 %v694
        %v765 = vunpack.c.h.b16 %v694
        %v766 = vunpack.c.l.b16 %v695
        %v767 = vunpack.c.h.b16 %v695
        %v768 = vunpack.c.l.b16 %v696
        %v769 = vunpack.c.h.b16 %v696
        %v770 = vunpack.c.l.b16 %v697
        %v771 = vunpack.c.h.b16 %v697
        %v772 = vunpack.c.l.b16 %v698
        %v773 = vunpack.c.h.b16 %v698
        %v774 = vunpack.c.l.b16 %v699
        %v775 = vunpack.c.h.b16 %v699
        %v776 = vunpack.c.l.b16 %v700
        %v777 = vunpack.c.h.b16 %v700
        %v778 = vunpack.c.l.b16 %v701
        %v779 = vunpack.c.h.b16 %v701
        %v780 = vunpack.c.l.b16 %v702
        %v781 = vunpack.c.h.b16 %v702
        %v782 = vunpack.c.l.b16 %v703
        %v783 = vunpack.c.h.b16 %v703
        %v784 = vunpack.c.l.b16 %v704
        %v785 = vunpack.c.h.b16 %v704
        %v786 = vunpack.c.l.b16 %v705
        %v787 = vunpack.c.h.b16 %v705
        %v788 = vunpack.c.l.b16 %v706
        %v789 = vunpack.c.h.b16 %v706
        %v790 = vunpack.c.l.b16 %v707
        %v791 = vunpack.c.h.b16 %v707
        %v792 = vunpack.c.l.b16 %v708
        %v793 = vunpack.c.h.b16 %v708
        %v794 = vunpack.c.l.b16 %v709
        %v795 = vunpack.c.h.b16 %v709
        %v796 = vunpack.c.l.b16 %v710
        %v797 = vunpack.c.h.b16 %v710
        %v798 = vunpack.c.l.b16 %v711
        %v799 = vunpack.c.h.b16 %v711
        %v800 = vunpack.c.l.b16 %v712
        %v801 = vunpack.c.h.b16 %v712
        %v802 = vunpack.c.l.b16 %v713
        %v803 = vunpack.c.h.b16 %v713
        %v804 = vunpack.c.l.b16 %v714
        %v805 = vunpack.c.h.b16 %v714
        %v806 = vunpack.c.l.b16 %v715
        %v807 = vunpack.c.h.b16 %v715
        %v808 = vunpack.c.l.b16 %v716
        %v809 = vunpack.c.h.b16 %v716
        %v810 = vunpack.c.l.b16 %v717
        %v811 = vunpack.c.h.b16 %v717
        %v812 = vunpack.c.l.b16 %v718
        %v813 = vunpack.c.h.b16 %v718
        %v814 = vunpack.c.l.b16 %v719
        %v815 = vunpack.c.h.b16 %v719
        %v816 = vpack.c.b16 %v754, %v752
        %v817 = vpack.c.b16 %v755, %v753
        %v818 = vpack.c.b16 %v758, %v756
        %v819 = vpack.c.b16 %v759, %v757
        %v820 = vpack.c.b16 %v762, %v760
        %v821 = vpack.c.b16 %v763, %v761
        %v822 = vpack.c.b16 %v766, %v764
        %v823 = vpack.c.b16 %v767, %v765
        %v824 = vpack.c.b16 %v770, %v768
        %v825 = vpack.c.b16 %v771, %v769
        %v826 = vpack.c.b16 %v774, %v772
        %v827 = vpack.c.b16 %v775, %v773
        %v828 = vpack.c.b16 %v778, %v776
        %v829 = vpack.c.b16 %v779, %v777
        %v830 = vpack.c.b16 %v782, %v780
        %v831 = vpack.c.b16 %v783, %v781
        %v832 = vpack.c.b16 %v786, %v784
        %v833 = vpack.c.b16 %v787, %v785
        %v834 = vpack.c.b16 %v790, %v788
        %v835 = vpack.c.b16 %v791, %v789
        %v836 = vpack.c.b16 %v794, %v792
        %v837 = vpack.c.b16 %v795, %v793
        %v838 = vpack.c.b16 %v798, %v796
        %v839 = vpack.c.b16 %v799, %v797
        %v840 = vpack.c.b16 %v802, %v800
        %v841 = vpack.c.b16 %v803, %v801
        %v842 = vpack.c.b16 %v806, %v804
        %v843 = vpack.c.b16 %v807, %v805
        %v844 = vpack.c.b16 %v810, %v808
        %v845 = vpack.c.b16 %v811, %v809
        %v846 = vpack.c.b16 %v814, %v812
        %v847 = vpack.c.b16 %v815, %v813
        %880 = vmatprep.subr.bf16.mxu0 %v831
        %881 = vmatpush1.bf16.msra.mxu0 %v830
        %882 = vmatprep.subr.bf16.mxu0 %v829
        %883 = vmatpush1.bf16.msra.mxu0 %v828
        %884 = vmatprep.subr.bf16.mxu0 %v827
        %885 = vmatpush1.bf16.msra.mxu0 %v826
        %886 = vmatprep.subr.bf16.mxu0 %v825
        %887 = vmatpush1.bf16.msra.mxu0 %v824
        %888 = vmatprep.subr.bf16.mxu0 %v823
        %889 = vmatpush1.bf16.msra.mxu0 %v822
        %890 = vmatprep.subr.bf16.mxu0 %v821
        %891 = vmatpush1.bf16.msra.mxu0 %v820
        %892 = vmatprep.subr.bf16.mxu0 %v819
        %893 = vmatpush1.bf16.msra.mxu0 %v818
        %894 = vmatprep.subr.bf16.mxu0 %v817
        %895 = vmatpush1.bf16.msra.mxu0 %v816
        %896 = vmatprep.subr.bf16.mxu0 %v847
        %897 = vmatpush2.bf16.msra.mxu0 %v846
        %898 = vmatprep.subr.bf16.mxu0 %v845
        %899 = vmatpush2.bf16.msra.mxu0 %v844
        %900 = vmatprep.subr.bf16.mxu0 %v843
        %901 = vmatpush2.bf16.msra.mxu0 %v842
        %902 = vmatprep.subr.bf16.mxu0 %v841
        %903 = vmatpush2.bf16.msra.mxu0 %v840
        %904 = vmatprep.subr.bf16.mxu0 %v839
        %905 = vmatpush2.bf16.msra.mxu0 %v838
        %906 = vmatprep.subr.bf16.mxu0 %v837
        %907 = vmatpush2.bf16.msra.mxu0 %v836
        %908 = vmatprep.subr.bf16.mxu0 %v835
        %909 = vmatpush2.bf16.msra.mxu0 %v834
        %910 = vmatprep.subr.bf16.mxu0 %v833
        %911 = vmatpush2.bf16.msra.mxu0 %v832
        %912 = vmatprep.mubr.bf16.mxu0 %v657
        %913 = vmatmul.mubr.bf16.gmra.mxu0 %v656
        %v914 = vpop.f32.mrf.mxu0
        %v915 = vadd.f32 0.0, %v914
        %v916 = vpop.f32.mrf.mxu0
        %v917 = vadd.f32 0.0, %v916
        %v918 = vpop.f32.mrf.mxu0
        %v919 = vadd.f32 0.0, %v918
        %v920 = vpop.f32.mrf.mxu0
        %v921 = vadd.f32 0.0, %v920
        %922 = vmatprep.mubr.bf16.mxu0 %v659
        %923 = vmatmul.mubr.bf16.gmra.mxu0 %v658
        %v924 = vpop.f32.mrf.mxu0
        %v925 = vadd.f32 0.0, %v924
        %v926 = vpop.f32.mrf.mxu0
        %v927 = vadd.f32 0.0, %v926
        %v928 = vpop.f32.mrf.mxu0
        %v929 = vadd.f32 0.0, %v928
        %v930 = vpop.f32.mrf.mxu0
        %v931 = vadd.f32 0.0, %v930
        %932 = vmatprep.mubr.bf16.mxu0 %v661
        %933 = vmatmul.mubr.bf16.gmra.mxu0 %v660
        %v934 = vpop.f32.mrf.mxu0
        %v935 = vadd.f32 0.0, %v934
        %v936 = vpop.f32.mrf.mxu0
        %v937 = vadd.f32 0.0, %v936
        %v938 = vpop.f32.mrf.mxu0
        %v939 = vadd.f32 0.0, %v938
        %v940 = vpop.f32.mrf.mxu0
        %v941 = vadd.f32 0.0, %v940
        %942 = vmatprep.mubr.bf16.mxu0 %v663
        %943 = vmatmul.mubr.bf16.gmra.mxu0 %v662
        %v944 = vpop.f32.mrf.mxu0
        %v945 = vadd.f32 0.0, %v944
        %v946 = vpop.f32.mrf.mxu0
        %v947 = vadd.f32 0.0, %v946
        %v948 = vpop.f32.mrf.mxu0
        %v949 = vadd.f32 0.0, %v948
        %v950 = vpop.f32.mrf.mxu0
        %v951 = vadd.f32 0.0, %v950
        %952 = vmatprep.mubr.bf16.mxu0 %v665
        %953 = vmatmul.mubr.bf16.gmra.mxu0 %v664
        %v954 = vpop.f32.mrf.mxu0
        %v955 = vadd.f32 0.0, %v954
        %v956 = vpop.f32.mrf.mxu0
        %v957 = vadd.f32 0.0, %v956
        %v958 = vpop.f32.mrf.mxu0
        %v959 = vadd.f32 0.0, %v958
        %v960 = vpop.f32.mrf.mxu0
        %v961 = vadd.f32 0.0, %v960
        %962 = vmatprep.mubr.bf16.mxu0 %v667
        %963 = vmatmul.mubr.bf16.gmra.mxu0 %v666
        %v964 = vpop.f32.mrf.mxu0
        %v965 = vadd.f32 0.0, %v964
        %v966 = vpop.f32.mrf.mxu0
        %v967 = vadd.f32 0.0, %v966
        %v968 = vpop.f32.mrf.mxu0
        %v969 = vadd.f32 0.0, %v968
        %v970 = vpop.f32.mrf.mxu0
        %v971 = vadd.f32 0.0, %v970
        %972 = vmatprep.mubr.bf16.mxu0 %v669
        %973 = vmatmul.mubr.bf16.gmra.mxu0 %v668
        %v974 = vpop.f32.mrf.mxu0
        %v975 = vadd.f32 0.0, %v974
        %v976 = vpop.f32.mrf.mxu0
        %v977 = vadd.f32 0.0, %v976
        %v978 = vpop.f32.mrf.mxu0
        %v979 = vadd.f32 0.0, %v978
        %v980 = vpop.f32.mrf.mxu0
        %v981 = vadd.f32 0.0, %v980
        %982 = vmatprep.mubr.bf16.mxu0 %v671
        %983 = vmatmul.mubr.bf16.gmra.mxu0 %v670
        %v984 = vpop.f32.mrf.mxu0
        %v985 = vadd.f32 0.0, %v984
        %v986 = vpop.f32.mrf.mxu0
        %v987 = vadd.f32 0.0, %v986
        %v988 = vpop.f32.mrf.mxu0
        %v989 = vadd.f32 0.0, %v988
        %v990 = vpop.f32.mrf.mxu0
        %v991 = vadd.f32 0.0, %v990
        %992 = vmatprep.mubr.bf16.mxu0 %v673
        %993 = vmatmul.mubr.bf16.gmra.mxu0 %v672
        %v994 = vpop.f32.mrf.mxu0
        %v995 = vadd.f32 0.0, %v994
        %v996 = vpop.f32.mrf.mxu0
        %v997 = vadd.f32 0.0, %v996
        %v998 = vpop.f32.mrf.mxu0
        %v999 = vadd.f32 0.0, %v998
        %v1000 = vpop.f32.mrf.mxu0
        %v1001 = vadd.f32 0.0, %v1000
        %1002 = vmatprep.mubr.bf16.mxu0 %v675
        %1003 = vmatmul.mubr.bf16.gmra.mxu0 %v674
        %v1004 = vpop.f32.mrf.mxu0
        %v1005 = vadd.f32 0.0, %v1004
        %v1006 = vpop.f32.mrf.mxu0
        %v1007 = vadd.f32 0.0, %v1006
        %v1008 = vpop.f32.mrf.mxu0
        %v1009 = vadd.f32 0.0, %v1008
        %v1010 = vpop.f32.mrf.mxu0
        %v1011 = vadd.f32 0.0, %v1010
        %1012 = vmatprep.mubr.bf16.mxu0 %v677
        %1013 = vmatmul.mubr.bf16.gmra.mxu0 %v676
        %v1014 = vpop.f32.mrf.mxu0
        %v1015 = vadd.f32 0.0, %v1014
        %v1016 = vpop.f32.mrf.mxu0
        %v1017 = vadd.f32 0.0, %v1016
        %v1018 = vpop.f32.mrf.mxu0
        %v1019 = vadd.f32 0.0, %v1018
        %v1020 = vpop.f32.mrf.mxu0
        %v1021 = vadd.f32 0.0, %v1020
        %1022 = vmatprep.mubr.bf16.mxu0 %v679
        %1023 = vmatmul.mubr.bf16.gmra.mxu0 %v678
        %v1024 = vpop.f32.mrf.mxu0
        %v1025 = vadd.f32 0.0, %v1024
        %v1026 = vpop.f32.mrf.mxu0
        %v1027 = vadd.f32 0.0, %v1026
        %v1028 = vpop.f32.mrf.mxu0
        %v1029 = vadd.f32 0.0, %v1028
        %v1030 = vpop.f32.mrf.mxu0
        %v1031 = vadd.f32 0.0, %v1030
        %1032 = vmatprep.mubr.bf16.mxu0 %v681
        %1033 = vmatmul.mubr.bf16.gmra.mxu0 %v680
        %v1034 = vpop.f32.mrf.mxu0
        %v1035 = vadd.f32 0.0, %v1034
        %v1036 = vpop.f32.mrf.mxu0
        %v1037 = vadd.f32 0.0, %v1036
        %v1038 = vpop.f32.mrf.mxu0
        %v1039 = vadd.f32 0.0, %v1038
        %v1040 = vpop.f32.mrf.mxu0
        %v1041 = vadd.f32 0.0, %v1040
        %1042 = vmatprep.mubr.bf16.mxu0 %v683
        %1043 = vmatmul.mubr.bf16.gmra.mxu0 %v682
        %v1044 = vpop.f32.mrf.mxu0
        %v1045 = vadd.f32 0.0, %v1044
        %v1046 = vpop.f32.mrf.mxu0
        %v1047 = vadd.f32 0.0, %v1046
        %v1048 = vpop.f32.mrf.mxu0
        %v1049 = vadd.f32 0.0, %v1048
        %v1050 = vpop.f32.mrf.mxu0
        %v1051 = vadd.f32 0.0, %v1050
        %1052 = vmatprep.mubr.bf16.mxu0 %v685
        %1053 = vmatmul.mubr.bf16.gmra.mxu0 %v684
        %v1054 = vpop.f32.mrf.mxu0
        %v1055 = vadd.f32 0.0, %v1054
        %v1056 = vpop.f32.mrf.mxu0
        %v1057 = vadd.f32 0.0, %v1056
        %v1058 = vpop.f32.mrf.mxu0
        %v1059 = vadd.f32 0.0, %v1058
        %v1060 = vpop.f32.mrf.mxu0
        %v1061 = vadd.f32 0.0, %v1060
        %1062 = vmatprep.mubr.bf16.mxu0 %v687
        %1063 = vmatmul.mubr.bf16.gmra.mxu0 %v686
        %v1064 = vpop.f32.mrf.mxu0
        %v1065 = vadd.f32 0.0, %v1064
        %v1066 = vpop.f32.mrf.mxu0
        %v1067 = vadd.f32 0.0, %v1066
        %v1068 = vpop.f32.mrf.mxu0
        %v1069 = vadd.f32 0.0, %v1068
        %v1070 = vpop.f32.mrf.mxu0
        %v1071 = vadd.f32 0.0, %v1070
        %1072 = vdwg.mxu0
        %v1073 = vpack.c.bf16 %v921, %v917
        %v1074 = vpack.c.bf16 %v931, %v927
        %v1075 = vpack.c.bf16 %v941, %v937
        %v1076 = vpack.c.bf16 %v951, %v947
        %v1077 = vpack.c.bf16 %v961, %v957
        %v1078 = vpack.c.bf16 %v971, %v967
        %v1079 = vpack.c.bf16 %v981, %v977
        %v1080 = vpack.c.bf16 %v991, %v987
        %v1081 = vpack.c.bf16 %v1001, %v997
        %v1082 = vpack.c.bf16 %v1011, %v1007
        %v1083 = vpack.c.bf16 %v1021, %v1017
        %v1084 = vpack.c.bf16 %v1031, %v1027
        %v1085 = vpack.c.bf16 %v1041, %v1037
        %v1086 = vpack.c.bf16 %v1051, %v1047
        %v1087 = vpack.c.bf16 %v1061, %v1057
        %v1088 = vpack.c.bf16 %v1071, %v1067
        %v1105 = vunpack.c.l.b16 %v1073
        %v1106 = vunpack.c.h.b16 %v1073
        %v1107 = vunpack.c.l.b16 %v1074
        %v1108 = vunpack.c.h.b16 %v1074
        %v1109 = vunpack.c.l.b16 %v1075
        %v1110 = vunpack.c.h.b16 %v1075
        %v1111 = vunpack.c.l.b16 %v1076
        %v1112 = vunpack.c.h.b16 %v1076
        %v1113 = vunpack.c.l.b16 %v1077
        %v1114 = vunpack.c.h.b16 %v1077
        %v1115 = vunpack.c.l.b16 %v1078
        %v1116 = vunpack.c.h.b16 %v1078
        %v1117 = vunpack.c.l.b16 %v1079
        %v1118 = vunpack.c.h.b16 %v1079
        %v1119 = vunpack.c.l.b16 %v1080
        %v1120 = vunpack.c.h.b16 %v1080
        %v1121 = vunpack.c.l.b16 %v1081
        %v1122 = vunpack.c.h.b16 %v1081
        %v1123 = vunpack.c.l.b16 %v1082
        %v1124 = vunpack.c.h.b16 %v1082
        %v1125 = vunpack.c.l.b16 %v1083
        %v1126 = vunpack.c.h.b16 %v1083
        %v1127 = vunpack.c.l.b16 %v1084
        %v1128 = vunpack.c.h.b16 %v1084
        %v1129 = vunpack.c.l.b16 %v1085
        %v1130 = vunpack.c.h.b16 %v1085
        %v1131 = vunpack.c.l.b16 %v1086
        %v1132 = vunpack.c.h.b16 %v1086
        %v1133 = vunpack.c.l.b16 %v1087
        %v1134 = vunpack.c.h.b16 %v1087
        %v1135 = vunpack.c.l.b16 %v1088
        %v1136 = vunpack.c.h.b16 %v1088
        %v1137 = vpack.c.b16 %v1105, %v1105
        %v1138 = vpack.c.b16 %v1106, %v1106
        %v1139 = vpack.c.b16 %v1107, %v1107
        %v1140 = vpack.c.b16 %v1108, %v1108
        %v1141 = vpack.c.b16 %v1109, %v1109
        %v1142 = vpack.c.b16 %v1110, %v1110
        %v1143 = vpack.c.b16 %v1111, %v1111
        %v1144 = vpack.c.b16 %v1112, %v1112
        %v1145 = vpack.c.b16 %v1113, %v1113
        %v1146 = vpack.c.b16 %v1114, %v1114
        %v1147 = vpack.c.b16 %v1115, %v1115
        %v1148 = vpack.c.b16 %v1116, %v1116
        %v1149 = vpack.c.b16 %v1117, %v1117
        %v1150 = vpack.c.b16 %v1118, %v1118
        %v1151 = vpack.c.b16 %v1119, %v1119
        %v1152 = vpack.c.b16 %v1120, %v1120
        %v1153 = vpack.c.b16 %v1121, %v1121
        %v1154 = vpack.c.b16 %v1122, %v1122
        %v1155 = vpack.c.b16 %v1123, %v1123
        %v1156 = vpack.c.b16 %v1124, %v1124
        %v1157 = vpack.c.b16 %v1125, %v1125
        %v1158 = vpack.c.b16 %v1126, %v1126
        %v1159 = vpack.c.b16 %v1127, %v1127
        %v1160 = vpack.c.b16 %v1128, %v1128
        %v1161 = vpack.c.b16 %v1129, %v1129
        %v1162 = vpack.c.b16 %v1130, %v1130
        %v1163 = vpack.c.b16 %v1131, %v1131
        %v1164 = vpack.c.b16 %v1132, %v1132
        %v1165 = vpack.c.b16 %v1133, %v1133
        %v1166 = vpack.c.b16 %v1134, %v1134
        %v1167 = vpack.c.b16 %v1135, %v1135
        %v1168 = vpack.c.b16 %v1136, %v1136
        %1201 = vst [vmem:[%s259] sm:$0xf] %v1137
        %1202 = vst [vmem:[%s259 + $0x4] sm:$0xf] %v1138
        %1203 = vst [vmem:[%s259 + $0x8] sm:$0xf] %v1139
        %1204 = vst [vmem:[%s259 + $0xc] sm:$0xf] %v1140
        %1205 = vst [vmem:[%s259 + $0x10] sm:$0xf] %v1141
        %1206 = vst [vmem:[%s259 + $0x14] sm:$0xf] %v1142
        %1207 = vst [vmem:[%s259 + $0x18] sm:$0xf] %v1143
        %1208 = vst [vmem:[%s259 + $0x1c] sm:$0xf] %v1144
        %1209 = vst [vmem:[%s259 + $0x20] sm:$0xf] %v1145
        %1210 = vst [vmem:[%s259 + $0x24] sm:$0xf] %v1146
        %1211 = vst [vmem:[%s259 + $0x28] sm:$0xf] %v1147
        %1212 = vst [vmem:[%s259 + $0x2c] sm:$0xf] %v1148
        %1213 = vst [vmem:[%s259 + $0x30] sm:$0xf] %v1149
        %1214 = vst [vmem:[%s259 + $0x34] sm:$0xf] %v1150
        %1215 = vst [vmem:[%s259 + $0x38] sm:$0xf] %v1151
        %1216 = vst [vmem:[%s259 + $0x3c] sm:$0xf] %v1152
        %1217 = vst [vmem:[%s259 + $0x40] sm:$0xf] %v1153
        %1218 = vst [vmem:[%s259 + $0x44] sm:$0xf] %v1154
        %1219 = vst [vmem:[%s259 + $0x48] sm:$0xf] %v1155
        %1220 = vst [vmem:[%s259 + $0x4c] sm:$0xf] %v1156
        %1221 = vst [vmem:[%s259 + $0x50] sm:$0xf] %v1157
        %1222 = vst [vmem:[%s259 + $0x54] sm:$0xf] %v1158
        %1223 = vst [vmem:[%s259 + $0x58] sm:$0xf] %v1159
        %1224 = vst [vmem:[%s259 + $0x5c] sm:$0xf] %v1160
        %1225 = vst [vmem:[%s259 + $0x60] sm:$0xf] %v1161
        %1226 = vst [vmem:[%s259 + $0x64] sm:$0xf] %v1162
        %1227 = vst [vmem:[%s259 + $0x68] sm:$0xf] %v1163
        %1228 = vst [vmem:[%s259 + $0x6c] sm:$0xf] %v1164
        %1229 = vst [vmem:[%s259 + $0x70] sm:$0xf] %v1165
        %1230 = vst [vmem:[%s259 + $0x74] sm:$0xf] %v1166
        %1231 = vst [vmem:[%s259 + $0x78] sm:$0xf] %v1167
        %1232 = vst [vmem:[%s259 + $0x7c] sm:$0xf] %v1168
        %v1233 = vpack.c.bf16 %v919, %v915
        %v1234 = vpack.c.bf16 %v929, %v925
        %v1235 = vpack.c.bf16 %v939, %v935
        %v1236 = vpack.c.bf16 %v949, %v945
        %v1237 = vpack.c.bf16 %v959, %v955
        %v1238 = vpack.c.bf16 %v969, %v965
        %v1239 = vpack.c.bf16 %v979, %v975
        %v1240 = vpack.c.bf16 %v989, %v985
        %v1241 = vpack.c.bf16 %v999, %v995
        %v1242 = vpack.c.bf16 %v1009, %v1005
        %v1243 = vpack.c.bf16 %v1019, %v1015
        %v1244 = vpack.c.bf16 %v1029, %v1025
        %v1245 = vpack.c.bf16 %v1039, %v1035
        %v1246 = vpack.c.bf16 %v1049, %v1045
        %v1247 = vpack.c.bf16 %v1059, %v1055
        %v1248 = vpack.c.bf16 %v1069, %v1065
        %v1249 = vld [vmem:[%s3] sm:$0xf]
        %v1250 = vld [vmem:[%s3 + $0x4] sm:$0xf]
        %v1251 = vld [vmem:[%s3 + $0x8] sm:$0xf]
        %v1252 = vld [vmem:[%s3 + $0xc] sm:$0xf]
        %v1253 = vld [vmem:[%s3 + $0x10] sm:$0xf]
        %v1254 = vld [vmem:[%s3 + $0x14] sm:$0xf]
        %v1255 = vld [vmem:[%s3 + $0x18] sm:$0xf]
        %v1256 = vld [vmem:[%s3 + $0x1c] sm:$0xf]
        %v1257 = vld [vmem:[%s3 + $0x20] sm:$0xf]
        %v1258 = vld [vmem:[%s3 + $0x24] sm:$0xf]
        %v1259 = vld [vmem:[%s3 + $0x28] sm:$0xf]
        %v1260 = vld [vmem:[%s3 + $0x2c] sm:$0xf]
        %v1261 = vld [vmem:[%s3 + $0x30] sm:$0xf]
        %v1262 = vld [vmem:[%s3 + $0x34] sm:$0xf]
        %v1263 = vld [vmem:[%s3 + $0x38] sm:$0xf]
        %v1264 = vld [vmem:[%s3 + $0x3c] sm:$0xf]
        %v1265 = vld [vmem:[%s4] sm:$0x1]
        %v1267 = vlaneseq
        %v1268 = vshrl.u32 %v1267, 7
        %v1269 = vsub.s32 0, %v1268
        %v1270 = vrot.slane %v1265, %v1269
        %v1288 = vunpack.c.l.b16 %v1249
        %v1289 = vunpack.c.l.b16 %v1250
        %v1290 = vunpack.c.l.b16 %v1251
        %v1291 = vunpack.c.l.b16 %v1252
        %v1292 = vunpack.c.l.b16 %v1253
        %v1293 = vunpack.c.l.b16 %v1254
        %v1294 = vunpack.c.l.b16 %v1255
        %v1295 = vunpack.c.l.b16 %v1256
        %v1296 = vunpack.c.l.b16 %v1257
        %v1297 = vunpack.c.l.b16 %v1258
        %v1298 = vunpack.c.l.b16 %v1259
        %v1299 = vunpack.c.l.b16 %v1260
        %v1300 = vunpack.c.l.b16 %v1261
        %v1301 = vunpack.c.l.b16 %v1262
        %v1302 = vunpack.c.l.b16 %v1263
        %v1303 = vunpack.c.l.b16 %v1264
        %v1304 = vpack.c.b16 %v1289, %v1288
        %v1305 = vpack.c.b16 %v1291, %v1290
        %v1306 = vpack.c.b16 %v1293, %v1292
        %v1307 = vpack.c.b16 %v1295, %v1294
        %v1308 = vpack.c.b16 %v1297, %v1296
        %v1309 = vpack.c.b16 %v1299, %v1298
        %v1310 = vpack.c.b16 %v1301, %v1300
        %v1311 = vpack.c.b16 %v1303, %v1302
        %1320 = vmatprep.subr.bf16.mxu0 0
        %1321 = vmatpush1.bf16.msra.mxu0 %v1311
        %1322 = vmatprep.subr.bf16.mxu0 0
        %1323 = vmatpush1.bf16.msra.mxu0 %v1310
        %1324 = vmatprep.subr.bf16.mxu0 0
        %1325 = vmatpush1.bf16.msra.mxu0 %v1309
        %1326 = vmatprep.subr.bf16.mxu0 0
        %1327 = vmatpush1.bf16.msra.mxu0 %v1308
        %1328 = vmatprep.subr.bf16.mxu0 0
        %1329 = vmatpush1.bf16.msra.mxu0 %v1307
        %1330 = vmatprep.subr.bf16.mxu0 0
        %1331 = vmatpush1.bf16.msra.mxu0 %v1306
        %1332 = vmatprep.subr.bf16.mxu0 0
        %1333 = vmatpush1.bf16.msra.mxu0 %v1305
        %1334 = vmatprep.subr.bf16.mxu0 0
        %1335 = vmatpush1.bf16.msra.mxu0 %v1304
        %1336 = vmatprep.subr.bf16.mxu0 0
        %1337 = vmatpush2.bf16.msra.mxu0 0
        %1338 = vmatprep.subr.bf16.mxu0 0
        %1339 = vmatpush2.bf16.msra.mxu0 0
        %1340 = vmatprep.subr.bf16.mxu0 0
        %1341 = vmatpush2.bf16.msra.mxu0 0
        %1342 = vmatprep.subr.bf16.mxu0 0
        %1343 = vmatpush2.bf16.msra.mxu0 0
        %1344 = vmatprep.subr.bf16.mxu0 0
        %1345 = vmatpush2.bf16.msra.mxu0 0
        %1346 = vmatprep.subr.bf16.mxu0 0
        %1347 = vmatpush2.bf16.msra.mxu0 0
        %1348 = vmatprep.subr.bf16.mxu0 0
        %1349 = vmatpush2.bf16.msra.mxu0 0
        %1350 = vmatprep.subr.bf16.mxu0 0
        %1351 = vmatpush2.bf16.msra.mxu0 0
        %1352 = vmatprep.mubr.bf16.mxu0 0
        %1353 = vmatmul.mubr.bf16.gmra.mxu0 %v1233
        %v1354 = vpop.f32.mrf.mxu0
        %v1355 = vadd.f32 %v1270, %v1354
        %v1356 = vpop.f32.mrf.mxu0
        %v1357 = vpop.f32.mrf.mxu0
        %v1358 = vadd.f32 %v1270, %v1357
        %v1359 = vpop.f32.mrf.mxu0
        %1360 = vmatprep.mubr.bf16.mxu0 0
        %1361 = vmatmul.mubr.bf16.gmra.mxu0 %v1234
        %v1362 = vpop.f32.mrf.mxu0
        %v1363 = vadd.f32 %v1270, %v1362
        %v1364 = vpop.f32.mrf.mxu0
        %v1365 = vpop.f32.mrf.mxu0
        %v1366 = vadd.f32 %v1270, %v1365
        %v1367 = vpop.f32.mrf.mxu0
        %1368 = vmatprep.mubr.bf16.mxu0 0
        %1369 = vmatmul.mubr.bf16.gmra.mxu0 %v1235
        %v1370 = vpop.f32.mrf.mxu0
        %v1371 = vadd.f32 %v1270, %v1370
        %v1372 = vpop.f32.mrf.mxu0
        %v1373 = vpop.f32.mrf.mxu0
        %v1374 = vadd.f32 %v1270, %v1373
        %v1375 = vpop.f32.mrf.mxu0
        %1376 = vmatprep.mubr.bf16.mxu0 0
        %1377 = vmatmul.mubr.bf16.gmra.mxu0 %v1236
        %v1378 = vpop.f32.mrf.mxu0
        %v1379 = vadd.f32 %v1270, %v1378
        %v1380 = vpop.f32.mrf.mxu0
        %v1381 = vpop.f32.mrf.mxu0
        %v1382 = vadd.f32 %v1270, %v1381
        %v1383 = vpop.f32.mrf.mxu0
        %1384 = vmatprep.mubr.bf16.mxu0 0
        %1385 = vmatmul.mubr.bf16.gmra.mxu0 %v1237
        %v1386 = vpop.f32.mrf.mxu0
        %v1387 = vadd.f32 %v1270, %v1386
        %v1388 = vpop.f32.mrf.mxu0
        %v1389 = vpop.f32.mrf.mxu0
        %v1390 = vadd.f32 %v1270, %v1389
        %v1391 = vpop.f32.mrf.mxu0
        %1392 = vmatprep.mubr.bf16.mxu0 0
        %1393 = vmatmul.mubr.bf16.gmra.mxu0 %v1238
        %v1394 = vpop.f32.mrf.mxu0
        %v1395 = vadd.f32 %v1270, %v1394
        %v1396 = vpop.f32.mrf.mxu0
        %v1397 = vpop.f32.mrf.mxu0
        %v1398 = vadd.f32 %v1270, %v1397
        %v1399 = vpop.f32.mrf.mxu0
        %1400 = vmatprep.mubr.bf16.mxu0 0
        %1401 = vmatmul.mubr.bf16.gmra.mxu0 %v1239
        %v1402 = vpop.f32.mrf.mxu0
        %v1403 = vadd.f32 %v1270, %v1402
        %v1404 = vpop.f32.mrf.mxu0
        %v1405 = vpop.f32.mrf.mxu0
        %v1406 = vadd.f32 %v1270, %v1405
        %v1407 = vpop.f32.mrf.mxu0
        %1408 = vmatprep.mubr.bf16.mxu0 0
        %1409 = vmatmul.mubr.bf16.gmra.mxu0 %v1240
        %v1410 = vpop.f32.mrf.mxu0
        %v1411 = vadd.f32 %v1270, %v1410
        %v1412 = vpop.f32.mrf.mxu0
        %v1413 = vpop.f32.mrf.mxu0
        %v1414 = vadd.f32 %v1270, %v1413
        %v1415 = vpop.f32.mrf.mxu0
        %1416 = vmatprep.mubr.bf16.mxu0 0
        %1417 = vmatmul.mubr.bf16.gmra.mxu0 %v1241
        %v1418 = vpop.f32.mrf.mxu0
        %v1419 = vadd.f32 %v1270, %v1418
        %v1420 = vpop.f32.mrf.mxu0
        %v1421 = vpop.f32.mrf.mxu0
        %v1422 = vadd.f32 %v1270, %v1421
        %v1423 = vpop.f32.mrf.mxu0
        %1424 = vmatprep.mubr.bf16.mxu0 0
        %1425 = vmatmul.mubr.bf16.gmra.mxu0 %v1242
        %v1426 = vpop.f32.mrf.mxu0
        %v1427 = vadd.f32 %v1270, %v1426
        %v1428 = vpop.f32.mrf.mxu0
        %v1429 = vpop.f32.mrf.mxu0
        %v1430 = vadd.f32 %v1270, %v1429
        %v1431 = vpop.f32.mrf.mxu0
        %1432 = vmatprep.mubr.bf16.mxu0 0
        %1433 = vmatmul.mubr.bf16.gmra.mxu0 %v1243
        %v1434 = vpop.f32.mrf.mxu0
        %v1435 = vadd.f32 %v1270, %v1434
        %v1436 = vpop.f32.mrf.mxu0
        %v1437 = vpop.f32.mrf.mxu0
        %v1438 = vadd.f32 %v1270, %v1437
        %v1439 = vpop.f32.mrf.mxu0
        %1440 = vmatprep.mubr.bf16.mxu0 0
        %1441 = vmatmul.mubr.bf16.gmra.mxu0 %v1244
        %v1442 = vpop.f32.mrf.mxu0
        %v1443 = vadd.f32 %v1270, %v1442
        %v1444 = vpop.f32.mrf.mxu0
        %v1445 = vpop.f32.mrf.mxu0
        %v1446 = vadd.f32 %v1270, %v1445
        %v1447 = vpop.f32.mrf.mxu0
        %1448 = vmatprep.mubr.bf16.mxu0 0
        %1449 = vmatmul.mubr.bf16.gmra.mxu0 %v1245
        %v1450 = vpop.f32.mrf.mxu0
        %v1451 = vadd.f32 %v1270, %v1450
        %v1452 = vpop.f32.mrf.mxu0
        %v1453 = vpop.f32.mrf.mxu0
        %v1454 = vadd.f32 %v1270, %v1453
        %v1455 = vpop.f32.mrf.mxu0
        %1456 = vmatprep.mubr.bf16.mxu0 0
        %1457 = vmatmul.mubr.bf16.gmra.mxu0 %v1246
        %v1458 = vpop.f32.mrf.mxu0
        %v1459 = vadd.f32 %v1270, %v1458
        %v1460 = vpop.f32.mrf.mxu0
        %v1461 = vpop.f32.mrf.mxu0
        %v1462 = vadd.f32 %v1270, %v1461
        %v1463 = vpop.f32.mrf.mxu0
        %1464 = vmatprep.mubr.bf16.mxu0 0
        %1465 = vmatmul.mubr.bf16.gmra.mxu0 %v1247
        %v1466 = vpop.f32.mrf.mxu0
        %v1467 = vadd.f32 %v1270, %v1466
        %v1468 = vpop.f32.mrf.mxu0
        %v1469 = vpop.f32.mrf.mxu0
        %v1470 = vadd.f32 %v1270, %v1469
        %v1471 = vpop.f32.mrf.mxu0
        %1472 = vmatprep.mubr.bf16.mxu0 0
        %1473 = vmatmul.mubr.bf16.gmra.mxu0 %v1248
        %v1474 = vpop.f32.mrf.mxu0
        %v1475 = vadd.f32 %v1270, %v1474
        %v1476 = vpop.f32.mrf.mxu0
        %v1477 = vpop.f32.mrf.mxu0
        %v1478 = vadd.f32 %v1270, %v1477
        %v1479 = vpop.f32.mrf.mxu0
        %1480 = vdwg.mxu0
        %v1481 = vstv %s284
        %vm1482 = vcmp.ge.s32.totalorder %v320, %v1481
        %vm1483 = vcmp.ge.s32.totalorder %v321, %v1481
        %vm1484 = vcmp.ge.s32.totalorder %v322, %v1481
        %vm1485 = vcmp.ge.s32.totalorder %v323, %v1481
        %vm1486 = vcmp.ge.s32.totalorder %v324, %v1481
        %vm1487 = vcmp.ge.s32.totalorder %v325, %v1481
        %vm1488 = vcmp.ge.s32.totalorder %v326, %v1481
        %vm1489 = vcmp.ge.s32.totalorder %v327, %v1481
        %vm1490 = vcmp.ge.s32.totalorder %v328, %v1481
        %vm1491 = vcmp.ge.s32.totalorder %v329, %v1481
        %vm1492 = vcmp.ge.s32.totalorder %v330, %v1481
        %vm1493 = vcmp.ge.s32.totalorder %v331, %v1481
        %vm1494 = vcmp.ge.s32.totalorder %v332, %v1481
        %vm1495 = vcmp.ge.s32.totalorder %v333, %v1481
        %vm1496 = vcmp.ge.s32.totalorder %v334, %v1481
        %vm1497 = vcmp.ge.s32.totalorder %v335, %v1481
        %vm1498 = vcmp.ge.s32.totalorder %v336, %v1481
        %vm1499 = vcmp.ge.s32.totalorder %v337, %v1481
        %vm1500 = vcmp.ge.s32.totalorder %v338, %v1481
        %vm1501 = vcmp.ge.s32.totalorder %v339, %v1481
        %vm1502 = vcmp.ge.s32.totalorder %v340, %v1481
        %vm1503 = vcmp.ge.s32.totalorder %v341, %v1481
        %vm1504 = vcmp.ge.s32.totalorder %v342, %v1481
        %vm1505 = vcmp.ge.s32.totalorder %v343, %v1481
        %vm1506 = vcmp.ge.s32.totalorder %v344, %v1481
        %vm1507 = vcmp.ge.s32.totalorder %v345, %v1481
        %vm1508 = vcmp.ge.s32.totalorder %v346, %v1481
        %vm1509 = vcmp.ge.s32.totalorder %v347, %v1481
        %vm1510 = vcmp.ge.s32.totalorder %v348, %v1481
        %vm1511 = vcmp.ge.s32.totalorder %v349, %v1481
        %vm1512 = vcmp.ge.s32.totalorder %v350, %v1481
        %vm1513 = vcmp.ge.s32.totalorder %v351, %v1481
        %v1514 = vsel %vm1482, 1, 0
        %v1515 = vsel %vm1483, 1, 0
        %v1516 = vsel %vm1484, 1, 0
        %v1517 = vsel %vm1485, 1, 0
        %v1518 = vsel %vm1486, 1, 0
        %v1519 = vsel %vm1487, 1, 0
        %v1520 = vsel %vm1488, 1, 0
        %v1521 = vsel %vm1489, 1, 0
        %v1522 = vsel %vm1490, 1, 0
        %v1523 = vsel %vm1491, 1, 0
        %v1524 = vsel %vm1492, 1, 0
        %v1525 = vsel %vm1493, 1, 0
        %v1526 = vsel %vm1494, 1, 0
        %v1527 = vsel %vm1495, 1, 0
        %v1528 = vsel %vm1496, 1, 0
        %v1529 = vsel %vm1497, 1, 0
        %v1530 = vsel %vm1498, 1, 0
        %v1531 = vsel %vm1499, 1, 0
        %v1532 = vsel %vm1500, 1, 0
        %v1533 = vsel %vm1501, 1, 0
        %v1534 = vsel %vm1502, 1, 0
        %v1535 = vsel %vm1503, 1, 0
        %v1536 = vsel %vm1504, 1, 0
        %v1537 = vsel %vm1505, 1, 0
        %v1538 = vsel %vm1506, 1, 0
        %v1539 = vsel %vm1507, 1, 0
        %v1540 = vsel %vm1508, 1, 0
        %v1541 = vsel %vm1509, 1, 0
        %v1542 = vsel %vm1510, 1, 0
        %v1543 = vsel %vm1511, 1, 0
        %v1544 = vsel %vm1512, 1, 0
        %v1545 = vsel %vm1513, 1, 0
        %vm1546 = vcmp.eq.s32.totalorder %v1514, 1
        %vm1547 = vcmp.eq.s32.totalorder %v1515, 1
        %vm1548 = vcmp.eq.s32.totalorder %v1516, 1
        %vm1549 = vcmp.eq.s32.totalorder %v1517, 1
        %vm1550 = vcmp.eq.s32.totalorder %v1518, 1
        %vm1551 = vcmp.eq.s32.totalorder %v1519, 1
        %vm1552 = vcmp.eq.s32.totalorder %v1520, 1
        %vm1553 = vcmp.eq.s32.totalorder %v1521, 1
        %vm1554 = vcmp.eq.s32.totalorder %v1522, 1
        %vm1555 = vcmp.eq.s32.totalorder %v1523, 1
        %vm1556 = vcmp.eq.s32.totalorder %v1524, 1
        %vm1557 = vcmp.eq.s32.totalorder %v1525, 1
        %vm1558 = vcmp.eq.s32.totalorder %v1526, 1
        %vm1559 = vcmp.eq.s32.totalorder %v1527, 1
        %vm1560 = vcmp.eq.s32.totalorder %v1528, 1
        %vm1561 = vcmp.eq.s32.totalorder %v1529, 1
        %vm1562 = vcmp.eq.s32.totalorder %v1530, 1
        %vm1563 = vcmp.eq.s32.totalorder %v1531, 1
        %vm1564 = vcmp.eq.s32.totalorder %v1532, 1
        %vm1565 = vcmp.eq.s32.totalorder %v1533, 1
        %vm1566 = vcmp.eq.s32.totalorder %v1534, 1
        %vm1567 = vcmp.eq.s32.totalorder %v1535, 1
        %vm1568 = vcmp.eq.s32.totalorder %v1536, 1
        %vm1569 = vcmp.eq.s32.totalorder %v1537, 1
        %vm1570 = vcmp.eq.s32.totalorder %v1538, 1
        %vm1571 = vcmp.eq.s32.totalorder %v1539, 1
        %vm1572 = vcmp.eq.s32.totalorder %v1540, 1
        %vm1573 = vcmp.eq.s32.totalorder %v1541, 1
        %vm1574 = vcmp.eq.s32.totalorder %v1542, 1
        %vm1575 = vcmp.eq.s32.totalorder %v1543, 1
        %vm1576 = vcmp.eq.s32.totalorder %v1544, 1
        %vm1577 = vcmp.eq.s32.totalorder %v1545, 1
        %v1578 = vsel %vm1546, 0.0, %v1355
        %v1579 = vsel %vm1547, 0.0, %v1358
        %v1580 = vsel %vm1548, 0.0, %v1363
        %v1581 = vsel %vm1549, 0.0, %v1366
        %v1582 = vsel %vm1550, 0.0, %v1371
        %v1583 = vsel %vm1551, 0.0, %v1374
        %v1584 = vsel %vm1552, 0.0, %v1379
        %v1585 = vsel %vm1553, 0.0, %v1382
        %v1586 = vsel %vm1554, 0.0, %v1387
        %v1587 = vsel %vm1555, 0.0, %v1390
        %v1588 = vsel %vm1556, 0.0, %v1395
        %v1589 = vsel %vm1557, 0.0, %v1398
        %v1590 = vsel %vm1558, 0.0, %v1403
        %v1591 = vsel %vm1559, 0.0, %v1406
        %v1592 = vsel %vm1560, 0.0, %v1411
        %v1593 = vsel %vm1561, 0.0, %v1414
        %v1594 = vsel %vm1562, 0.0, %v1419
        %v1595 = vsel %vm1563, 0.0, %v1422
        %v1596 = vsel %vm1564, 0.0, %v1427
        %v1597 = vsel %vm1565, 0.0, %v1430
        %v1598 = vsel %vm1566, 0.0, %v1435
        %v1599 = vsel %vm1567, 0.0, %v1438
        %v1600 = vsel %vm1568, 0.0, %v1443
        %v1601 = vsel %vm1569, 0.0, %v1446
        %v1602 = vsel %vm1570, 0.0, %v1451
        %v1603 = vsel %vm1571, 0.0, %v1454
        %v1604 = vsel %vm1572, 0.0, %v1459
        %v1605 = vsel %vm1573, 0.0, %v1462
        %v1606 = vsel %vm1574, 0.0, %v1467
        %v1607 = vsel %vm1575, 0.0, %v1470
        %v1608 = vsel %vm1576, 0.0, %v1475
        %v1609 = vsel %vm1577, 0.0, %v1478
        %1610 = vst [vmem:[%s266] sm:$0xff] %v1578
        %1611 = vst [vmem:[%s266 + $0x8] sm:$0xff] %v1579
        %1612 = vst [vmem:[%s266 + $0x10] sm:$0xff] %v1580
        %1613 = vst [vmem:[%s266 + $0x18] sm:$0xff] %v1581
        %1614 = vst [vmem:[%s266 + $0x20] sm:$0xff] %v1582
        %1615 = vst [vmem:[%s266 + $0x28] sm:$0xff] %v1583
        %1616 = vst [vmem:[%s266 + $0x30] sm:$0xff] %v1584
        %1617 = vst [vmem:[%s266 + $0x38] sm:$0xff] %v1585
        %1618 = vst [vmem:[%s266 + $0x40] sm:$0xff] %v1586
        %1619 = vst [vmem:[%s266 + $0x48] sm:$0xff] %v1587
        %1620 = vst [vmem:[%s266 + $0x50] sm:$0xff] %v1588
        %1621 = vst [vmem:[%s266 + $0x58] sm:$0xff] %v1589
        %1622 = vst [vmem:[%s266 + $0x60] sm:$0xff] %v1590
        %1623 = vst [vmem:[%s266 + $0x68] sm:$0xff] %v1591
        %1624 = vst [vmem:[%s266 + $0x70] sm:$0xff] %v1592
        %1625 = vst [vmem:[%s266 + $0x78] sm:$0xff] %v1593
        %1626 = vst [vmem:[%s266 + $0x80] sm:$0xff] %v1594
        %1627 = vst [vmem:[%s266 + $0x88] sm:$0xff] %v1595
        %1628 = vst [vmem:[%s266 + $0x90] sm:$0xff] %v1596
        %1629 = vst [vmem:[%s266 + $0x98] sm:$0xff] %v1597
        %1630 = vst [vmem:[%s266 + $0xa0] sm:$0xff] %v1598
        %1631 = vst [vmem:[%s266 + $0xa8] sm:$0xff] %v1599
        %1632 = vst [vmem:[%s266 + $0xb0] sm:$0xff] %v1600
        %1633 = vst [vmem:[%s266 + $0xb8] sm:$0xff] %v1601
        %1634 = vst [vmem:[%s266 + $0xc0] sm:$0xff] %v1602
        %1635 = vst [vmem:[%s266 + $0xc8] sm:$0xff] %v1603
        %1636 = vst [vmem:[%s266 + $0xd0] sm:$0xff] %v1604
        %1637 = vst [vmem:[%s266 + $0xd8] sm:$0xff] %v1605
        %1638 = vst [vmem:[%s266 + $0xe0] sm:$0xff] %v1606
        %1639 = vst [vmem:[%s266 + $0xe8] sm:$0xff] %v1607
        %1640 = vst [vmem:[%s266 + $0xf0] sm:$0xff] %v1608
        %1641 = vst [vmem:[%s266 + $0xf8] sm:$0xff] %v1609
        %s1642 = sand.u32 %s146, 1
        %s1643 = scalar_lea.sflag [#allocation5], %s1642
        %s1644 = sand.u32 %s146, 1
        %s1645 = smul.addr %s1644, 128
        %s1646 = scalar_lea.vmem [#allocation4], %s1645
        %s1647 = sand.u32 %s174, 1
        %s1648 = scalar_lea.sflag [#allocation7], %s1647
        %s1649 = sand.u32 %s174, 1
        %s1650 = smul.addr %s1649, 256
        %s1651 = scalar_lea.vmem [#allocation6], %s1650
        // Predicated region
        $region37: #{frontend_forward.3} parent=35 // pred_check
          %p1652 = pneg %p156
        $region38: #{frontend_forward.3} parent=35 // pred_check_branch
          %1654 = sbr.rel (%p1652) target = $region40
        $region39: #{frontend_forward.3} parent=35 // pred_region
          %s1655 = smul.u32 32, %s35
          %s1657 = ssub.s32 2048, 2048
          %1658 = vsyncadd %s1643, %s1657
          %s1659 = smul.addr %s34, 32
          %s1660 = sadd.s32 %s1655, %s1659
          %s1661 = smul.addr %s1660, 64
          %s1662 = scalar_lea.hbm %s5, %s1661
          %s1663 = sshll.u32 %s1646, 4
          %s1664 = int_to_ptr.vmem [resolvable:$true] %s1663
          %1669 = dma.vmem_to_hbm [thread:$0]  %s1664, 2048, %s1662, %s1643, 64, 64, 4
        $region40: #{frontend_forward.3} parent=35 // pred_fallthru
          _
        // Predicated region
        $region41: #{frontend_forward.3} parent=35 // pred_check
          %p1670 = pneg %p184
        $region42: #{frontend_forward.3} parent=35 // pred_check_branch
          %1672 = sbr.rel (%p1670) target = $region44
        $region43: #{frontend_forward.3} parent=35 // pred_region
          %s1673 = smul.u32 32, %s35
          %s1675 = ssub.s32 4096, 4096
          %1676 = vsyncadd %s1648, %s1675
          %s1677 = smul.addr %s34, 32
          %s1678 = sadd.s32 %s1673, %s1677
          %s1679 = smul.addr %s1678, 128
          %s1680 = scalar_lea.hbm %s6, %s1679
          %s1681 = sshll.u32 %s1651, 4
          %s1682 = int_to_ptr.vmem [resolvable:$true] %s1681
          %1687 = dma.vmem_to_hbm [thread:$0]  %s1682, 4096, %s1680, %s1648, 128, 128, 8
        $region44: #{frontend_forward.3} parent=35 // pred_fallthru
          _
      $region36: #{frontend_forward.3} parent=5 // pred_fallthru
        _
      %p1688 = scmp.le.s32.totalorder 2, %s25
      // Predicated region
      $region45: #{frontend_forward.3} parent=5 // pred_check
        %p1689 = pneg %p1688
      $region46: #{frontend_forward.3} parent=5 // pred_check_branch
        %1691 = sbr.rel (%p1689) target = $region48
      $region47: #{frontend_forward.3} parent=5 // pred_region
        %s1692 = ssub.s32 %s25, 2
        // Predicated region
        $region49: #{frontend_forward.3} parent=47 // pred_check
          %p1693 = pneg %p162
        $region50: #{frontend_forward.3} parent=47 // pred_check_branch
          %1695 = sbr.rel (%p1693) target = $region52
        $region51: #{frontend_forward.3} parent=47 // pred_region
          %s1696 = sand.u32 %s147, 1
          %s1697 = scalar_lea.sflag [#allocation5], %s1696
          %s1698 = sand.u32 %s147, 1
          %s1699 = smul.addr %s1698, 128
          %s1700 = scalar_lea.vmem [#allocation4], %s1699
          %1701 = dma.done %s1697, 2048
        $region52: #{frontend_forward.3} parent=47 // pred_fallthru
          _
        // Predicated region
        $region53: #{frontend_forward.3} parent=47 // pred_check
          %p1702 = pneg %p190
        $region54: #{frontend_forward.3} parent=47 // pred_check_branch
          %1704 = sbr.rel (%p1702) target = $region56
        $region55: #{frontend_forward.3} parent=47 // pred_region
          %s1705 = sand.u32 %s175, 1
          %s1706 = scalar_lea.sflag [#allocation7], %s1705
          %s1707 = sand.u32 %s175, 1
          %s1708 = smul.addr %s1707, 256
          %s1709 = scalar_lea.vmem [#allocation6], %s1708
          %1710 = dma.done %s1706, 4096
        $region56: #{frontend_forward.3} parent=47 // pred_fallthru
          _
      $region48: #{frontend_forward.3} parent=5 // pred_fallthru
        _
    $region6: #{frontend_forward.3} parent=1 // loop_footer
      %s29 = sadd.s32 1, %s25
    $region7: #{frontend_forward.3} parent=1 // loop_footer_branch
      %24 = sbr.rel target = $region3
    $region8: #{frontend_forward.3} parent=1 // loop_exit
      _
    %1711 = vsyncpa [#allocation5], 1
    %s1712 = scalar_lea.sflag [#allocation5], 1
    %1713 = vsyncpa %s1712, 1
    %1714 = vsyncpa [#allocation7], 1
    %s1715 = scalar_lea.sflag [#allocation7], 1
    %1716 = vsyncpa %s1715, 1

// kernel: frontend_forward.2
$region0: #{frontend_forward.2}
  #allocation0 [shape = 'u32[]', space=smem, size = 0x4, offset = 0x4, fixed_abs, tag = 'smem constant byte address 0x4 - core index']
  #allocation1 [shape = 'u32[144,128]{1,0:T(1,128)}', space=vmem, size = 0x12000, scoped, tag = 'internal scratch']
  #allocation2 [shape = 's32[1]{0}', space=sflag, size = 0x4, scoped, tag = 'scoped memory for frontend_forward.2']
  #allocation3 [shape = 'u8[512]{0}', space=smem, size = 0x200, scoped, tag = 'prefetched SMEM operand 0']
  %s0 = inlined_call_operand.vmem [shape: s32[4], index: 0, kind: input, shape index: {}]
  %s1 = inlined_call_operand.vmem [shape: f32[2,256,8], index: 1, kind: input, shape index: {}]
  %s2 = inlined_call_operand.vmem [shape: f32[2,256,128], index: 2, kind: input, shape index: {}]
  %s3 = inlined_call_operand.vmem [shape: f32[1,128], index: 3, kind: input, shape index: {}]
  %s4 = inlined_call_operand.vmem [shape: f32[2,256,8], index: 4, kind: input, shape index: {}]
  %s5 = inlined_call_operand.vmem [shape: f32[4,128], index: 5, kind: input, shape index: {}]
  %s6 = inlined_call_operand.vmem [shape: bf16[128,192], index: 6, kind: input, shape index: {}]
  %s7 = inlined_call_operand.vmem [shape: f32[1,192], index: 7, kind: input, shape index: {}]
  %s8 = inlined_call_operand.vmem [shape: bf16[192,128], index: 8, kind: input, shape index: {}]
  %s9 = inlined_call_operand.vmem [shape: f32[1,128], index: 9, kind: input, shape index: {}]
  %s10 = inlined_call_operand.vmem [shape: bf16[2,256,256], index: 10, kind: output, shape index: {0}]
  %s11 = inlined_call_operand.vmem [shape: f32[2,256,128], index: 11, kind: output, shape index: {1}]
  %12 = xla_tuple %s10, %s11
  %s13 = sld [smem:[#allocation0]]
  $region77: #{frontend_forward.2} parent=0
    _
  %s15 = ssub.s32 1, %s13
  %s16 = scalar_select 0, %s15, %s13
  %s17 = sshll.u32 %s0, 4
  %s18 = int_to_ptr.vmem [resolvable:$true] %s17
  %20 = dma.vmem_to_smem %s18, 16, [#allocation3], [#allocation2]
  %21 = dma.done [#allocation2], 16
  %22 = sfence
  loop: start=0, step=1, limit=4
  $region2: #{frontend_forward.2} parent=0 // loop_pre_header
    _
  $region3: #{frontend_forward.2} parent=0 // loop_header
    %s24 = sphi 0, %s28
    %p25 = scmp.ge.s32.totalorder %s24, 4
    %s31 = sphi 0, %s43
    %s32 = sphi 0, %s39
    %s33 = sphi 0, %s31
    %s34 = sphi 0, %s32
    %s35 = sphi 0, %s33
    %s36 = sphi 0, %s34
    %s48 = sphi 0, %s50
    %s51 = sphi 0, %s48
    %s52 = sphi 0, %s51
    %s68 = sphi 0, %s52
    %s76 = sphi 0, %s78
    %s79 = sphi 0, %s76
    %s80 = sphi 0, %s79
    %s96 = sphi 0, %s80
    %s100 = sphi 0, %s100
    %s102 = sphi 0, %s100
    %s103 = sphi 0, %s102
    %s117 = sphi 0, %s103
    %s123 = sphi 0, %s125
    %s126 = sphi 0, %s123
    %s127 = sphi 0, %s126
    %s143 = sphi 0, %s127
    %s147 = sphi 0, %s147
    %s149 = sphi 0, %s147
    %s150 = sphi 0, %s149
    %s164 = sphi 0, %s150
    %s168 = sphi 0, %s168
    %s170 = sphi 0, %s168
    %s171 = sphi 0, %s170
    %s185 = sphi 0, %s171
    %s189 = sphi 0, %s189
    %s191 = sphi 0, %s189
    %s192 = sphi 0, %s191
    %s206 = sphi 0, %s192
    %s210 = sphi 0, %s210
    %s212 = sphi 0, %s210
    %s213 = sphi 0, %s212
    %s227 = sphi 0, %s213
    %s231 = sphi 0, %s231
    %s233 = sphi 0, %s231
    %s234 = sphi 0, %s233
    %s248 = sphi 0, %s234
    %s256 = sphi 0, %s258
    %s259 = sphi 0, %s256
    %s260 = sphi 0, %s259
    %s276 = sphi 0, %s260
    %s284 = sphi 0, %s286
    %s287 = sphi 0, %s284
    %s288 = sphi 0, %s287
    %s304 = sphi 0, %s288
  $region4: #{frontend_forward.2} parent=0 // loop_header_branch
    %27 = sbr.rel (%p25) target = $region8
  $region5: #{frontend_forward.2} parent=0 // loop_body
    %s29 = ssub.s32 %s24, 1
    %s30 = ssub.s32 %s24, 2
    %s37 = sadd.s32 1, %s32
    %p38 = scmp.ge.s32.totalorder %s37, 1
    %s39 = scalar_select %p38, 0, %s37
    %s40 = sadd.s32 1, %s31
    %s41 = scalar_select %p38, %s40, %s31
    %p42 = scmp.ge.s32.totalorder %s41, 2
    %s43 = scalar_select %p42, 0, %s41
    %s44 = ssub.s32 %s31, %s43
    %s45 = ssub.s32 %s32, %s39
    %s46 = sor.u32 %s44, %s45
    %p47 = scmp.eq.s32.totalorder %s46, 0
    %s49 = sadd.s32 %s48, 1
    %s50 = scalar_select %p47, %s48, %s49
    %p53 = pneg %p47
    %p54 = scmp.eq.s32.totalorder %s24, 1
    %p55 = por %p53, %p54
    %p56 = scmp.ne.s32.totalorder %s48, %s51
    %p57 = scmp.eq.s32.totalorder %s24, 0
    %p58 = por %p56, %p57
    %p59 = scmp.ne.s32.totalorder %s48, %s51
    %p60 = scmp.eq.s32.totalorder %s29, 1
    %p61 = por %p59, %p60
    %p62 = scmp.ne.s32.totalorder %s51, %s52
    %p63 = scmp.eq.s32.totalorder %s29, 0
    %p64 = por %p62, %p63
    %p65 = scmp.ne.s32.totalorder %s51, %s52
    %p66 = scmp.eq.s32.totalorder %s30, 1
    %p67 = por %p65, %p66
    %p69 = scmp.ne.s32.totalorder %s52, %s68
    %p70 = scmp.eq.s32.totalorder %s30, 0
    %p71 = por %p69, %p70
    %s72 = ssub.s32 %s31, %s43
    %s73 = ssub.s32 %s32, %s39
    %s74 = sor.u32 %s72, %s73
    %p75 = scmp.eq.s32.totalorder %s74, 0
    %s77 = sadd.s32 %s76, 1
    %s78 = scalar_select %p75, %s76, %s77
    %p81 = pneg %p75
    %p82 = scmp.eq.s32.totalorder %s24, 1
    %p83 = por %p81, %p82
    %p84 = scmp.ne.s32.totalorder %s76, %s79
    %p85 = scmp.eq.s32.totalorder %s24, 0
    %p86 = por %p84, %p85
    %p87 = scmp.ne.s32.totalorder %s76, %s79
    %p88 = scmp.eq.s32.totalorder %s29, 1
    %p89 = por %p87, %p88
    %p90 = scmp.ne.s32.totalorder %s79, %s80
    %p91 = scmp.eq.s32.totalorder %s29, 0
    %p92 = por %p90, %p91
    %p93 = scmp.ne.s32.totalorder %s79, %s80
    %p94 = scmp.eq.s32.totalorder %s30, 1
    %p95 = por %p93, %p94
    %p97 = scmp.ne.s32.totalorder %s80, %s96
    %p98 = scmp.eq.s32.totalorder %s30, 0
    %p99 = por %p97, %p98
    %s101 = sadd.s32 %s100, 1
    %p104 = scmp.eq.s32.totalorder %s24, 1
    %p105 = scmp.ne.s32.totalorder %s100, %s102
    %p106 = scmp.eq.s32.totalorder %s24, 0
    %p107 = por %p105, %p106
    %p108 = scmp.ne.s32.totalorder %s100, %s102
    %p109 = scmp.eq.s32.totalorder %s29, 1
    %p110 = por %p108, %p109
    %p111 = scmp.ne.s32.totalorder %s102, %s103
    %p112 = scmp.eq.s32.totalorder %s29, 0
    %p113 = por %p111, %p112
    %p114 = scmp.ne.s32.totalorder %s102, %s103
    %p115 = scmp.eq.s32.totalorder %s30, 1
    %p116 = por %p114, %p115
    %p118 = scmp.ne.s32.totalorder %s103, %s117
    %p119 = scmp.eq.s32.totalorder %s30, 0
    %p120 = por %p118, %p119
    %s121 = ssub.s32 %s31, %s43
    %p122 = scmp.eq.s32.totalorder %s121, 0
    %s124 = sadd.s32 %s123, 1
    %s125 = scalar_select %p122, %s123, %s124
    %p128 = pneg %p122
    %p129 = scmp.eq.s32.totalorder %s24, 1
    %p130 = por %p128, %p129
    %p131 = scmp.ne.s32.totalorder %s123, %s126
    %p132 = scmp.eq.s32.totalorder %s24, 0
    %p133 = por %p131, %p132
    %p134 = scmp.ne.s32.totalorder %s123, %s126
    %p135 = scmp.eq.s32.totalorder %s29, 1
    %p136 = por %p134, %p135
    %p137 = scmp.ne.s32.totalorder %s126, %s127
    %p138 = scmp.eq.s32.totalorder %s29, 0
    %p139 = por %p137, %p138
    %p140 = scmp.ne.s32.totalorder %s126, %s127
    %p141 = scmp.eq.s32.totalorder %s30, 1
    %p142 = por %p140, %p141
    %p144 = scmp.ne.s32.totalorder %s127, %s143
    %p145 = scmp.eq.s32.totalorder %s30, 0
    %p146 = por %p144, %p145
    %s148 = sadd.s32 %s147, 1
    %p151 = scmp.eq.s32.totalorder %s24, 1
    %p152 = scmp.ne.s32.totalorder %s147, %s149
    %p153 = scmp.eq.s32.totalorder %s24, 0
    %p154 = por %p152, %p153
    %p155 = scmp.ne.s32.totalorder %s147, %s149
    %p156 = scmp.eq.s32.totalorder %s29, 1
    %p157 = por %p155, %p156
    %p158 = scmp.ne.s32.totalorder %s149, %s150
    %p159 = scmp.eq.s32.totalorder %s29, 0
    %p160 = por %p158, %p159
    %p161 = scmp.ne.s32.totalorder %s149, %s150
    %p162 = scmp.eq.s32.totalorder %s30, 1
    %p163 = por %p161, %p162
    %p165 = scmp.ne.s32.totalorder %s150, %s164
    %p166 = scmp.eq.s32.totalorder %s30, 0
    %p167 = por %p165, %p166
    %s169 = sadd.s32 %s168, 1
    %p172 = scmp.eq.s32.totalorder %s24, 1
    %p173 = scmp.ne.s32.totalorder %s168, %s170
    %p174 = scmp.eq.s32.totalorder %s24, 0
    %p175 = por %p173, %p174
    %p176 = scmp.ne.s32.totalorder %s168, %s170
    %p177 = scmp.eq.s32.totalorder %s29, 1
    %p178 = por %p176, %p177
    %p179 = scmp.ne.s32.totalorder %s170, %s171
    %p180 = scmp.eq.s32.totalorder %s29, 0
    %p181 = por %p179, %p180
    %p182 = scmp.ne.s32.totalorder %s170, %s171
    %p183 = scmp.eq.s32.totalorder %s30, 1
    %p184 = por %p182, %p183
    %p186 = scmp.ne.s32.totalorder %s171, %s185
    %p187 = scmp.eq.s32.totalorder %s30, 0
    %p188 = por %p186, %p187
    %s190 = sadd.s32 %s189, 1
    %p193 = scmp.eq.s32.totalorder %s24, 1
    %p194 = scmp.ne.s32.totalorder %s189, %s191
    %p195 = scmp.eq.s32.totalorder %s24, 0
    %p196 = por %p194, %p195
    %p197 = scmp.ne.s32.totalorder %s189, %s191
    %p198 = scmp.eq.s32.totalorder %s29, 1
    %p199 = por %p197, %p198
    %p200 = scmp.ne.s32.totalorder %s191, %s192
    %p201 = scmp.eq.s32.totalorder %s29, 0
    %p202 = por %p200, %p201
    %p203 = scmp.ne.s32.totalorder %s191, %s192
    %p204 = scmp.eq.s32.totalorder %s30, 1
    %p205 = por %p203, %p204
    %p207 = scmp.ne.s32.totalorder %s192, %s206
    %p208 = scmp.eq.s32.totalorder %s30, 0
    %p209 = por %p207, %p208
    %s211 = sadd.s32 %s210, 1
    %p214 = scmp.eq.s32.totalorder %s24, 1
    %p215 = scmp.ne.s32.totalorder %s210, %s212
    %p216 = scmp.eq.s32.totalorder %s24, 0
    %p217 = por %p215, %p216
    %p218 = scmp.ne.s32.totalorder %s210, %s212
    %p219 = scmp.eq.s32.totalorder %s29, 1
    %p220 = por %p218, %p219
    %p221 = scmp.ne.s32.totalorder %s212, %s213
    %p222 = scmp.eq.s32.totalorder %s29, 0
    %p223 = por %p221, %p222
    %p224 = scmp.ne.s32.totalorder %s212, %s213
    %p225 = scmp.eq.s32.totalorder %s30, 1
    %p226 = por %p224, %p225
    %p228 = scmp.ne.s32.totalorder %s213, %s227
    %p229 = scmp.eq.s32.totalorder %s30, 0
    %p230 = por %p228, %p229
    %s232 = sadd.s32 %s231, 1
    %p235 = scmp.eq.s32.totalorder %s24, 1
    %p236 = scmp.ne.s32.totalorder %s231, %s233
    %p237 = scmp.eq.s32.totalorder %s24, 0
    %p238 = por %p236, %p237
    %p239 = scmp.ne.s32.totalorder %s231, %s233
    %p240 = scmp.eq.s32.totalorder %s29, 1
    %p241 = por %p239, %p240
    %p242 = scmp.ne.s32.totalorder %s233, %s234
    %p243 = scmp.eq.s32.totalorder %s29, 0
    %p244 = por %p242, %p243
    %p245 = scmp.ne.s32.totalorder %s233, %s234
    %p246 = scmp.eq.s32.totalorder %s30, 1
    %p247 = por %p245, %p246
    %p249 = scmp.ne.s32.totalorder %s234, %s248
    %p250 = scmp.eq.s32.totalorder %s30, 0
    %p251 = por %p249, %p250
    %s252 = ssub.s32 %s31, %s43
    %s253 = ssub.s32 %s32, %s39
    %s254 = sor.u32 %s252, %s253
    %p255 = scmp.eq.s32.totalorder %s254, 0
    %s257 = sadd.s32 %s256, 1
    %s258 = scalar_select %p255, %s256, %s257
    %p261 = pneg %p255
    %p262 = scmp.eq.s32.totalorder %s24, 1
    %p263 = por %p261, %p262
    %p264 = scmp.ne.s32.totalorder %s256, %s259
    %p265 = scmp.eq.s32.totalorder %s24, 0
    %p266 = por %p264, %p265
    %p267 = scmp.ne.s32.totalorder %s256, %s259
    %p268 = scmp.eq.s32.totalorder %s29, 1
    %p269 = por %p267, %p268
    %p270 = scmp.ne.s32.totalorder %s259, %s260
    %p271 = scmp.eq.s32.totalorder %s29, 0
    %p272 = por %p270, %p271
    %p273 = scmp.ne.s32.totalorder %s259, %s260
    %p274 = scmp.eq.s32.totalorder %s30, 1
    %p275 = por %p273, %p274
    %p277 = scmp.ne.s32.totalorder %s260, %s276
    %p278 = scmp.eq.s32.totalorder %s30, 0
    %p279 = por %p277, %p278
    %s280 = ssub.s32 %s31, %s43
    %s281 = ssub.s32 %s32, %s39
    %s282 = sor.u32 %s280, %s281
    %p283 = scmp.eq.s32.totalorder %s282, 0
    %s285 = sadd.s32 %s284, 1
    %s286 = scalar_select %p283, %s284, %s285
    %p289 = pneg %p283
    %p290 = scmp.eq.s32.totalorder %s24, 1
    %p291 = por %p289, %p290
    %p292 = scmp.ne.s32.totalorder %s284, %s287
    %p293 = scmp.eq.s32.totalorder %s24, 0
    %p294 = por %p292, %p293
    %p295 = scmp.ne.s32.totalorder %s284, %s287
    %p296 = scmp.eq.s32.totalorder %s29, 1
    %p297 = por %p295, %p296
    %p298 = scmp.ne.s32.totalorder %s287, %s288
    %p299 = scmp.eq.s32.totalorder %s29, 0
    %p300 = por %p298, %p299
    %p301 = scmp.ne.s32.totalorder %s287, %s288
    %p302 = scmp.eq.s32.totalorder %s30, 1
    %p303 = por %p301, %p302
    %p305 = scmp.ne.s32.totalorder %s288, %s304
    %p306 = scmp.eq.s32.totalorder %s30, 0
    %p307 = por %p305, %p306
    %p308 = scmp.le.s32.totalorder 1, %s24
    %p309 = scmp.lt.s32.totalorder %s24, 3
    %p310 = pnand %p308, %p309
    %p311 = pneg %p310
    // Predicated region
    $region9: #{frontend_forward.2} parent=5 // pred_check
      _
    $region10: #{frontend_forward.2} parent=5 // pred_check_branch
      %313 = sbr.rel (%p310) target = $region12
    $region11: #{frontend_forward.2} parent=5 // pred_region
      %s314 = ssub.s32 %s24, 1
      // Predicated region
      $region13: #{frontend_forward.2} parent=11 // pred_check
        %p315 = pneg %p113
      $region14: #{frontend_forward.2} parent=11 // pred_check_branch
        %317 = sbr.rel (%p315) target = $region16
      $region15: #{frontend_forward.2} parent=11 // pred_region
        _
      $region16: #{frontend_forward.2} parent=11 // pred_fallthru
        _
      // Predicated region
      $region17: #{frontend_forward.2} parent=11 // pred_check
        %p318 = pneg %p160
      $region18: #{frontend_forward.2} parent=11 // pred_check_branch
        %320 = sbr.rel (%p318) target = $region20
      $region19: #{frontend_forward.2} parent=11 // pred_region
        _
      $region20: #{frontend_forward.2} parent=11 // pred_fallthru
        _
      // Predicated region
      $region21: #{frontend_forward.2} parent=11 // pred_check
        %p321 = pneg %p181
      $region22: #{frontend_forward.2} parent=11 // pred_check_branch
        %323 = sbr.rel (%p321) target = $region24
      $region23: #{frontend_forward.2} parent=11 // pred_region
        _
      $region24: #{frontend_forward.2} parent=11 // pred_fallthru
        _
      // Predicated region
      $region25: #{frontend_forward.2} parent=11 // pred_check
        %p324 = pneg %p202
      $region26: #{frontend_forward.2} parent=11 // pred_check_branch
        %326 = sbr.rel (%p324) target = $region28
      $region27: #{frontend_forward.2} parent=11 // pred_region
        _
      $region28: #{frontend_forward.2} parent=11 // pred_fallthru
        _
      // Predicated region
      $region29: #{frontend_forward.2} parent=11 // pred_check
        %p327 = pneg %p223
      $region30: #{frontend_forward.2} parent=11 // pred_check_branch
        %329 = sbr.rel (%p327) target = $region32
      $region31: #{frontend_forward.2} parent=11 // pred_region
        _
      $region32: #{frontend_forward.2} parent=11 // pred_fallthru
        _
      // Predicated region
      $region33: #{frontend_forward.2} parent=11 // pred_check
        %p330 = pneg %p244
      $region34: #{frontend_forward.2} parent=11 // pred_check_branch
        %332 = sbr.rel (%p330) target = $region36
      $region35: #{frontend_forward.2} parent=11 // pred_region
        _
      $region36: #{frontend_forward.2} parent=11 // pred_fallthru
        _
    $region12: #{frontend_forward.2} parent=5 // pred_fallthru
      _
    %p333 = scmp.lt.s32.totalorder %s24, 2
    // Predicated region
    $region37: #{frontend_forward.2} parent=5 // pred_check
      %p334 = pneg %p333
    $region38: #{frontend_forward.2} parent=5 // pred_check_branch
      %336 = sbr.rel (%p334) target = $region40
    $region39: #{frontend_forward.2} parent=5 // pred_region
      // Predicated region
      $region41: #{frontend_forward.2} parent=39 // pred_check
        %p337 = pneg %p58
      $region42: #{frontend_forward.2} parent=39 // pred_check_branch
        %339 = sbr.rel (%p337) target = $region44
      $region43: #{frontend_forward.2} parent=39 // pred_region
        %s340 = smul.u32 32, %s32
        %p341 = scmp.lt.s32.totalorder %s31, 1
        %s342 = scalar_select %p341, %s31, 1
        %p343 = scmp.lt.s32.totalorder %s340, 31
        %s344 = scalar_select %p343, %s340, 31
        %s345 = smul.addr %s342, 32
        %s346 = sadd.s32 %s344, %s345
        %s347 = smul.addr %s346, 8
        %s348 = scalar_lea.vmem %s1, %s347
        %s349 = smul.u32 32, %s32
      $region44: #{frontend_forward.2} parent=39 // pred_fallthru
        _
      // Predicated region
      $region45: #{frontend_forward.2} parent=39 // pred_check
        %p350 = pneg %p86
      $region46: #{frontend_forward.2} parent=39 // pred_check_branch
        %352 = sbr.rel (%p350) target = $region48
      $region47: #{frontend_forward.2} parent=39 // pred_region
        %s353 = smul.u32 32, %s32
        %p354 = scmp.lt.s32.totalorder %s31, 1
        %s355 = scalar_select %p354, %s31, 1
        %p356 = scmp.lt.s32.totalorder %s353, 31
        %s357 = scalar_select %p356, %s353, 31
        %s358 = smul.addr %s355, 32
        %s359 = sadd.s32 %s357, %s358
        %s360 = smul.addr %s359, 8
        %s361 = scalar_lea.vmem %s2, %s360
        %s362 = smul.u32 32, %s32
      $region48: #{frontend_forward.2} parent=39 // pred_fallthru
        _
      // Predicated region
      $region49: #{frontend_forward.2} parent=39 // pred_check
        %p363 = pneg %p133
      $region50: #{frontend_forward.2} parent=39 // pred_check_branch
        %365 = sbr.rel (%p363) target = $region52
      $region51: #{frontend_forward.2} parent=39 // pred_region
        %p366 = scmp.lt.s32.totalorder %s31, 1
        %s367 = scalar_select %p366, %s31, 1
        %s368 = smul.addr %s367, 32
        %s369 = smul.addr %s368, 8
        %s370 = scalar_lea.vmem %s4, %s369
      $region52: #{frontend_forward.2} parent=39 // pred_fallthru
        _
    $region40: #{frontend_forward.2} parent=5 // pred_fallthru
      _
    %p371 = scmp.le.s32.totalorder 1, %s24
    %p372 = scmp.lt.s32.totalorder %s24, 3
    %p373 = pnand %p371, %p372
    %p374 = pneg %p373
    // Predicated region
    $region53: #{frontend_forward.2} parent=5 // pred_check
      _
    $region54: #{frontend_forward.2} parent=5 // pred_check_branch
      %376 = sbr.rel (%p373) target = $region56
    $region55: #{frontend_forward.2} parent=5 // pred_region
      %s377 = ssub.s32 %s24, 1
      %s378 = smul.u32 32, %s34
      %p379 = scmp.lt.s32.totalorder %s33, 1
      %s380 = scalar_select %p379, %s33, 1
      %p381 = scmp.lt.s32.totalorder %s378, 31
      %s382 = scalar_select %p381, %s378, 31
      %s383 = smul.addr %s380, 32
      %s384 = sadd.s32 %s382, %s383
      %s385 = smul.addr %s384, 8
      %s386 = scalar_lea.vmem %s1, %s385
      %p387 = pneg %p64
      %p388 = pneg %p61
      %s389 = smul.u32 32, %s34
      %p390 = scmp.lt.s32.totalorder %s33, 1
      %s391 = scalar_select %p390, %s33, 1
      %p392 = scmp.lt.s32.totalorder %s389, 31
      %s393 = scalar_select %p392, %s389, 31
      %s394 = smul.addr %s391, 32
      %s395 = sadd.s32 %s393, %s394
      %s396 = smul.addr %s395, 8
      %s397 = scalar_lea.vmem %s2, %s396
      %p398 = pneg %p92
      %p399 = pneg %p89
      %p400 = pneg %p113
      %p401 = pneg %p110
      %p402 = scmp.lt.s32.totalorder %s33, 1
      %s403 = scalar_select %p402, %s33, 1
      %s404 = smul.addr %s403, 32
      %s405 = smul.addr %s404, 8
      %s406 = scalar_lea.vmem %s4, %s405
      %p407 = pneg %p139
      %p408 = pneg %p136
      %p409 = pneg %p160
      %p410 = pneg %p157
      %p411 = pneg %p181
      %p412 = pneg %p178
      %p413 = pneg %p202
      %p414 = pneg %p199
      %p415 = pneg %p223
      %p416 = pneg %p220
      %p417 = pneg %p244
      %p418 = pneg %p241
      %p419 = pneg %p272
      %p420 = pneg %p269
      %s421 = smul.u32 32, %s34
      %p422 = scmp.lt.s32.totalorder %s33, 1
      %s423 = scalar_select %p422, %s33, 1
      %p424 = scmp.lt.s32.totalorder %s421, 31
      %s425 = scalar_select %p424, %s421, 31
      %s426 = smul.addr %s425, 2
      %s427 = smul.addr %s423, 64
      %s428 = sadd.s32 %s426, %s427
      %s429 = smul.addr %s428, 4
      %s430 = scalar_lea.vmem %s10, %s429
      %p431 = pneg %p300
      %p432 = pneg %p297
      %s433 = smul.u32 32, %s34
      %p434 = scmp.lt.s32.totalorder %s33, 1
      %s435 = scalar_select %p434, %s33, 1
      %p436 = scmp.lt.s32.totalorder %s433, 31
      %s437 = scalar_select %p436, %s433, 31
      %s438 = smul.addr %s435, 32
      %s439 = sadd.s32 %s437, %s438
      %s440 = smul.addr %s439, 8
      %s441 = scalar_lea.vmem %s11, %s440
      %s442 = smul.u32 32, %s34
      %p443 = scmp.lt.s32.totalorder %s33, 1
      %s444 = scalar_select %p443, %s33, 1
      %p445 = scmp.lt.s32.totalorder %s442, 31
      %s446 = scalar_select %p445, %s442, 31
      %s447 = smul.addr %s444, 32
      %s448 = sadd.s32 %s446, %s447
      %s449 = smul.addr %s448, 8
      %s450 = scalar_lea.vmem %s1, %s449
      %s451 = smul.u32 32, %s34
      %s452 = smul.u32 32, %s34
      %p453 = scmp.lt.s32.totalorder %s33, 1
      %s454 = scalar_select %p453, %s33, 1
      %p455 = scmp.lt.s32.totalorder %s452, 31
      %s456 = scalar_select %p455, %s452, 31
      %s457 = smul.addr %s454, 32
      %s458 = sadd.s32 %s456, %s457
      %s459 = smul.addr %s458, 8
      %s460 = scalar_lea.vmem %s2, %s459
      %s461 = smul.u32 32, %s34
      %p462 = scmp.lt.s32.totalorder %s33, 1
      %s463 = scalar_select %p462, %s33, 1
      %s464 = smul.addr %s463, 32
      %s465 = smul.addr %s464, 8
      %s466 = scalar_lea.vmem %s4, %s465
      %s467 = smul.u32 32, %s34
      %p468 = scmp.lt.s32.totalorder %s33, 1
      %s469 = scalar_select %p468, %s33, 1
      %p470 = scmp.lt.s32.totalorder %s467, 31
      %s471 = scalar_select %p470, %s467, 31
      %s472 = smul.addr %s471, 2
      %s473 = smul.addr %s469, 64
      %s474 = sadd.s32 %s472, %s473
      %s475 = smul.addr %s474, 4
      %s476 = scalar_lea.vmem %s10, %s475
      %s477 = smul.u32 32, %s34
      %s478 = smul.u32 32, %s34
      %p479 = scmp.lt.s32.totalorder %s33, 1
      %s480 = scalar_select %p479, %s33, 1
      %p481 = scmp.lt.s32.totalorder %s478, 31
      %s482 = scalar_select %p481, %s478, 31
      %s483 = smul.addr %s480, 32
      %s484 = sadd.s32 %s482, %s483
      %s485 = smul.addr %s484, 8
      %s486 = scalar_lea.vmem %s11, %s485
      %s487 = smul.u32 32, %s34
      %v489 = vld [vmem:[%s460] sm:$0xff]
      %v490 = vld [vmem:[%s460 + $0x8] sm:$0xff]
      %v491 = vld [vmem:[%s460 + $0x10] sm:$0xff]
      %v492 = vld [vmem:[%s460 + $0x18] sm:$0xff]
      %v493 = vld [vmem:[%s460 + $0x20] sm:$0xff]
      %v494 = vld [vmem:[%s460 + $0x28] sm:$0xff]
      %v495 = vld [vmem:[%s460 + $0x30] sm:$0xff]
      %v496 = vld [vmem:[%s460 + $0x38] sm:$0xff]
      %v497 = vld [vmem:[%s460 + $0x40] sm:$0xff]
      %v498 = vld [vmem:[%s460 + $0x48] sm:$0xff]
      %v499 = vld [vmem:[%s460 + $0x50] sm:$0xff]
      %v500 = vld [vmem:[%s460 + $0x58] sm:$0xff]
      %v501 = vld [vmem:[%s460 + $0x60] sm:$0xff]
      %v502 = vld [vmem:[%s460 + $0x68] sm:$0xff]
      %v503 = vld [vmem:[%s460 + $0x70] sm:$0xff]
      %v504 = vld [vmem:[%s460 + $0x78] sm:$0xff]
      %v505 = vld [vmem:[%s460 + $0x80] sm:$0xff]
      %v506 = vld [vmem:[%s460 + $0x88] sm:$0xff]
      %v507 = vld [vmem:[%s460 + $0x90] sm:$0xff]
      %v508 = vld [vmem:[%s460 + $0x98] sm:$0xff]
      %v509 = vld [vmem:[%s460 + $0xa0] sm:$0xff]
      %v510 = vld [vmem:[%s460 + $0xa8] sm:$0xff]
      %v511 = vld [vmem:[%s460 + $0xb0] sm:$0xff]
      %v512 = vld [vmem:[%s460 + $0xb8] sm:$0xff]
      %v513 = vld [vmem:[%s460 + $0xc0] sm:$0xff]
      %v514 = vld [vmem:[%s460 + $0xc8] sm:$0xff]
      %v515 = vld [vmem:[%s460 + $0xd0] sm:$0xff]
      %v516 = vld [vmem:[%s460 + $0xd8] sm:$0xff]
      %v517 = vld [vmem:[%s460 + $0xe0] sm:$0xff]
      %v518 = vld [vmem:[%s460 + $0xe8] sm:$0xff]
      %v519 = vld [vmem:[%s460 + $0xf0] sm:$0xff]
      %v520 = vld [vmem:[%s460 + $0xf8] sm:$0xff]
      %v521 = vld [vmem:[%s450] sm:$0xff]
      %v522 = vld [vmem:[%s450 + $0x8] sm:$0xff]
      %v523 = vld [vmem:[%s450 + $0x10] sm:$0xff]
      %v524 = vld [vmem:[%s450 + $0x18] sm:$0xff]
      %v525 = vld [vmem:[%s450 + $0x20] sm:$0xff]
      %v526 = vld [vmem:[%s450 + $0x28] sm:$0xff]
      %v527 = vld [vmem:[%s450 + $0x30] sm:$0xff]
      %v528 = vld [vmem:[%s450 + $0x38] sm:$0xff]
      %v529 = vld [vmem:[%s450 + $0x40] sm:$0xff]
      %v530 = vld [vmem:[%s450 + $0x48] sm:$0xff]
      %v531 = vld [vmem:[%s450 + $0x50] sm:$0xff]
      %v532 = vld [vmem:[%s450 + $0x58] sm:$0xff]
      %v533 = vld [vmem:[%s450 + $0x60] sm:$0xff]
      %v534 = vld [vmem:[%s450 + $0x68] sm:$0xff]
      %v535 = vld [vmem:[%s450 + $0x70] sm:$0xff]
      %v536 = vld [vmem:[%s450 + $0x78] sm:$0xff]
      %v537 = vld [vmem:[%s450 + $0x80] sm:$0xff]
      %v538 = vld [vmem:[%s450 + $0x88] sm:$0xff]
      %v539 = vld [vmem:[%s450 + $0x90] sm:$0xff]
      %v540 = vld [vmem:[%s450 + $0x98] sm:$0xff]
      %v541 = vld [vmem:[%s450 + $0xa0] sm:$0xff]
      %v542 = vld [vmem:[%s450 + $0xa8] sm:$0xff]
      %v543 = vld [vmem:[%s450 + $0xb0] sm:$0xff]
      %v544 = vld [vmem:[%s450 + $0xb8] sm:$0xff]
      %v545 = vld [vmem:[%s450 + $0xc0] sm:$0xff]
      %v546 = vld [vmem:[%s450 + $0xc8] sm:$0xff]
      %v547 = vld [vmem:[%s450 + $0xd0] sm:$0xff]
      %v548 = vld [vmem:[%s450 + $0xd8] sm:$0xff]
      %v549 = vld [vmem:[%s450 + $0xe0] sm:$0xff]
      %v550 = vld [vmem:[%s450 + $0xe8] sm:$0xff]
      %v551 = vld [vmem:[%s450 + $0xf0] sm:$0xff]
      %v552 = vld [vmem:[%s450 + $0xf8] sm:$0xff]
      %v553 = vld [vmem:[%s466] sm:$0xff]
      %v554 = vld [vmem:[%s466 + $0x8] sm:$0xff]
      %v555 = vld [vmem:[%s466 + $0x10] sm:$0xff]
      %v556 = vld [vmem:[%s466 + $0x18] sm:$0xff]
      %v557 = vld [vmem:[%s466 + $0x20] sm:$0xff]
      %v558 = vld [vmem:[%s466 + $0x28] sm:$0xff]
      %v559 = vld [vmem:[%s466 + $0x30] sm:$0xff]
      %v560 = vld [vmem:[%s466 + $0x38] sm:$0xff]
      %v561 = vld [vmem:[%s466 + $0x40] sm:$0xff]
      %v562 = vld [vmem:[%s466 + $0x48] sm:$0xff]
      %v563 = vld [vmem:[%s466 + $0x50] sm:$0xff]
      %v564 = vld [vmem:[%s466 + $0x58] sm:$0xff]
      %v565 = vld [vmem:[%s466 + $0x60] sm:$0xff]
      %v566 = vld [vmem:[%s466 + $0x68] sm:$0xff]
      %v567 = vld [vmem:[%s466 + $0x70] sm:$0xff]
      %v568 = vld [vmem:[%s466 + $0x78] sm:$0xff]
      %v569 = vld [vmem:[%s466 + $0x80] sm:$0xff]
      %v570 = vld [vmem:[%s466 + $0x88] sm:$0xff]
      %v571 = vld [vmem:[%s466 + $0x90] sm:$0xff]
      %v572 = vld [vmem:[%s466 + $0x98] sm:$0xff]
      %v573 = vld [vmem:[%s466 + $0xa0] sm:$0xff]
      %v574 = vld [vmem:[%s466 + $0xa8] sm:$0xff]
      %v575 = vld [vmem:[%s466 + $0xb0] sm:$0xff]
      %v576 = vld [vmem:[%s466 + $0xb8] sm:$0xff]
      %v577 = vld [vmem:[%s466 + $0xc0] sm:$0xff]
      %v578 = vld [vmem:[%s466 + $0xc8] sm:$0xff]
      %v579 = vld [vmem:[%s466 + $0xd0] sm:$0xff]
      %v580 = vld [vmem:[%s466 + $0xd8] sm:$0xff]
      %v581 = vld [vmem:[%s466 + $0xe0] sm:$0xff]
      %v582 = vld [vmem:[%s466 + $0xe8] sm:$0xff]
      %v583 = vld [vmem:[%s466 + $0xf0] sm:$0xff]
      %v584 = vld [vmem:[%s466 + $0xf8] sm:$0xff]
      %v585 = vld [vmem:[%s3] sm:$0x1]
      %v586 = vld [vmem:[%s5] sm:$0xf]
      %s587 = smul.u32 %s33, 2
      %s588 = sld [smem:[#allocation3 + %s587]]
      %v589 = vlaneseq
      %v590 = vshrl.u32 %v589, 7
      %v591 = vadd.s32 %v590, 8
      %v592 = vadd.s32 %v590, 16
      %v593 = vadd.s32 %v590, 24
      %v594 = vadd.s32 %v590, 32
      %v595 = vadd.s32 %v590, 40
      %v596 = vadd.s32 %v590, 48
      %v597 = vadd.s32 %v590, 56
      %v598 = vadd.s32 %v590, 64
      %v599 = vadd.s32 %v590, 72
      %v600 = vadd.s32 %v590, 80
      %v601 = vadd.s32 %v590, 88
      %v602 = vadd.s32 %v590, 96
      %v603 = vadd.s32 %v590, 104
      %v604 = vadd.s32 %v590, 112
      %v605 = vadd.s32 %v590, 120
      %v606 = vadd.s32 %v590, 128
      %v607 = vadd.s32 %v590, 136
      %v608 = vadd.s32 %v590, 144
      %v609 = vadd.s32 %v590, 152
      %v610 = vadd.s32 %v590, 160
      %v611 = vadd.s32 %v590, 168
      %v612 = vadd.s32 %v590, 176
      %v613 = vadd.s32 %v590, 184
      %v614 = vadd.s32 %v590, 192
      %v615 = vadd.s32 %v590, 200
      %v616 = vadd.s32 %v590, 208
      %v617 = vadd.s32 %v590, 216
      %v618 = vadd.s32 %v590, 224
      %v619 = vadd.s32 %v590, 232
      %v620 = vadd.s32 %v590, 240
      %v621 = vadd.s32 %v590, 248
      %s622 = smul.u32 %s34, 256
      %v623 = vstv %s622
      %v624 = vadd.s32 %v590, %v623
      %v625 = vadd.s32 %v591, %v623
      %v626 = vadd.s32 %v592, %v623
      %v627 = vadd.s32 %v593, %v623
      %v628 = vadd.s32 %v594, %v623
      %v629 = vadd.s32 %v595, %v623
      %v630 = vadd.s32 %v596, %v623
      %v631 = vadd.s32 %v597, %v623
      %v632 = vadd.s32 %v598, %v623
      %v633 = vadd.s32 %v599, %v623
      %v634 = vadd.s32 %v600, %v623
      %v635 = vadd.s32 %v601, %v623
      %v636 = vadd.s32 %v602, %v623
      %v637 = vadd.s32 %v603, %v623
      %v638 = vadd.s32 %v604, %v623
      %v639 = vadd.s32 %v605, %v623
      %v640 = vadd.s32 %v606, %v623
      %v641 = vadd.s32 %v607, %v623
      %v642 = vadd.s32 %v608, %v623
      %v643 = vadd.s32 %v609, %v623
      %v644 = vadd.s32 %v610, %v623
      %v645 = vadd.s32 %v611, %v623
      %v646 = vadd.s32 %v612, %v623
      %v647 = vadd.s32 %v613, %v623
      %v648 = vadd.s32 %v614, %v623
      %v649 = vadd.s32 %v615, %v623
      %v650 = vadd.s32 %v616, %v623
      %v651 = vadd.s32 %v617, %v623
      %v652 = vadd.s32 %v618, %v623
      %v653 = vadd.s32 %v619, %v623
      %v654 = vadd.s32 %v620, %v623
      %v655 = vadd.s32 %v621, %v623
      %v656 = vstv %s588
      %vm657 = vcmp.ge.s32.totalorder %v624, %v656
      %vm658 = vcmp.ge.s32.totalorder %v625, %v656
      %vm659 = vcmp.ge.s32.totalorder %v626, %v656
      %vm660 = vcmp.ge.s32.totalorder %v627, %v656
      %vm661 = vcmp.ge.s32.totalorder %v628, %v656
      %vm662 = vcmp.ge.s32.totalorder %v629, %v656
      %vm663 = vcmp.ge.s32.totalorder %v630, %v656
      %vm664 = vcmp.ge.s32.totalorder %v631, %v656
      %vm665 = vcmp.ge.s32.totalorder %v632, %v656
      %vm666 = vcmp.ge.s32.totalorder %v633, %v656
      %vm667 = vcmp.ge.s32.totalorder %v634, %v656
      %vm668 = vcmp.ge.s32.totalorder %v635, %v656
      %vm669 = vcmp.ge.s32.totalorder %v636, %v656
      %vm670 = vcmp.ge.s32.totalorder %v637, %v656
      %vm671 = vcmp.ge.s32.totalorder %v638, %v656
      %vm672 = vcmp.ge.s32.totalorder %v639, %v656
      %vm673 = vcmp.ge.s32.totalorder %v640, %v656
      %vm674 = vcmp.ge.s32.totalorder %v641, %v656
      %vm675 = vcmp.ge.s32.totalorder %v642, %v656
      %vm676 = vcmp.ge.s32.totalorder %v643, %v656
      %vm677 = vcmp.ge.s32.totalorder %v644, %v656
      %vm678 = vcmp.ge.s32.totalorder %v645, %v656
      %vm679 = vcmp.ge.s32.totalorder %v646, %v656
      %vm680 = vcmp.ge.s32.totalorder %v647, %v656
      %vm681 = vcmp.ge.s32.totalorder %v648, %v656
      %vm682 = vcmp.ge.s32.totalorder %v649, %v656
      %vm683 = vcmp.ge.s32.totalorder %v650, %v656
      %vm684 = vcmp.ge.s32.totalorder %v651, %v656
      %vm685 = vcmp.ge.s32.totalorder %v652, %v656
      %vm686 = vcmp.ge.s32.totalorder %v653, %v656
      %vm687 = vcmp.ge.s32.totalorder %v654, %v656
      %vm688 = vcmp.ge.s32.totalorder %v655, %v656
      %v689 = vlaneseq
      %v690 = vand.u32 %v689, 127
      %v691 = vadd.s32 %v690, 128
      %v692 = vcvt.s32.f32 %v690
      %v693 = vcvt.s32.f32 %v691
      %695 = vset.pattern.permute.xlu0 0
      %696 = vperm.xlu0 %695, %v521
      %v697 = vpop.permute.xlu0 %696
      %700 = vset.pattern.permute.xlu0 0
      %701 = vperm.xlu0 %700, %v522
      %v702 = vpop.permute.xlu0 %701
      %705 = vset.pattern.permute.xlu0 0
      %706 = vperm.xlu0 %705, %v523
      %v707 = vpop.permute.xlu0 %706
      %710 = vset.pattern.permute.xlu0 0
      %711 = vperm.xlu0 %710, %v524
      %v712 = vpop.permute.xlu0 %711
      %715 = vset.pattern.permute.xlu0 0
      %716 = vperm.xlu0 %715, %v525
      %v717 = vpop.permute.xlu0 %716
      %720 = vset.pattern.permute.xlu0 0
      %721 = vperm.xlu0 %720, %v526
      %v722 = vpop.permute.xlu0 %721
      %725 = vset.pattern.permute.xlu0 0
      %726 = vperm.xlu0 %725, %v527
      %v727 = vpop.permute.xlu0 %726
      %730 = vset.pattern.permute.xlu0 0
      %731 = vperm.xlu0 %730, %v528
      %v732 = vpop.permute.xlu0 %731
      %735 = vset.pattern.permute.xlu0 0
      %736 = vperm.xlu0 %735, %v529
      %v737 = vpop.permute.xlu0 %736
      %740 = vset.pattern.permute.xlu0 0
      %741 = vperm.xlu0 %740, %v530
      %v742 = vpop.permute.xlu0 %741
      %745 = vset.pattern.permute.xlu0 0
      %746 = vperm.xlu0 %745, %v531
      %v747 = vpop.permute.xlu0 %746
      %750 = vset.pattern.permute.xlu0 0
      %751 = vperm.xlu0 %750, %v532
      %v752 = vpop.permute.xlu0 %751
      %755 = vset.pattern.permute.xlu0 0
      %756 = vperm.xlu0 %755, %v533
      %v757 = vpop.permute.xlu0 %756
      %760 = vset.pattern.permute.xlu0 0
      %761 = vperm.xlu0 %760, %v534
      %v762 = vpop.permute.xlu0 %761
      %765 = vset.pattern.permute.xlu0 0
      %766 = vperm.xlu0 %765, %v535
      %v767 = vpop.permute.xlu0 %766
      %770 = vset.pattern.permute.xlu0 0
      %771 = vperm.xlu0 %770, %v536
      %v772 = vpop.permute.xlu0 %771
      %775 = vset.pattern.permute.xlu0 0
      %776 = vperm.xlu0 %775, %v537
      %v777 = vpop.permute.xlu0 %776
      %780 = vset.pattern.permute.xlu0 0
      %781 = vperm.xlu0 %780, %v538
      %v782 = vpop.permute.xlu0 %781
      %785 = vset.pattern.permute.xlu0 0
      %786 = vperm.xlu0 %785, %v539
      %v787 = vpop.permute.xlu0 %786
      %790 = vset.pattern.permute.xlu0 0
      %791 = vperm.xlu0 %790, %v540
      %v792 = vpop.permute.xlu0 %791
      %795 = vset.pattern.permute.xlu0 0
      %796 = vperm.xlu0 %795, %v541
      %v797 = vpop.permute.xlu0 %796
      %800 = vset.pattern.permute.xlu0 0
      %801 = vperm.xlu0 %800, %v542
      %v802 = vpop.permute.xlu0 %801
      %805 = vset.pattern.permute.xlu0 0
      %806 = vperm.xlu0 %805, %v543
      %v807 = vpop.permute.xlu0 %806
      %810 = vset.pattern.permute.xlu0 0
      %811 = vperm.xlu0 %810, %v544
      %v812 = vpop.permute.xlu0 %811
      %815 = vset.pattern.permute.xlu0 0
      %816 = vperm.xlu0 %815, %v545
      %v817 = vpop.permute.xlu0 %816
      %820 = vset.pattern.permute.xlu0 0
      %821 = vperm.xlu0 %820, %v546
      %v822 = vpop.permute.xlu0 %821
      %825 = vset.pattern.permute.xlu0 0
      %826 = vperm.xlu0 %825, %v547
      %v827 = vpop.permute.xlu0 %826
      %830 = vset.pattern.permute.xlu0 0
      %831 = vperm.xlu0 %830, %v548
      %v832 = vpop.permute.xlu0 %831
      %835 = vset.pattern.permute.xlu0 0
      %836 = vperm.xlu0 %835, %v549
      %v837 = vpop.permute.xlu0 %836
      %840 = vset.pattern.permute.xlu0 0
      %841 = vperm.xlu0 %840, %v550
      %v842 = vpop.permute.xlu0 %841
      %845 = vset.pattern.permute.xlu0 0
      %846 = vperm.xlu0 %845, %v551
      %v847 = vpop.permute.xlu0 %846
      %850 = vset.pattern.permute.xlu0 0
      %851 = vperm.xlu0 %850, %v552
      %v852 = vpop.permute.xlu0 %851
      %vm854 = vcmp.ge.f32.partialorder %v692, %v697
      %vm855 = vcmp.ge.f32.partialorder %v693, %v697
      %vm856 = vcmp.ge.f32.partialorder %v692, %v702
      %vm857 = vcmp.ge.f32.partialorder %v693, %v702
      %vm858 = vcmp.ge.f32.partialorder %v692, %v707
      %vm859 = vcmp.ge.f32.partialorder %v693, %v707
      %vm860 = vcmp.ge.f32.partialorder %v692, %v712
      %vm861 = vcmp.ge.f32.partialorder %v693, %v712
      %vm862 = vcmp.ge.f32.partialorder %v692, %v717
      %vm863 = vcmp.ge.f32.partialorder %v693, %v717
      %vm864 = vcmp.ge.f32.partialorder %v692, %v722
      %vm865 = vcmp.ge.f32.partialorder %v693, %v722
      %vm866 = vcmp.ge.f32.partialorder %v692, %v727
      %vm867 = vcmp.ge.f32.partialorder %v693, %v727
      %vm868 = vcmp.ge.f32.partialorder %v692, %v732
      %vm869 = vcmp.ge.f32.partialorder %v693, %v732
      %vm870 = vcmp.ge.f32.partialorder %v692, %v737
      %vm871 = vcmp.ge.f32.partialorder %v693, %v737
      %vm872 = vcmp.ge.f32.partialorder %v692, %v742
      %vm873 = vcmp.ge.f32.partialorder %v693, %v742
      %vm874 = vcmp.ge.f32.partialorder %v692, %v747
      %vm875 = vcmp.ge.f32.partialorder %v693, %v747
      %vm876 = vcmp.ge.f32.partialorder %v692, %v752
      %vm877 = vcmp.ge.f32.partialorder %v693, %v752
      %vm878 = vcmp.ge.f32.partialorder %v692, %v757
      %vm879 = vcmp.ge.f32.partialorder %v693, %v757
      %vm880 = vcmp.ge.f32.partialorder %v692, %v762
      %vm881 = vcmp.ge.f32.partialorder %v693, %v762
      %vm882 = vcmp.ge.f32.partialorder %v692, %v767
      %vm883 = vcmp.ge.f32.partialorder %v693, %v767
      %vm884 = vcmp.ge.f32.partialorder %v692, %v772
      %vm885 = vcmp.ge.f32.partialorder %v693, %v772
      %vm886 = vcmp.ge.f32.partialorder %v692, %v777
      %vm887 = vcmp.ge.f32.partialorder %v693, %v777
      %vm888 = vcmp.ge.f32.partialorder %v692, %v782
      %vm889 = vcmp.ge.f32.partialorder %v693, %v782
      %vm890 = vcmp.ge.f32.partialorder %v692, %v787
      %vm891 = vcmp.ge.f32.partialorder %v693, %v787
      %vm892 = vcmp.ge.f32.partialorder %v692, %v792
      %vm893 = vcmp.ge.f32.partialorder %v693, %v792
      %vm894 = vcmp.ge.f32.partialorder %v692, %v797
      %vm895 = vcmp.ge.f32.partialorder %v693, %v797
      %vm896 = vcmp.ge.f32.partialorder %v692, %v802
      %vm897 = vcmp.ge.f32.partialorder %v693, %v802
      %vm898 = vcmp.ge.f32.partialorder %v692, %v807
      %vm899 = vcmp.ge.f32.partialorder %v693, %v807
      %vm900 = vcmp.ge.f32.partialorder %v692, %v812
      %vm901 = vcmp.ge.f32.partialorder %v693, %v812
      %vm902 = vcmp.ge.f32.partialorder %v692, %v817
      %vm903 = vcmp.ge.f32.partialorder %v693, %v817
      %vm904 = vcmp.ge.f32.partialorder %v692, %v822
      %vm905 = vcmp.ge.f32.partialorder %v693, %v822
      %vm906 = vcmp.ge.f32.partialorder %v692, %v827
      %vm907 = vcmp.ge.f32.partialorder %v693, %v827
      %vm908 = vcmp.ge.f32.partialorder %v692, %v832
      %vm909 = vcmp.ge.f32.partialorder %v693, %v832
      %vm910 = vcmp.ge.f32.partialorder %v692, %v837
      %vm911 = vcmp.ge.f32.partialorder %v693, %v837
      %vm912 = vcmp.ge.f32.partialorder %v692, %v842
      %vm913 = vcmp.ge.f32.partialorder %v693, %v842
      %vm914 = vcmp.ge.f32.partialorder %v692, %v847
      %vm915 = vcmp.ge.f32.partialorder %v693, %v847
      %vm916 = vcmp.ge.f32.partialorder %v692, %v852
      %vm917 = vcmp.ge.f32.partialorder %v693, %v852
      %918 = vset.pattern.permute.xlu0 1
      %919 = vperm.xlu0 %918, %v521
      %v920 = vpop.permute.xlu0 %919
      %922 = vset.pattern.permute.xlu0 1
      %923 = vperm.xlu0 %922, %v522
      %v924 = vpop.permute.xlu0 %923
      %926 = vset.pattern.permute.xlu0 1
      %927 = vperm.xlu0 %926, %v523
      %v928 = vpop.permute.xlu0 %927
      %930 = vset.pattern.permute.xlu0 1
      %931 = vperm.xlu0 %930, %v524
      %v932 = vpop.permute.xlu0 %931
      %934 = vset.pattern.permute.xlu0 1
      %935 = vperm.xlu0 %934, %v525
      %v936 = vpop.permute.xlu0 %935
      %938 = vset.pattern.permute.xlu0 1
      %939 = vperm.xlu0 %938, %v526
      %v940 = vpop.permute.xlu0 %939
      %942 = vset.pattern.permute.xlu0 1
      %943 = vperm.xlu0 %942, %v527
      %v944 = vpop.permute.xlu0 %943
      %946 = vset.pattern.permute.xlu0 1
      %947 = vperm.xlu0 %946, %v528
      %v948 = vpop.permute.xlu0 %947
      %950 = vset.pattern.permute.xlu0 1
      %951 = vperm.xlu0 %950, %v529
      %v952 = vpop.permute.xlu0 %951
      %954 = vset.pattern.permute.xlu0 1
      %955 = vperm.xlu0 %954, %v530
      %v956 = vpop.permute.xlu0 %955
      %958 = vset.pattern.permute.xlu0 1
      %959 = vperm.xlu0 %958, %v531
      %v960 = vpop.permute.xlu0 %959
      %962 = vset.pattern.permute.xlu0 1
      %963 = vperm.xlu0 %962, %v532
      %v964 = vpop.permute.xlu0 %963
      %966 = vset.pattern.permute.xlu0 1
      %967 = vperm.xlu0 %966, %v533
      %v968 = vpop.permute.xlu0 %967
      %970 = vset.pattern.permute.xlu0 1
      %971 = vperm.xlu0 %970, %v534
      %v972 = vpop.permute.xlu0 %971
      %974 = vset.pattern.permute.xlu0 1
      %975 = vperm.xlu0 %974, %v535
      %v976 = vpop.permute.xlu0 %975
      %978 = vset.pattern.permute.xlu0 1
      %979 = vperm.xlu0 %978, %v536
      %v980 = vpop.permute.xlu0 %979
      %982 = vset.pattern.permute.xlu0 1
      %983 = vperm.xlu0 %982, %v537
      %v984 = vpop.permute.xlu0 %983
      %986 = vset.pattern.permute.xlu0 1
      %987 = vperm.xlu0 %986, %v538
      %v988 = vpop.permute.xlu0 %987
      %990 = vset.pattern.permute.xlu0 1
      %991 = vperm.xlu0 %990, %v539
      %v992 = vpop.permute.xlu0 %991
      %994 = vset.pattern.permute.xlu0 1
      %995 = vperm.xlu0 %994, %v540
      %v996 = vpop.permute.xlu0 %995
      %998 = vset.pattern.permute.xlu0 1
      %999 = vperm.xlu0 %998, %v541
      %v1000 = vpop.permute.xlu0 %999
      %1002 = vset.pattern.permute.xlu0 1
      %1003 = vperm.xlu0 %1002, %v542
      %v1004 = vpop.permute.xlu0 %1003
      %1006 = vset.pattern.permute.xlu0 1
      %1007 = vperm.xlu0 %1006, %v543
      %v1008 = vpop.permute.xlu0 %1007
      %1010 = vset.pattern.permute.xlu0 1
      %1011 = vperm.xlu0 %1010, %v544
      %v1012 = vpop.permute.xlu0 %1011
      %1014 = vset.pattern.permute.xlu0 1
      %1015 = vperm.xlu0 %1014, %v545
      %v1016 = vpop.permute.xlu0 %1015
      %1018 = vset.pattern.permute.xlu0 1
      %1019 = vperm.xlu0 %1018, %v546
      %v1020 = vpop.permute.xlu0 %1019
      %1022 = vset.pattern.permute.xlu0 1
      %1023 = vperm.xlu0 %1022, %v547
      %v1024 = vpop.permute.xlu0 %1023
      %1026 = vset.pattern.permute.xlu0 1
      %1027 = vperm.xlu0 %1026, %v548
      %v1028 = vpop.permute.xlu0 %1027
      %1030 = vset.pattern.permute.xlu0 1
      %1031 = vperm.xlu0 %1030, %v549
      %v1032 = vpop.permute.xlu0 %1031
      %1034 = vset.pattern.permute.xlu0 1
      %1035 = vperm.xlu0 %1034, %v550
      %v1036 = vpop.permute.xlu0 %1035
      %1038 = vset.pattern.permute.xlu0 1
      %1039 = vperm.xlu0 %1038, %v551
      %v1040 = vpop.permute.xlu0 %1039
      %1042 = vset.pattern.permute.xlu0 1
      %1043 = vperm.xlu0 %1042, %v552
      %v1044 = vpop.permute.xlu0 %1043
      %vm1046 = vcmp.lt.f32.partialorder %v692, %v920
      %vm1047 = vcmp.lt.f32.partialorder %v693, %v920
      %vm1048 = vcmp.lt.f32.partialorder %v692, %v924
      %vm1049 = vcmp.lt.f32.partialorder %v693, %v924
      %vm1050 = vcmp.lt.f32.partialorder %v692, %v928
      %vm1051 = vcmp.lt.f32.partialorder %v693, %v928
      %vm1052 = vcmp.lt.f32.partialorder %v692, %v932
      %vm1053 = vcmp.lt.f32.partialorder %v693, %v932
      %vm1054 = vcmp.lt.f32.partialorder %v692, %v936
      %vm1055 = vcmp.lt.f32.partialorder %v693, %v936
      %vm1056 = vcmp.lt.f32.partialorder %v692, %v940
      %vm1057 = vcmp.lt.f32.partialorder %v693, %v940
      %vm1058 = vcmp.lt.f32.partialorder %v692, %v944
      %vm1059 = vcmp.lt.f32.partialorder %v693, %v944
      %vm1060 = vcmp.lt.f32.partialorder %v692, %v948
      %vm1061 = vcmp.lt.f32.partialorder %v693, %v948
      %vm1062 = vcmp.lt.f32.partialorder %v692, %v952
      %vm1063 = vcmp.lt.f32.partialorder %v693, %v952
      %vm1064 = vcmp.lt.f32.partialorder %v692, %v956
      %vm1065 = vcmp.lt.f32.partialorder %v693, %v956
      %vm1066 = vcmp.lt.f32.partialorder %v692, %v960
      %vm1067 = vcmp.lt.f32.partialorder %v693, %v960
      %vm1068 = vcmp.lt.f32.partialorder %v692, %v964
      %vm1069 = vcmp.lt.f32.partialorder %v693, %v964
      %vm1070 = vcmp.lt.f32.partialorder %v692, %v968
      %vm1071 = vcmp.lt.f32.partialorder %v693, %v968
      %vm1072 = vcmp.lt.f32.partialorder %v692, %v972
      %vm1073 = vcmp.lt.f32.partialorder %v693, %v972
      %vm1074 = vcmp.lt.f32.partialorder %v692, %v976
      %vm1075 = vcmp.lt.f32.partialorder %v693, %v976
      %vm1076 = vcmp.lt.f32.partialorder %v692, %v980
      %vm1077 = vcmp.lt.f32.partialorder %v693, %v980
      %vm1078 = vcmp.lt.f32.partialorder %v692, %v984
      %vm1079 = vcmp.lt.f32.partialorder %v693, %v984
      %vm1080 = vcmp.lt.f32.partialorder %v692, %v988
      %vm1081 = vcmp.lt.f32.partialorder %v693, %v988
      %vm1082 = vcmp.lt.f32.partialorder %v692, %v992
      %vm1083 = vcmp.lt.f32.partialorder %v693, %v992
      %vm1084 = vcmp.lt.f32.partialorder %v692, %v996
      %vm1085 = vcmp.lt.f32.partialorder %v693, %v996
      %vm1086 = vcmp.lt.f32.partialorder %v692, %v1000
      %vm1087 = vcmp.lt.f32.partialorder %v693, %v1000
      %vm1088 = vcmp.lt.f32.partialorder %v692, %v1004
      %vm1089 = vcmp.lt.f32.partialorder %v693, %v1004
      %vm1090 = vcmp.lt.f32.partialorder %v692, %v1008
      %vm1091 = vcmp.lt.f32.partialorder %v693, %v1008
      %vm1092 = vcmp.lt.f32.partialorder %v692, %v1012
      %vm1093 = vcmp.lt.f32.partialorder %v693, %v1012
      %vm1094 = vcmp.lt.f32.partialorder %v692, %v1016
      %vm1095 = vcmp.lt.f32.partialorder %v693, %v1016
      %vm1096 = vcmp.lt.f32.partialorder %v692, %v1020
      %vm1097 = vcmp.lt.f32.partialorder %v693, %v1020
      %vm1098 = vcmp.lt.f32.partialorder %v692, %v1024
      %vm1099 = vcmp.lt.f32.partialorder %v693, %v1024
      %vm1100 = vcmp.lt.f32.partialorder %v692, %v1028
      %vm1101 = vcmp.lt.f32.partialorder %v693, %v1028
      %vm1102 = vcmp.lt.f32.partialorder %v692, %v1032
      %vm1103 = vcmp.lt.f32.partialorder %v693, %v1032
      %vm1104 = vcmp.lt.f32.partialorder %v692, %v1036
      %vm1105 = vcmp.lt.f32.partialorder %v693, %v1036
      %vm1106 = vcmp.lt.f32.partialorder %v692, %v1040
      %vm1107 = vcmp.lt.f32.partialorder %v693, %v1040
      %vm1108 = vcmp.lt.f32.partialorder %v692, %v1044
      %vm1109 = vcmp.lt.f32.partialorder %v693, %v1044
      %vm1110 = vmand %vm854, %vm1046
      %vm1111 = vmand %vm855, %vm1047
      %vm1112 = vmand %vm856, %vm1048
      %vm1113 = vmand %vm857, %vm1049
      %vm1114 = vmand %vm858, %vm1050
      %vm1115 = vmand %vm859, %vm1051
      %vm1116 = vmand %vm860, %vm1052
      %vm1117 = vmand %vm861, %vm1053
      %vm1118 = vmand %vm862, %vm1054
      %vm1119 = vmand %vm863, %vm1055
      %vm1120 = vmand %vm864, %vm1056
      %vm1121 = vmand %vm865, %vm1057
      %vm1122 = vmand %vm866, %vm1058
      %vm1123 = vmand %vm867, %vm1059
      %vm1124 = vmand %vm868, %vm1060
      %vm1125 = vmand %vm869, %vm1061
      %vm1126 = vmand %vm870, %vm1062
      %vm1127 = vmand %vm871, %vm1063
      %vm1128 = vmand %vm872, %vm1064
      %vm1129 = vmand %vm873, %vm1065
      %vm1130 = vmand %vm874, %vm1066
      %vm1131 = vmand %vm875, %vm1067
      %vm1132 = vmand %vm876, %vm1068
      %vm1133 = vmand %vm877, %vm1069
      %vm1134 = vmand %vm878, %vm1070
      %vm1135 = vmand %vm879, %vm1071
      %vm1136 = vmand %vm880, %vm1072
      %vm1137 = vmand %vm881, %vm1073
      %vm1138 = vmand %vm882, %vm1074
      %vm1139 = vmand %vm883, %vm1075
      %vm1140 = vmand %vm884, %vm1076
      %vm1141 = vmand %vm885, %vm1077
      %vm1142 = vmand %vm886, %vm1078
      %vm1143 = vmand %vm887, %vm1079
      %vm1144 = vmand %vm888, %vm1080
      %vm1145 = vmand %vm889, %vm1081
      %vm1146 = vmand %vm890, %vm1082
      %vm1147 = vmand %vm891, %vm1083
      %vm1148 = vmand %vm892, %vm1084
      %vm1149 = vmand %vm893, %vm1085
      %vm1150 = vmand %vm894, %vm1086
      %vm1151 = vmand %vm895, %vm1087
      %vm1152 = vmand %vm896, %vm1088
      %vm1153 = vmand %vm897, %vm1089
      %vm1154 = vmand %vm898, %vm1090
      %vm1155 = vmand %vm899, %vm1091
      %vm1156 = vmand %vm900, %vm1092
      %vm1157 = vmand %vm901, %vm1093
      %vm1158 = vmand %vm902, %vm1094
      %vm1159 = vmand %vm903, %vm1095
      %vm1160 = vmand %vm904, %vm1096
      %vm1161 = vmand %vm905, %vm1097
      %vm1162 = vmand %vm906, %vm1098
      %vm1163 = vmand %vm907, %vm1099
      %vm1164 = vmand %vm908, %vm1100
      %vm1165 = vmand %vm909, %vm1101
      %vm1166 = vmand %vm910, %vm1102
      %vm1167 = vmand %vm911, %vm1103
      %vm1168 = vmand %vm912, %vm1104
      %vm1169 = vmand %vm913, %vm1105
      %vm1170 = vmand %vm914, %vm1106
      %vm1171 = vmand %vm915, %vm1107
      %vm1172 = vmand %vm916, %vm1108
      %vm1173 = vmand %vm917, %vm1109
      %v1174 = vsel %vm1110, 1.0, 0.0
      %v1175 = vsel %vm1111, 1.0, 0.0
      %v1176 = vsel %vm1112, 1.0, 0.0
      %v1177 = vsel %vm1113, 1.0, 0.0
      %v1178 = vsel %vm1114, 1.0, 0.0
      %v1179 = vsel %vm1115, 1.0, 0.0
      %v1180 = vsel %vm1116, 1.0, 0.0
      %v1181 = vsel %vm1117, 1.0, 0.0
      %v1182 = vsel %vm1118, 1.0, 0.0
      %v1183 = vsel %vm1119, 1.0, 0.0
      %v1184 = vsel %vm1120, 1.0, 0.0
      %v1185 = vsel %vm1121, 1.0, 0.0
      %v1186 = vsel %vm1122, 1.0, 0.0
      %v1187 = vsel %vm1123, 1.0, 0.0
      %v1188 = vsel %vm1124, 1.0, 0.0
      %v1189 = vsel %vm1125, 1.0, 0.0
      %v1190 = vsel %vm1126, 1.0, 0.0
      %v1191 = vsel %vm1127, 1.0, 0.0
      %v1192 = vsel %vm1128, 1.0, 0.0
      %v1193 = vsel %vm1129, 1.0, 0.0
      %v1194 = vsel %vm1130, 1.0, 0.0
      %v1195 = vsel %vm1131, 1.0, 0.0
      %v1196 = vsel %vm1132, 1.0, 0.0
      %v1197 = vsel %vm1133, 1.0, 0.0
      %v1198 = vsel %vm1134, 1.0, 0.0
      %v1199 = vsel %vm1135, 1.0, 0.0
      %v1200 = vsel %vm1136, 1.0, 0.0
      %v1201 = vsel %vm1137, 1.0, 0.0
      %v1202 = vsel %vm1138, 1.0, 0.0
      %v1203 = vsel %vm1139, 1.0, 0.0
      %v1204 = vsel %vm1140, 1.0, 0.0
      %v1205 = vsel %vm1141, 1.0, 0.0
      %v1206 = vsel %vm1142, 1.0, 0.0
      %v1207 = vsel %vm1143, 1.0, 0.0
      %v1208 = vsel %vm1144, 1.0, 0.0
      %v1209 = vsel %vm1145, 1.0, 0.0
      %v1210 = vsel %vm1146, 1.0, 0.0
      %v1211 = vsel %vm1147, 1.0, 0.0
      %v1212 = vsel %vm1148, 1.0, 0.0
      %v1213 = vsel %vm1149, 1.0, 0.0
      %v1214 = vsel %vm1150, 1.0, 0.0
      %v1215 = vsel %vm1151, 1.0, 0.0
      %v1216 = vsel %vm1152, 1.0, 0.0
      %v1217 = vsel %vm1153, 1.0, 0.0
      %v1218 = vsel %vm1154, 1.0, 0.0
      %v1219 = vsel %vm1155, 1.0, 0.0
      %v1220 = vsel %vm1156, 1.0, 0.0
      %v1221 = vsel %vm1157, 1.0, 0.0
      %v1222 = vsel %vm1158, 1.0, 0.0
      %v1223 = vsel %vm1159, 1.0, 0.0
      %v1224 = vsel %vm1160, 1.0, 0.0
      %v1225 = vsel %vm1161, 1.0, 0.0
      %v1226 = vsel %vm1162, 1.0, 0.0
      %v1227 = vsel %vm1163, 1.0, 0.0
      %v1228 = vsel %vm1164, 1.0, 0.0
      %v1229 = vsel %vm1165, 1.0, 0.0
      %v1230 = vsel %vm1166, 1.0, 0.0
      %v1231 = vsel %vm1167, 1.0, 0.0
      %v1232 = vsel %vm1168, 1.0, 0.0
      %v1233 = vsel %vm1169, 1.0, 0.0
      %v1234 = vsel %vm1170, 1.0, 0.0
      %v1235 = vsel %vm1171, 1.0, 0.0
      %v1236 = vsel %vm1172, 1.0, 0.0
      %v1237 = vsel %vm1173, 1.0, 0.0
      %1238 = vmatprep.subr.mxu0 0.0
      %1239 = vmatpush1.msra.mxu0 %v568
      %1240 = vmatprep.subr.mxu0 0.0
      %1241 = vmatpush1.msra.mxu0 %v567
      %1242 = vmatprep.subr.mxu0 0.0
      %1243 = vmatpush1.msra.mxu0 %v566
      %1244 = vmatprep.subr.mxu0 0.0
      %1245 = vmatpush1.msra.mxu0 %v565
      %1246 = vmatprep.subr.mxu0 0.0
      %1247 = vmatpush1.msra.mxu0 %v564
      %1248 = vmatprep.subr.mxu0 0.0
      %1249 = vmatpush1.msra.mxu0 %v563
      %1250 = vmatprep.subr.mxu0 0.0
      %1251 = vmatpush1.msra.mxu0 %v562
      %1252 = vmatprep.subr.mxu0 0.0
      %1253 = vmatpush1.msra.mxu0 %v561
      %1254 = vmatprep.subr.mxu0 0.0
      %1255 = vmatpush1.msra.mxu0 %v560
      %1256 = vmatprep.subr.mxu0 0.0
      %1257 = vmatpush1.msra.mxu0 %v559
      %1258 = vmatprep.subr.mxu0 0.0
      %1259 = vmatpush1.msra.mxu0 %v558
      %1260 = vmatprep.subr.mxu0 0.0
      %1261 = vmatpush1.msra.mxu0 %v557
      %1262 = vmatprep.subr.mxu0 0.0
      %1263 = vmatpush1.msra.mxu0 %v556
      %1264 = vmatprep.subr.mxu0 0.0
      %1265 = vmatpush1.msra.mxu0 %v555
      %1266 = vmatprep.subr.mxu0 0.0
      %1267 = vmatpush1.msra.mxu0 %v554
      %1268 = vmatprep.subr.mxu0 0.0
      %1269 = vmatpush1.msra.mxu0 %v553
      %1270 = vmatprep.subr.mxu0 0.0
      %1271 = vmatpush2.msra.mxu0 %v584
      %1272 = vmatprep.subr.mxu0 0.0
      %1273 = vmatpush2.msra.mxu0 %v583
      %1274 = vmatprep.subr.mxu0 0.0
      %1275 = vmatpush2.msra.mxu0 %v582
      %1276 = vmatprep.subr.mxu0 0.0
      %1277 = vmatpush2.msra.mxu0 %v581
      %1278 = vmatprep.subr.mxu0 0.0
      %1279 = vmatpush2.msra.mxu0 %v580
      %1280 = vmatprep.subr.mxu0 0.0
      %1281 = vmatpush2.msra.mxu0 %v579
      %1282 = vmatprep.subr.mxu0 0.0
      %1283 = vmatpush2.msra.mxu0 %v578
      %1284 = vmatprep.subr.mxu0 0.0
      %1285 = vmatpush2.msra.mxu0 %v577
      %1286 = vmatprep.subr.mxu0 0.0
      %1287 = vmatpush2.msra.mxu0 %v576
      %1288 = vmatprep.subr.mxu0 0.0
      %1289 = vmatpush2.msra.mxu0 %v575
      %1290 = vmatprep.subr.mxu0 0.0
      %1291 = vmatpush2.msra.mxu0 %v574
      %1292 = vmatprep.subr.mxu0 0.0
      %1293 = vmatpush2.msra.mxu0 %v573
      %1294 = vmatprep.subr.mxu0 0.0
      %1295 = vmatpush2.msra.mxu0 %v572
      %1296 = vmatprep.subr.mxu0 0.0
      %1297 = vmatpush2.msra.mxu0 %v571
      %1298 = vmatprep.subr.mxu0 0.0
      %1299 = vmatpush2.msra.mxu0 %v570
      %1300 = vmatprep.subr.mxu0 0.0
      %1301 = vmatpush2.msra.mxu0 %v569
      %1302 = vmatprep.mubr.f32.mxu0 %v1175
      %1303 = vmatmul.mubr.f32.gmra.mxu0 %v1174
      %v1304 = vpop.f32.mrf.mxu0
      %v1305 = vadd.f32 0.0, %v1304
      %v1306 = vpop.f32.mrf.mxu0
      %1307 = vmatprep.mubr.f32.mxu0 %v1177
      %1308 = vmatmul.mubr.f32.gmra.mxu0 %v1176
      %v1309 = vpop.f32.mrf.mxu0
      %v1310 = vadd.f32 0.0, %v1309
      %v1311 = vpop.f32.mrf.mxu0
      %1312 = vmatprep.mubr.f32.mxu0 %v1179
      %1313 = vmatmul.mubr.f32.gmra.mxu0 %v1178
      %v1314 = vpop.f32.mrf.mxu0
      %v1315 = vadd.f32 0.0, %v1314
      %v1316 = vpop.f32.mrf.mxu0
      %1317 = vmatprep.mubr.f32.mxu0 %v1181
      %1318 = vmatmul.mubr.f32.gmra.mxu0 %v1180
      %v1319 = vpop.f32.mrf.mxu0
      %v1320 = vadd.f32 0.0, %v1319
      %v1321 = vpop.f32.mrf.mxu0
      %1322 = vmatprep.mubr.f32.mxu0 %v1183
      %1323 = vmatmul.mubr.f32.gmra.mxu0 %v1182
      %v1324 = vpop.f32.mrf.mxu0
      %v1325 = vadd.f32 0.0, %v1324
      %v1326 = vpop.f32.mrf.mxu0
      %1327 = vmatprep.mubr.f32.mxu0 %v1185
      %1328 = vmatmul.mubr.f32.gmra.mxu0 %v1184
      %v1329 = vpop.f32.mrf.mxu0
      %v1330 = vadd.f32 0.0, %v1329
      %v1331 = vpop.f32.mrf.mxu0
      %1332 = vmatprep.mubr.f32.mxu0 %v1187
      %1333 = vmatmul.mubr.f32.gmra.mxu0 %v1186
      %v1334 = vpop.f32.mrf.mxu0
      %v1335 = vadd.f32 0.0, %v1334
      %v1336 = vpop.f32.mrf.mxu0
      %1337 = vmatprep.mubr.f32.mxu0 %v1189
      %1338 = vmatmul.mubr.f32.gmra.mxu0 %v1188
      %v1339 = vpop.f32.mrf.mxu0
      %v1340 = vadd.f32 0.0, %v1339
      %v1341 = vpop.f32.mrf.mxu0
      %1342 = vmatprep.mubr.f32.mxu0 %v1191
      %1343 = vmatmul.mubr.f32.gmra.mxu0 %v1190
      %v1344 = vpop.f32.mrf.mxu0
      %v1345 = vadd.f32 0.0, %v1344
      %v1346 = vpop.f32.mrf.mxu0
      %1347 = vmatprep.mubr.f32.mxu0 %v1193
      %1348 = vmatmul.mubr.f32.gmra.mxu0 %v1192
      %v1349 = vpop.f32.mrf.mxu0
      %v1350 = vadd.f32 0.0, %v1349
      %v1351 = vpop.f32.mrf.mxu0
      %1352 = vmatprep.mubr.f32.mxu0 %v1195
      %1353 = vmatmul.mubr.f32.gmra.mxu0 %v1194
      %v1354 = vpop.f32.mrf.mxu0
      %v1355 = vadd.f32 0.0, %v1354
      %v1356 = vpop.f32.mrf.mxu0
      %1357 = vmatprep.mubr.f32.mxu0 %v1197
      %1358 = vmatmul.mubr.f32.gmra.mxu0 %v1196
      %v1359 = vpop.f32.mrf.mxu0
      %v1360 = vadd.f32 0.0, %v1359
      %v1361 = vpop.f32.mrf.mxu0
      %1362 = vmatprep.mubr.f32.mxu0 %v1199
      %1363 = vmatmul.mubr.f32.gmra.mxu0 %v1198
      %v1364 = vpop.f32.mrf.mxu0
      %v1365 = vadd.f32 0.0, %v1364
      %v1366 = vpop.f32.mrf.mxu0
      %1367 = vmatprep.mubr.f32.mxu0 %v1201
      %1368 = vmatmul.mubr.f32.gmra.mxu0 %v1200
      %v1369 = vpop.f32.mrf.mxu0
      %v1370 = vadd.f32 0.0, %v1369
      %v1371 = vpop.f32.mrf.mxu0
      %1372 = vmatprep.mubr.f32.mxu0 %v1203
      %1373 = vmatmul.mubr.f32.gmra.mxu0 %v1202
      %v1374 = vpop.f32.mrf.mxu0
      %v1375 = vadd.f32 0.0, %v1374
      %v1376 = vpop.f32.mrf.mxu0
      %1377 = vmatprep.mubr.f32.mxu0 %v1205
      %1378 = vmatmul.mubr.f32.gmra.mxu0 %v1204
      %v1379 = vpop.f32.mrf.mxu0
      %v1380 = vadd.f32 0.0, %v1379
      %v1381 = vpop.f32.mrf.mxu0
      %1382 = vmatprep.mubr.f32.mxu0 %v1207
      %1383 = vmatmul.mubr.f32.gmra.mxu0 %v1206
      %v1384 = vpop.f32.mrf.mxu0
      %v1385 = vadd.f32 0.0, %v1384
      %v1386 = vpop.f32.mrf.mxu0
      %1387 = vmatprep.mubr.f32.mxu0 %v1209
      %1388 = vmatmul.mubr.f32.gmra.mxu0 %v1208
      %v1389 = vpop.f32.mrf.mxu0
      %v1390 = vadd.f32 0.0, %v1389
      %v1391 = vpop.f32.mrf.mxu0
      %1392 = vmatprep.mubr.f32.mxu0 %v1211
      %1393 = vmatmul.mubr.f32.gmra.mxu0 %v1210
      %v1394 = vpop.f32.mrf.mxu0
      %v1395 = vadd.f32 0.0, %v1394
      %v1396 = vpop.f32.mrf.mxu0
      %1397 = vmatprep.mubr.f32.mxu0 %v1213
      %1398 = vmatmul.mubr.f32.gmra.mxu0 %v1212
      %v1399 = vpop.f32.mrf.mxu0
      %v1400 = vadd.f32 0.0, %v1399
      %v1401 = vpop.f32.mrf.mxu0
      %1402 = vmatprep.mubr.f32.mxu0 %v1215
      %1403 = vmatmul.mubr.f32.gmra.mxu0 %v1214
      %v1404 = vpop.f32.mrf.mxu0
      %v1405 = vadd.f32 0.0, %v1404
      %v1406 = vpop.f32.mrf.mxu0
      %1407 = vmatprep.mubr.f32.mxu0 %v1217
      %1408 = vmatmul.mubr.f32.gmra.mxu0 %v1216
      %v1409 = vpop.f32.mrf.mxu0
      %v1410 = vadd.f32 0.0, %v1409
      %v1411 = vpop.f32.mrf.mxu0
      %1412 = vmatprep.mubr.f32.mxu0 %v1219
      %1413 = vmatmul.mubr.f32.gmra.mxu0 %v1218
      %v1414 = vpop.f32.mrf.mxu0
      %v1415 = vadd.f32 0.0, %v1414
      %v1416 = vpop.f32.mrf.mxu0
      %1417 = vmatprep.mubr.f32.mxu0 %v1221
      %1418 = vmatmul.mubr.f32.gmra.mxu0 %v1220
      %v1419 = vpop.f32.mrf.mxu0
      %v1420 = vadd.f32 0.0, %v1419
      %v1421 = vpop.f32.mrf.mxu0
      %1422 = vmatprep.mubr.f32.mxu0 %v1223
      %1423 = vmatmul.mubr.f32.gmra.mxu0 %v1222
      %v1424 = vpop.f32.mrf.mxu0
      %v1425 = vadd.f32 0.0, %v1424
      %v1426 = vpop.f32.mrf.mxu0
      %1427 = vmatprep.mubr.f32.mxu0 %v1225
      %1428 = vmatmul.mubr.f32.gmra.mxu0 %v1224
      %v1429 = vpop.f32.mrf.mxu0
      %v1430 = vadd.f32 0.0, %v1429
      %v1431 = vpop.f32.mrf.mxu0
      %1432 = vmatprep.mubr.f32.mxu0 %v1227
      %1433 = vmatmul.mubr.f32.gmra.mxu0 %v1226
      %v1434 = vpop.f32.mrf.mxu0
      %v1435 = vadd.f32 0.0, %v1434
      %v1436 = vpop.f32.mrf.mxu0
      %1437 = vmatprep.mubr.f32.mxu0 %v1229
      %1438 = vmatmul.mubr.f32.gmra.mxu0 %v1228
      %v1439 = vpop.f32.mrf.mxu0
      %v1440 = vadd.f32 0.0, %v1439
      %v1441 = vpop.f32.mrf.mxu0
      %1442 = vmatprep.mubr.f32.mxu0 %v1231
      %1443 = vmatmul.mubr.f32.gmra.mxu0 %v1230
      %v1444 = vpop.f32.mrf.mxu0
      %v1445 = vadd.f32 0.0, %v1444
      %v1446 = vpop.f32.mrf.mxu0
      %1447 = vmatprep.mubr.f32.mxu0 %v1233
      %1448 = vmatmul.mubr.f32.gmra.mxu0 %v1232
      %v1449 = vpop.f32.mrf.mxu0
      %v1450 = vadd.f32 0.0, %v1449
      %v1451 = vpop.f32.mrf.mxu0
      %1452 = vmatprep.mubr.f32.mxu0 %v1235
      %1453 = vmatmul.mubr.f32.gmra.mxu0 %v1234
      %v1454 = vpop.f32.mrf.mxu0
      %v1455 = vadd.f32 0.0, %v1454
      %v1456 = vpop.f32.mrf.mxu0
      %1457 = vmatprep.mubr.f32.mxu0 %v1237
      %1458 = vmatmul.mubr.f32.gmra.mxu0 %v1236
      %v1459 = vpop.f32.mrf.mxu0
      %v1460 = vadd.f32 0.0, %v1459
      %v1461 = vpop.f32.mrf.mxu0
      %1462 = vdwg.mxu0
      %1463 = vrot.lane.b32.xlu0 %v521, 1
      %v1464 = vpop.permute.xlu0 %1463
      %1465 = vrot.lane.b32.xlu0 %v522, 1
      %v1466 = vpop.permute.xlu0 %1465
      %1467 = vrot.lane.b32.xlu0 %v523, 1
      %v1468 = vpop.permute.xlu0 %1467
      %1469 = vrot.lane.b32.xlu0 %v524, 1
      %v1470 = vpop.permute.xlu0 %1469
      %1471 = vrot.lane.b32.xlu0 %v525, 1
      %v1472 = vpop.permute.xlu0 %1471
      %1473 = vrot.lane.b32.xlu0 %v526, 1
      %v1474 = vpop.permute.xlu0 %1473
      %1475 = vrot.lane.b32.xlu0 %v527, 1
      %v1476 = vpop.permute.xlu0 %1475
      %1477 = vrot.lane.b32.xlu0 %v528, 1
      %v1478 = vpop.permute.xlu0 %1477
      %1479 = vrot.lane.b32.xlu0 %v529, 1
      %v1480 = vpop.permute.xlu0 %1479
      %1481 = vrot.lane.b32.xlu0 %v530, 1
      %v1482 = vpop.permute.xlu0 %1481
      %1483 = vrot.lane.b32.xlu0 %v531, 1
      %v1484 = vpop.permute.xlu0 %1483
      %1485 = vrot.lane.b32.xlu0 %v532, 1
      %v1486 = vpop.permute.xlu0 %1485
      %1487 = vrot.lane.b32.xlu0 %v533, 1
      %v1488 = vpop.permute.xlu0 %1487
      %1489 = vrot.lane.b32.xlu0 %v534, 1
      %v1490 = vpop.permute.xlu0 %1489
      %1491 = vrot.lane.b32.xlu0 %v535, 1
      %v1492 = vpop.permute.xlu0 %1491
      %1493 = vrot.lane.b32.xlu0 %v536, 1
      %v1494 = vpop.permute.xlu0 %1493
      %1495 = vrot.lane.b32.xlu0 %v537, 1
      %v1496 = vpop.permute.xlu0 %1495
      %1497 = vrot.lane.b32.xlu0 %v538, 1
      %v1498 = vpop.permute.xlu0 %1497
      %1499 = vrot.lane.b32.xlu0 %v539, 1
      %v1500 = vpop.permute.xlu0 %1499
      %1501 = vrot.lane.b32.xlu0 %v540, 1
      %v1502 = vpop.permute.xlu0 %1501
      %1503 = vrot.lane.b32.xlu0 %v541, 1
      %v1504 = vpop.permute.xlu0 %1503
      %1505 = vrot.lane.b32.xlu0 %v542, 1
      %v1506 = vpop.permute.xlu0 %1505
      %1507 = vrot.lane.b32.xlu0 %v543, 1
      %v1508 = vpop.permute.xlu0 %1507
      %1509 = vrot.lane.b32.xlu0 %v544, 1
      %v1510 = vpop.permute.xlu0 %1509
      %1511 = vrot.lane.b32.xlu0 %v545, 1
      %v1512 = vpop.permute.xlu0 %1511
      %1513 = vrot.lane.b32.xlu0 %v546, 1
      %v1514 = vpop.permute.xlu0 %1513
      %1515 = vrot.lane.b32.xlu0 %v547, 1
      %v1516 = vpop.permute.xlu0 %1515
      %1517 = vrot.lane.b32.xlu0 %v548, 1
      %v1518 = vpop.permute.xlu0 %1517
      %1519 = vrot.lane.b32.xlu0 %v549, 1
      %v1520 = vpop.permute.xlu0 %1519
      %1521 = vrot.lane.b32.xlu0 %v550, 1
      %v1522 = vpop.permute.xlu0 %1521
      %1523 = vrot.lane.b32.xlu0 %v551, 1
      %v1524 = vpop.permute.xlu0 %1523
      %1525 = vrot.lane.b32.xlu0 %v552, 1
      %v1526 = vpop.permute.xlu0 %1525
      %v1559 = vsub.f32 %v521, %v1464
      %v1560 = vsub.f32 %v522, %v1466
      %v1561 = vsub.f32 %v523, %v1468
      %v1562 = vsub.f32 %v524, %v1470
      %v1563 = vsub.f32 %v525, %v1472
      %v1564 = vsub.f32 %v526, %v1474
      %v1565 = vsub.f32 %v527, %v1476
      %v1566 = vsub.f32 %v528, %v1478
      %v1567 = vsub.f32 %v529, %v1480
      %v1568 = vsub.f32 %v530, %v1482
      %v1569 = vsub.f32 %v531, %v1484
      %v1570 = vsub.f32 %v532, %v1486
      %v1571 = vsub.f32 %v533, %v1488
      %v1572 = vsub.f32 %v534, %v1490
      %v1573 = vsub.f32 %v535, %v1492
      %v1574 = vsub.f32 %v536, %v1494
      %v1575 = vsub.f32 %v537, %v1496
      %v1576 = vsub.f32 %v538, %v1498
      %v1577 = vsub.f32 %v539, %v1500
      %v1578 = vsub.f32 %v540, %v1502
      %v1579 = vsub.f32 %v541, %v1504
      %v1580 = vsub.f32 %v542, %v1506
      %v1581 = vsub.f32 %v543, %v1508
      %v1582 = vsub.f32 %v544, %v1510
      %v1583 = vsub.f32 %v545, %v1512
      %v1584 = vsub.f32 %v546, %v1514
      %v1585 = vsub.f32 %v547, %v1516
      %v1586 = vsub.f32 %v548, %v1518
      %v1587 = vsub.f32 %v549, %v1520
      %v1588 = vsub.f32 %v550, %v1522
      %v1589 = vsub.f32 %v551, %v1524
      %v1590 = vsub.f32 %v552, %v1526
      %v1591 = vmax.f32 %v1559, 1.0
      %v1592 = vmax.f32 %v1560, 1.0
      %v1593 = vmax.f32 %v1561, 1.0
      %v1594 = vmax.f32 %v1562, 1.0
      %v1595 = vmax.f32 %v1563, 1.0
      %v1596 = vmax.f32 %v1564, 1.0
      %v1597 = vmax.f32 %v1565, 1.0
      %v1598 = vmax.f32 %v1566, 1.0
      %v1599 = vmax.f32 %v1567, 1.0
      %v1600 = vmax.f32 %v1568, 1.0
      %v1601 = vmax.f32 %v1569, 1.0
      %v1602 = vmax.f32 %v1570, 1.0
      %v1603 = vmax.f32 %v1571, 1.0
      %v1604 = vmax.f32 %v1572, 1.0
      %v1605 = vmax.f32 %v1573, 1.0
      %v1606 = vmax.f32 %v1574, 1.0
      %v1607 = vmax.f32 %v1575, 1.0
      %v1608 = vmax.f32 %v1576, 1.0
      %v1609 = vmax.f32 %v1577, 1.0
      %v1610 = vmax.f32 %v1578, 1.0
      %v1611 = vmax.f32 %v1579, 1.0
      %v1612 = vmax.f32 %v1580, 1.0
      %v1613 = vmax.f32 %v1581, 1.0
      %v1614 = vmax.f32 %v1582, 1.0
      %v1615 = vmax.f32 %v1583, 1.0
      %v1616 = vmax.f32 %v1584, 1.0
      %v1617 = vmax.f32 %v1585, 1.0
      %v1618 = vmax.f32 %v1586, 1.0
      %v1619 = vmax.f32 %v1587, 1.0
      %v1620 = vmax.f32 %v1588, 1.0
      %v1621 = vmax.f32 %v1589, 1.0
      %v1622 = vmax.f32 %v1590, 1.0
      %v1623 = vrcp.pop %v1591
      %v1624 = vrcp.pop %v1592
      %v1625 = vrcp.pop %v1593
      %v1626 = vrcp.pop %v1594
      %v1627 = vrcp.pop %v1595
      %v1628 = vrcp.pop %v1596
      %v1629 = vrcp.pop %v1597
      %v1630 = vrcp.pop %v1598
      %v1631 = vrcp.pop %v1599
      %v1632 = vrcp.pop %v1600
      %v1633 = vrcp.pop %v1601
      %v1634 = vrcp.pop %v1602
      %v1635 = vrcp.pop %v1603
      %v1636 = vrcp.pop %v1604
      %v1637 = vrcp.pop %v1605
      %v1638 = vrcp.pop %v1606
      %v1639 = vrcp.pop %v1607
      %v1640 = vrcp.pop %v1608
      %v1641 = vrcp.pop %v1609
      %v1642 = vrcp.pop %v1610
      %v1643 = vrcp.pop %v1611
      %v1644 = vrcp.pop %v1612
      %v1645 = vrcp.pop %v1613
      %v1646 = vrcp.pop %v1614
      %v1647 = vrcp.pop %v1615
      %v1648 = vrcp.pop %v1616
      %v1649 = vrcp.pop %v1617
      %v1650 = vrcp.pop %v1618
      %v1651 = vrcp.pop %v1619
      %v1652 = vrcp.pop %v1620
      %v1653 = vrcp.pop %v1621
      %v1654 = vrcp.pop %v1622
      %1687 = vrot.lane.b32.xlu0 %v1623, 127
      %v1688 = vpop.permute.xlu0 %1687
      %1689 = vrot.lane.b32.xlu0 %v1624, 127
      %v1690 = vpop.permute.xlu0 %1689
      %1691 = vrot.lane.b32.xlu0 %v1625, 127
      %v1692 = vpop.permute.xlu0 %1691
      %1693 = vrot.lane.b32.xlu0 %v1626, 127
      %v1694 = vpop.permute.xlu0 %1693
      %1695 = vrot.lane.b32.xlu0 %v1627, 127
      %v1696 = vpop.permute.xlu0 %1695
      %1697 = vrot.lane.b32.xlu0 %v1628, 127
      %v1698 = vpop.permute.xlu0 %1697
      %1699 = vrot.lane.b32.xlu0 %v1629, 127
      %v1700 = vpop.permute.xlu0 %1699
      %1701 = vrot.lane.b32.xlu0 %v1630, 127
      %v1702 = vpop.permute.xlu0 %1701
      %1703 = vrot.lane.b32.xlu0 %v1631, 127
      %v1704 = vpop.permute.xlu0 %1703
      %1705 = vrot.lane.b32.xlu0 %v1632, 127
      %v1706 = vpop.permute.xlu0 %1705
      %1707 = vrot.lane.b32.xlu0 %v1633, 127
      %v1708 = vpop.permute.xlu0 %1707
      %1709 = vrot.lane.b32.xlu0 %v1634, 127
      %v1710 = vpop.permute.xlu0 %1709
      %1711 = vrot.lane.b32.xlu0 %v1635, 127
      %v1712 = vpop.permute.xlu0 %1711
      %1713 = vrot.lane.b32.xlu0 %v1636, 127
      %v1714 = vpop.permute.xlu0 %1713
      %1715 = vrot.lane.b32.xlu0 %v1637, 127
      %v1716 = vpop.permute.xlu0 %1715
      %1717 = vrot.lane.b32.xlu0 %v1638, 127
      %v1718 = vpop.permute.xlu0 %1717
      %1719 = vrot.lane.b32.xlu0 %v1639, 127
      %v1720 = vpop.permute.xlu0 %1719
      %1721 = vrot.lane.b32.xlu0 %v1640, 127
      %v1722 = vpop.permute.xlu0 %1721
      %1723 = vrot.lane.b32.xlu0 %v1641, 127
      %v1724 = vpop.permute.xlu0 %1723
      %1725 = vrot.lane.b32.xlu0 %v1642, 127
      %v1726 = vpop.permute.xlu0 %1725
      %1727 = vrot.lane.b32.xlu0 %v1643, 127
      %v1728 = vpop.permute.xlu0 %1727
      %1729 = vrot.lane.b32.xlu0 %v1644, 127
      %v1730 = vpop.permute.xlu0 %1729
      %1731 = vrot.lane.b32.xlu0 %v1645, 127
      %v1732 = vpop.permute.xlu0 %1731
      %1733 = vrot.lane.b32.xlu0 %v1646, 127
      %v1734 = vpop.permute.xlu0 %1733
      %1735 = vrot.lane.b32.xlu0 %v1647, 127
      %v1736 = vpop.permute.xlu0 %1735
      %1737 = vrot.lane.b32.xlu0 %v1648, 127
      %v1738 = vpop.permute.xlu0 %1737
      %1739 = vrot.lane.b32.xlu0 %v1649, 127
      %v1740 = vpop.permute.xlu0 %1739
      %1741 = vrot.lane.b32.xlu0 %v1650, 127
      %v1742 = vpop.permute.xlu0 %1741
      %1743 = vrot.lane.b32.xlu0 %v1651, 127
      %v1744 = vpop.permute.xlu0 %1743
      %1745 = vrot.lane.b32.xlu0 %v1652, 127
      %v1746 = vpop.permute.xlu0 %1745
      %1747 = vrot.lane.b32.xlu0 %v1653, 127
      %v1748 = vpop.permute.xlu0 %1747
      %1749 = vrot.lane.b32.xlu0 %v1654, 127
      %v1750 = vpop.permute.xlu0 %1749
      %v1783 = vmul.f32 %v1305, %v1688
      %v1784 = vmul.f32 %v1310, %v1690
      %v1785 = vmul.f32 %v1315, %v1692
      %v1786 = vmul.f32 %v1320, %v1694
      %v1787 = vmul.f32 %v1325, %v1696
      %v1788 = vmul.f32 %v1330, %v1698
      %v1789 = vmul.f32 %v1335, %v1700
      %v1790 = vmul.f32 %v1340, %v1702
      %v1791 = vmul.f32 %v1345, %v1704
      %v1792 = vmul.f32 %v1350, %v1706
      %v1793 = vmul.f32 %v1355, %v1708
      %v1794 = vmul.f32 %v1360, %v1710
      %v1795 = vmul.f32 %v1365, %v1712
      %v1796 = vmul.f32 %v1370, %v1714
      %v1797 = vmul.f32 %v1375, %v1716
      %v1798 = vmul.f32 %v1380, %v1718
      %v1799 = vmul.f32 %v1385, %v1720
      %v1800 = vmul.f32 %v1390, %v1722
      %v1801 = vmul.f32 %v1395, %v1724
      %v1802 = vmul.f32 %v1400, %v1726
      %v1803 = vmul.f32 %v1405, %v1728
      %v1804 = vmul.f32 %v1410, %v1730
      %v1805 = vmul.f32 %v1415, %v1732
      %v1806 = vmul.f32 %v1420, %v1734
      %v1807 = vmul.f32 %v1425, %v1736
      %v1808 = vmul.f32 %v1430, %v1738
      %v1809 = vmul.f32 %v1435, %v1740
      %v1810 = vmul.f32 %v1440, %v1742
      %v1811 = vmul.f32 %v1445, %v1744
      %v1812 = vmul.f32 %v1450, %v1746
      %v1813 = vmul.f32 %v1455, %v1748
      %v1814 = vmul.f32 %v1460, %v1750
      %v1815 = vmul.f32 %v1305, %v1623
      %v1816 = vmul.f32 %v1310, %v1624
      %v1817 = vmul.f32 %v1315, %v1625
      %v1818 = vmul.f32 %v1320, %v1626
      %v1819 = vmul.f32 %v1325, %v1627
      %v1820 = vmul.f32 %v1330, %v1628
      %v1821 = vmul.f32 %v1335, %v1629
      %v1822 = vmul.f32 %v1340, %v1630
      %v1823 = vmul.f32 %v1345, %v1631
      %v1824 = vmul.f32 %v1350, %v1632
      %v1825 = vmul.f32 %v1355, %v1633
      %v1826 = vmul.f32 %v1360, %v1634
      %v1827 = vmul.f32 %v1365, %v1635
      %v1828 = vmul.f32 %v1370, %v1636
      %v1829 = vmul.f32 %v1375, %v1637
      %v1830 = vmul.f32 %v1380, %v1638
      %v1831 = vmul.f32 %v1385, %v1639
      %v1832 = vmul.f32 %v1390, %v1640
      %v1833 = vmul.f32 %v1395, %v1641
      %v1834 = vmul.f32 %v1400, %v1642
      %v1835 = vmul.f32 %v1405, %v1643
      %v1836 = vmul.f32 %v1410, %v1644
      %v1837 = vmul.f32 %v1415, %v1645
      %v1838 = vmul.f32 %v1420, %v1646
      %v1839 = vmul.f32 %v1425, %v1647
      %v1840 = vmul.f32 %v1430, %v1648
      %v1841 = vmul.f32 %v1435, %v1649
      %v1842 = vmul.f32 %v1440, %v1650
      %v1843 = vmul.f32 %v1445, %v1651
      %v1844 = vmul.f32 %v1450, %v1652
      %v1845 = vmul.f32 %v1455, %v1653
      %v1846 = vmul.f32 %v1460, %v1654
      %v1848 = vlaneseq
      %v1849 = vshrl.u32 %v1848, 7
      %v1850 = vsub.s32 0, %v1849
      %v1851 = vrot.slane %v585, %v1850
      %v1853 = vadd.f32 %v489, %v1851
      %v1854 = vadd.f32 %v490, %v1851
      %v1855 = vadd.f32 %v491, %v1851
      %v1856 = vadd.f32 %v492, %v1851
      %v1857 = vadd.f32 %v493, %v1851
      %v1858 = vadd.f32 %v494, %v1851
      %v1859 = vadd.f32 %v495, %v1851
      %v1860 = vadd.f32 %v496, %v1851
      %v1861 = vadd.f32 %v497, %v1851
      %v1862 = vadd.f32 %v498, %v1851
      %v1863 = vadd.f32 %v499, %v1851
      %v1864 = vadd.f32 %v500, %v1851
      %v1865 = vadd.f32 %v501, %v1851
      %v1866 = vadd.f32 %v502, %v1851
      %v1867 = vadd.f32 %v503, %v1851
      %v1868 = vadd.f32 %v504, %v1851
      %v1869 = vadd.f32 %v505, %v1851
      %v1870 = vadd.f32 %v506, %v1851
      %v1871 = vadd.f32 %v507, %v1851
      %v1872 = vadd.f32 %v508, %v1851
      %v1873 = vadd.f32 %v509, %v1851
      %v1874 = vadd.f32 %v510, %v1851
      %v1875 = vadd.f32 %v511, %v1851
      %v1876 = vadd.f32 %v512, %v1851
      %v1877 = vadd.f32 %v513, %v1851
      %v1878 = vadd.f32 %v514, %v1851
      %v1879 = vadd.f32 %v515, %v1851
      %v1880 = vadd.f32 %v516, %v1851
      %v1881 = vadd.f32 %v517, %v1851
      %v1882 = vadd.f32 %v518, %v1851
      %v1883 = vadd.f32 %v519, %v1851
      %v1884 = vadd.f32 %v520, %v1851
      %v1885 = vpack.c.bf16 %v1854, %v1853
      %v1886 = vpack.c.bf16 %v1856, %v1855
      %v1887 = vpack.c.bf16 %v1858, %v1857
      %v1888 = vpack.c.bf16 %v1860, %v1859
      %v1889 = vpack.c.bf16 %v1862, %v1861
      %v1890 = vpack.c.bf16 %v1864, %v1863
      %v1891 = vpack.c.bf16 %v1866, %v1865
      %v1892 = vpack.c.bf16 %v1868, %v1867
      %v1893 = vpack.c.bf16 %v1870, %v1869
      %v1894 = vpack.c.bf16 %v1872, %v1871
      %v1895 = vpack.c.bf16 %v1874, %v1873
      %v1896 = vpack.c.bf16 %v1876, %v1875
      %v1897 = vpack.c.bf16 %v1878, %v1877
      %v1898 = vpack.c.bf16 %v1880, %v1879
      %v1899 = vpack.c.bf16 %v1882, %v1881
      %v1900 = vpack.c.bf16 %v1884, %v1883
      %v1901 = vld [vmem:[%s6] sm:$0xff]
      %v1902 = vld [vmem:[%s6 + $0x8] sm:$0xff]
      %v1903 = vld [vmem:[%s6 + $0x10] sm:$0xff]
      %v1904 = vld [vmem:[%s6 + $0x18] sm:$0xff]
      %v1905 = vld [vmem:[%s6 + $0x20] sm:$0xff]
      %v1906 = vld [vmem:[%s6 + $0x28] sm:$0xff]
      %v1907 = vld [vmem:[%s6 + $0x30] sm:$0xff]
      %v1908 = vld [vmem:[%s6 + $0x38] sm:$0xff]
      %v1909 = vld [vmem:[%s6 + $0x40] sm:$0xff]
      %v1910 = vld [vmem:[%s6 + $0x48] sm:$0xff]
      %v1911 = vld [vmem:[%s6 + $0x50] sm:$0xff]
      %v1912 = vld [vmem:[%s6 + $0x58] sm:$0xff]
      %v1913 = vld [vmem:[%s6 + $0x60] sm:$0xff]
      %v1914 = vld [vmem:[%s6 + $0x68] sm:$0xff]
      %v1915 = vld [vmem:[%s6 + $0x70] sm:$0xff]
      %v1916 = vld [vmem:[%s6 + $0x78] sm:$0xff]
      %v1917 = vld [vmem:[%s7] sm:$0x3]
      %v1919 = vlaneseq
      %v1920 = vshrl.u32 %v1919, 7
      %v1921 = vsub.s32 0, %v1920
      %v1922 = vrot.slane %v1917, %v1921
      %v1923 = vlaneseq
      %v1924 = vshrl.u32 %v1923, 7
      %v1925 = vsub.s32 1, %v1924
      %v1926 = vrot.slane %v1917, %v1925
      %v1945 = vunpack.c.l.b16 %v1901
      %v1946 = vunpack.c.h.b16 %v1901
      %v1947 = vunpack.c.l.b16 %v1902
      %v1948 = vunpack.c.h.b16 %v1902
      %v1949 = vunpack.c.l.b16 %v1903
      %v1950 = vunpack.c.h.b16 %v1903
      %v1951 = vunpack.c.l.b16 %v1904
      %v1952 = vunpack.c.h.b16 %v1904
      %v1953 = vunpack.c.l.b16 %v1905
      %v1954 = vunpack.c.h.b16 %v1905
      %v1955 = vunpack.c.l.b16 %v1906
      %v1956 = vunpack.c.h.b16 %v1906
      %v1957 = vunpack.c.l.b16 %v1907
      %v1958 = vunpack.c.h.b16 %v1907
      %v1959 = vunpack.c.l.b16 %v1908
      %v1960 = vunpack.c.h.b16 %v1908
      %v1961 = vunpack.c.l.b16 %v1909
      %v1962 = vunpack.c.h.b16 %v1909
      %v1963 = vunpack.c.l.b16 %v1910
      %v1964 = vunpack.c.h.b16 %v1910
      %v1965 = vunpack.c.l.b16 %v1911
      %v1966 = vunpack.c.h.b16 %v1911
      %v1967 = vunpack.c.l.b16 %v1912
      %v1968 = vunpack.c.h.b16 %v1912
      %v1969 = vunpack.c.l.b16 %v1913
      %v1970 = vunpack.c.h.b16 %v1913
      %v1971 = vunpack.c.l.b16 %v1914
      %v1972 = vunpack.c.h.b16 %v1914
      %v1973 = vunpack.c.l.b16 %v1915
      %v1974 = vunpack.c.h.b16 %v1915
      %v1975 = vunpack.c.l.b16 %v1916
      %v1976 = vunpack.c.h.b16 %v1916
      %v1977 = vpack.c.b16 %v1947, %v1945
      %v1978 = vpack.c.b16 %v1948, %v1946
      %v1979 = vpack.c.b16 %v1951, %v1949
      %v1980 = vpack.c.b16 %v1952, %v1950
      %v1981 = vpack.c.b16 %v1955, %v1953
      %v1982 = vpack.c.b16 %v1956, %v1954
      %v1983 = vpack.c.b16 %v1959, %v1957
      %v1984 = vpack.c.b16 %v1960, %v1958
      %v1985 = vpack.c.b16 %v1963, %v1961
      %v1986 = vpack.c.b16 %v1964, %v1962
      %v1987 = vpack.c.b16 %v1967, %v1965
      %v1988 = vpack.c.b16 %v1968, %v1966
      %v1989 = vpack.c.b16 %v1971, %v1969
      %v1990 = vpack.c.b16 %v1972, %v1970
      %v1991 = vpack.c.b16 %v1975, %v1973
      %v1992 = vpack.c.b16 %v1976, %v1974
      %2009 = vmatprep.subr.bf16.mxu0 %v1992
      %2010 = vmatpush1.bf16.msra.mxu0 %v1991
      %2011 = vmatprep.subr.bf16.mxu0 %v1990
      %2012 = vmatpush1.bf16.msra.mxu0 %v1989
      %2013 = vmatprep.subr.bf16.mxu0 %v1988
      %2014 = vmatpush1.bf16.msra.mxu0 %v1987
      %2015 = vmatprep.subr.bf16.mxu0 %v1986
      %2016 = vmatpush1.bf16.msra.mxu0 %v1985
      %2017 = vmatprep.subr.bf16.mxu0 %v1984
      %2018 = vmatpush1.bf16.msra.mxu0 %v1983
      %2019 = vmatprep.subr.bf16.mxu0 %v1982
      %2020 = vmatpush1.bf16.msra.mxu0 %v1981
      %2021 = vmatprep.subr.bf16.mxu0 %v1980
      %2022 = vmatpush1.bf16.msra.mxu0 %v1979
      %2023 = vmatprep.subr.bf16.mxu0 %v1978
      %2024 = vmatpush1.bf16.msra.mxu0 %v1977
      %2025 = vmatprep.subr.bf16.mxu0 0
      %2026 = vmatpush2.bf16.msra.mxu0 0
      %2027 = vmatprep.subr.bf16.mxu0 0
      %2028 = vmatpush2.bf16.msra.mxu0 0
      %2029 = vmatprep.subr.bf16.mxu0 0
      %2030 = vmatpush2.bf16.msra.mxu0 0
      %2031 = vmatprep.subr.bf16.mxu0 0
      %2032 = vmatpush2.bf16.msra.mxu0 0
      %2033 = vmatprep.subr.bf16.mxu0 0
      %2034 = vmatpush2.bf16.msra.mxu0 0
      %2035 = vmatprep.subr.bf16.mxu0 0
      %2036 = vmatpush2.bf16.msra.mxu0 0
      %2037 = vmatprep.subr.bf16.mxu0 0
      %2038 = vmatpush2.bf16.msra.mxu0 0
      %2039 = vmatprep.subr.bf16.mxu0 0
      %2040 = vmatpush2.bf16.msra.mxu0 0
      %2041 = vmatprep.mubr.bf16.mxu0 0
      %2042 = vmatmul.mubr.bf16.gmra.mxu0 %v1885
      %v2043 = vpop.f32.mrf.mxu0
      %v2044 = vadd.f32 %v1922, %v2043
      %v2045 = vpop.f32.mrf.mxu0
      %v2046 = vadd.f32 %v1926, %v2045
      %v2047 = vpop.f32.mrf.mxu0
      %v2048 = vadd.f32 %v1922, %v2047
      %v2049 = vpop.f32.mrf.mxu0
      %v2050 = vadd.f32 %v1926, %v2049
      %2051 = vmatprep.mubr.bf16.mxu0 0
      %2052 = vmatmul.mubr.bf16.gmra.mxu0 %v1886
      %v2053 = vpop.f32.mrf.mxu0
      %v2054 = vadd.f32 %v1922, %v2053
      %v2055 = vpop.f32.mrf.mxu0
      %v2056 = vadd.f32 %v1926, %v2055
      %v2057 = vpop.f32.mrf.mxu0
      %v2058 = vadd.f32 %v1922, %v2057
      %v2059 = vpop.f32.mrf.mxu0
      %v2060 = vadd.f32 %v1926, %v2059
      %2061 = vmatprep.mubr.bf16.mxu0 0
      %2062 = vmatmul.mubr.bf16.gmra.mxu0 %v1887
      %v2063 = vpop.f32.mrf.mxu0
      %v2064 = vadd.f32 %v1922, %v2063
      %v2065 = vpop.f32.mrf.mxu0
      %v2066 = vadd.f32 %v1926, %v2065
      %v2067 = vpop.f32.mrf.mxu0
      %v2068 = vadd.f32 %v1922, %v2067
      %v2069 = vpop.f32.mrf.mxu0
      %v2070 = vadd.f32 %v1926, %v2069
      %2071 = vmatprep.mubr.bf16.mxu0 0
      %2072 = vmatmul.mubr.bf16.gmra.mxu0 %v1888
      %v2073 = vpop.f32.mrf.mxu0
      %v2074 = vadd.f32 %v1922, %v2073
      %v2075 = vpop.f32.mrf.mxu0
      %v2076 = vadd.f32 %v1926, %v2075
      %v2077 = vpop.f32.mrf.mxu0
      %v2078 = vadd.f32 %v1922, %v2077
      %v2079 = vpop.f32.mrf.mxu0
      %v2080 = vadd.f32 %v1926, %v2079
      %2081 = vmatprep.mubr.bf16.mxu0 0
      %2082 = vmatmul.mubr.bf16.gmra.mxu0 %v1889
      %v2083 = vpop.f32.mrf.mxu0
      %v2084 = vadd.f32 %v1922, %v2083
      %v2085 = vpop.f32.mrf.mxu0
      %v2086 = vadd.f32 %v1926, %v2085
      %v2087 = vpop.f32.mrf.mxu0
      %v2088 = vadd.f32 %v1922, %v2087
      %v2089 = vpop.f32.mrf.mxu0
      %v2090 = vadd.f32 %v1926, %v2089
      %2091 = vmatprep.mubr.bf16.mxu0 0
      %2092 = vmatmul.mubr.bf16.gmra.mxu0 %v1890
      %v2093 = vpop.f32.mrf.mxu0
      %v2094 = vadd.f32 %v1922, %v2093
      %v2095 = vpop.f32.mrf.mxu0
      %v2096 = vadd.f32 %v1926, %v2095
      %v2097 = vpop.f32.mrf.mxu0
      %v2098 = vadd.f32 %v1922, %v2097
      %v2099 = vpop.f32.mrf.mxu0
      %v2100 = vadd.f32 %v1926, %v2099
      %2101 = vmatprep.mubr.bf16.mxu0 0
      %2102 = vmatmul.mubr.bf16.gmra.mxu0 %v1891
      %v2103 = vpop.f32.mrf.mxu0
      %v2104 = vadd.f32 %v1922, %v2103
      %v2105 = vpop.f32.mrf.mxu0
      %v2106 = vadd.f32 %v1926, %v2105
      %v2107 = vpop.f32.mrf.mxu0
      %v2108 = vadd.f32 %v1922, %v2107
      %v2109 = vpop.f32.mrf.mxu0
      %v2110 = vadd.f32 %v1926, %v2109
      %2111 = vmatprep.mubr.bf16.mxu0 0
      %2112 = vmatmul.mubr.bf16.gmra.mxu0 %v1892
      %v2113 = vpop.f32.mrf.mxu0
      %v2114 = vadd.f32 %v1922, %v2113
      %v2115 = vpop.f32.mrf.mxu0
      %v2116 = vadd.f32 %v1926, %v2115
      %v2117 = vpop.f32.mrf.mxu0
      %v2118 = vadd.f32 %v1922, %v2117
      %v2119 = vpop.f32.mrf.mxu0
      %v2120 = vadd.f32 %v1926, %v2119
      %2121 = vmatprep.mubr.bf16.mxu0 0
      %2122 = vmatmul.mubr.bf16.gmra.mxu0 %v1893
      %v2123 = vpop.f32.mrf.mxu0
      %v2124 = vadd.f32 %v1922, %v2123
      %v2125 = vpop.f32.mrf.mxu0
      %v2126 = vadd.f32 %v1926, %v2125
      %v2127 = vpop.f32.mrf.mxu0
      %v2128 = vadd.f32 %v1922, %v2127
      %v2129 = vpop.f32.mrf.mxu0
      %v2130 = vadd.f32 %v1926, %v2129
      %2131 = vmatprep.mubr.bf16.mxu0 0
      %2132 = vmatmul.mubr.bf16.gmra.mxu0 %v1894
      %v2133 = vpop.f32.mrf.mxu0
      %v2134 = vadd.f32 %v1922, %v2133
      %v2135 = vpop.f32.mrf.mxu0
      %v2136 = vadd.f32 %v1926, %v2135
      %v2137 = vpop.f32.mrf.mxu0
      %v2138 = vadd.f32 %v1922, %v2137
      %v2139 = vpop.f32.mrf.mxu0
      %v2140 = vadd.f32 %v1926, %v2139
      %2141 = vmatprep.mubr.bf16.mxu0 0
      %2142 = vmatmul.mubr.bf16.gmra.mxu0 %v1895
      %v2143 = vpop.f32.mrf.mxu0
      %v2144 = vadd.f32 %v1922, %v2143
      %v2145 = vpop.f32.mrf.mxu0
      %v2146 = vadd.f32 %v1926, %v2145
      %v2147 = vpop.f32.mrf.mxu0
      %v2148 = vadd.f32 %v1922, %v2147
      %v2149 = vpop.f32.mrf.mxu0
      %v2150 = vadd.f32 %v1926, %v2149
      %2151 = vmatprep.mubr.bf16.mxu0 0
      %2152 = vmatmul.mubr.bf16.gmra.mxu0 %v1896
      %v2153 = vpop.f32.mrf.mxu0
      %v2154 = vadd.f32 %v1922, %v2153
      %v2155 = vpop.f32.mrf.mxu0
      %v2156 = vadd.f32 %v1926, %v2155
      %v2157 = vpop.f32.mrf.mxu0
      %v2158 = vadd.f32 %v1922, %v2157
      %v2159 = vpop.f32.mrf.mxu0
      %v2160 = vadd.f32 %v1926, %v2159
      %2161 = vmatprep.mubr.bf16.mxu0 0
      %2162 = vmatmul.mubr.bf16.gmra.mxu0 %v1897
      %v2163 = vpop.f32.mrf.mxu0
      %v2164 = vadd.f32 %v1922, %v2163
      %v2165 = vpop.f32.mrf.mxu0
      %v2166 = vadd.f32 %v1926, %v2165
      %v2167 = vpop.f32.mrf.mxu0
      %v2168 = vadd.f32 %v1922, %v2167
      %v2169 = vpop.f32.mrf.mxu0
      %v2170 = vadd.f32 %v1926, %v2169
      %2171 = vmatprep.mubr.bf16.mxu0 0
      %2172 = vmatmul.mubr.bf16.gmra.mxu0 %v1898
      %v2173 = vpop.f32.mrf.mxu0
      %v2174 = vadd.f32 %v1922, %v2173
      %v2175 = vpop.f32.mrf.mxu0
      %v2176 = vadd.f32 %v1926, %v2175
      %v2177 = vpop.f32.mrf.mxu0
      %v2178 = vadd.f32 %v1922, %v2177
      %v2179 = vpop.f32.mrf.mxu0
      %v2180 = vadd.f32 %v1926, %v2179
      %2181 = vmatprep.mubr.bf16.mxu0 0
      %2182 = vmatmul.mubr.bf16.gmra.mxu0 %v1899
      %v2183 = vpop.f32.mrf.mxu0
      %v2184 = vadd.f32 %v1922, %v2183
      %v2185 = vpop.f32.mrf.mxu0
      %v2186 = vadd.f32 %v1926, %v2185
      %v2187 = vpop.f32.mrf.mxu0
      %v2188 = vadd.f32 %v1922, %v2187
      %v2189 = vpop.f32.mrf.mxu0
      %v2190 = vadd.f32 %v1926, %v2189
      %2191 = vmatprep.mubr.bf16.mxu0 0
      %2192 = vmatmul.mubr.bf16.gmra.mxu0 %v1900
      %v2193 = vpop.f32.mrf.mxu0
      %v2194 = vadd.f32 %v1922, %v2193
      %v2195 = vpop.f32.mrf.mxu0
      %v2196 = vadd.f32 %v1926, %v2195
      %v2197 = vpop.f32.mrf.mxu0
      %v2198 = vadd.f32 %v1922, %v2197
      %v2199 = vpop.f32.mrf.mxu0
      %v2200 = vadd.f32 %v1926, %v2199
      %2201 = vdwg.mxu0
      %v2202 = vmax.f32 %v2044, 0.0
      %v2203 = vmax.f32 %v2046, 0.0
      %v2204 = vmax.f32 %v2048, 0.0
      %v2205 = vmax.f32 %v2050, 0.0
      %v2206 = vmax.f32 %v2054, 0.0
      %v2207 = vmax.f32 %v2056, 0.0
      %v2208 = vmax.f32 %v2058, 0.0
      %v2209 = vmax.f32 %v2060, 0.0
      %v2210 = vmax.f32 %v2064, 0.0
      %v2211 = vmax.f32 %v2066, 0.0
      %v2212 = vmax.f32 %v2068, 0.0
      %v2213 = vmax.f32 %v2070, 0.0
      %v2214 = vmax.f32 %v2074, 0.0
      %v2215 = vmax.f32 %v2076, 0.0
      %v2216 = vmax.f32 %v2078, 0.0
      %v2217 = vmax.f32 %v2080, 0.0
      %v2218 = vmax.f32 %v2084, 0.0
      %v2219 = vmax.f32 %v2086, 0.0
      %v2220 = vmax.f32 %v2088, 0.0
      %v2221 = vmax.f32 %v2090, 0.0
      %v2222 = vmax.f32 %v2094, 0.0
      %v2223 = vmax.f32 %v2096, 0.0
      %v2224 = vmax.f32 %v2098, 0.0
      %v2225 = vmax.f32 %v2100, 0.0
      %v2226 = vmax.f32 %v2104, 0.0
      %v2227 = vmax.f32 %v2106, 0.0
      %v2228 = vmax.f32 %v2108, 0.0
      %v2229 = vmax.f32 %v2110, 0.0
      %v2230 = vmax.f32 %v2114, 0.0
      %v2231 = vmax.f32 %v2116, 0.0
      %v2232 = vmax.f32 %v2118, 0.0
      %v2233 = vmax.f32 %v2120, 0.0
      %v2234 = vmax.f32 %v2124, 0.0
      %v2235 = vmax.f32 %v2126, 0.0
      %v2236 = vmax.f32 %v2128, 0.0
      %v2237 = vmax.f32 %v2130, 0.0
      %v2238 = vmax.f32 %v2134, 0.0
      %v2239 = vmax.f32 %v2136, 0.0
      %v2240 = vmax.f32 %v2138, 0.0
      %v2241 = vmax.f32 %v2140, 0.0
      %v2242 = vmax.f32 %v2144, 0.0
      %v2243 = vmax.f32 %v2146, 0.0
      %v2244 = vmax.f32 %v2148, 0.0
      %v2245 = vmax.f32 %v2150, 0.0
      %v2246 = vmax.f32 %v2154, 0.0
      %v2247 = vmax.f32 %v2156, 0.0
      %v2248 = vmax.f32 %v2158, 0.0
      %v2249 = vmax.f32 %v2160, 0.0
      %v2250 = vmax.f32 %v2164, 0.0
      %v2251 = vmax.f32 %v2166, 0.0
      %v2252 = vmax.f32 %v2168, 0.0
      %v2253 = vmax.f32 %v2170, 0.0
      %v2254 = vmax.f32 %v2174, 0.0
      %v2255 = vmax.f32 %v2176, 0.0
      %v2256 = vmax.f32 %v2178, 0.0
      %v2257 = vmax.f32 %v2180, 0.0
      %v2258 = vmax.f32 %v2184, 0.0
      %v2259 = vmax.f32 %v2186, 0.0
      %v2260 = vmax.f32 %v2188, 0.0
      %v2261 = vmax.f32 %v2190, 0.0
      %v2262 = vmax.f32 %v2194, 0.0
      %v2263 = vmax.f32 %v2196, 0.0
      %v2264 = vmax.f32 %v2198, 0.0
      %v2265 = vmax.f32 %v2200, 0.0
      %v2266 = vpack.c.bf16 %v2204, %v2202
      %v2267 = vpack.c.bf16 %v2205, %v2203
      %v2268 = vpack.c.bf16 %v2208, %v2206
      %v2269 = vpack.c.bf16 %v2209, %v2207
      %v2270 = vpack.c.bf16 %v2212, %v2210
      %v2271 = vpack.c.bf16 %v2213, %v2211
      %v2272 = vpack.c.bf16 %v2216, %v2214
      %v2273 = vpack.c.bf16 %v2217, %v2215
      %v2274 = vpack.c.bf16 %v2220, %v2218
      %v2275 = vpack.c.bf16 %v2221, %v2219
      %v2276 = vpack.c.bf16 %v2224, %v2222
      %v2277 = vpack.c.bf16 %v2225, %v2223
      %v2278 = vpack.c.bf16 %v2228, %v2226
      %v2279 = vpack.c.bf16 %v2229, %v2227
      %v2280 = vpack.c.bf16 %v2232, %v2230
      %v2281 = vpack.c.bf16 %v2233, %v2231
      %v2282 = vpack.c.bf16 %v2236, %v2234
      %v2283 = vpack.c.bf16 %v2237, %v2235
      %v2284 = vpack.c.bf16 %v2240, %v2238
      %v2285 = vpack.c.bf16 %v2241, %v2239
      %v2286 = vpack.c.bf16 %v2244, %v2242
      %v2287 = vpack.c.bf16 %v2245, %v2243
      %v2288 = vpack.c.bf16 %v2248, %v2246
      %v2289 = vpack.c.bf16 %v2249, %v2247
      %v2290 = vpack.c.bf16 %v2252, %v2250
      %v2291 = vpack.c.bf16 %v2253, %v2251
      %v2292 = vpack.c.bf16 %v2256, %v2254
      %v2293 = vpack.c.bf16 %v2257, %v2255
      %v2294 = vpack.c.bf16 %v2260, %v2258
      %v2295 = vpack.c.bf16 %v2261, %v2259
      %v2296 = vpack.c.bf16 %v2264, %v2262
      %v2297 = vpack.c.bf16 %v2265, %v2263
      %v2298 = vld [vmem:[%s8] sm:$0xf]
      %v2299 = vld [vmem:[%s8 + $0x4] sm:$0xf]
      %v2300 = vld [vmem:[%s8 + $0x8] sm:$0xf]
      %v2301 = vld [vmem:[%s8 + $0xc] sm:$0xf]
      %v2302 = vld [vmem:[%s8 + $0x10] sm:$0xf]
      %v2303 = vld [vmem:[%s8 + $0x14] sm:$0xf]
      %v2304 = vld [vmem:[%s8 + $0x18] sm:$0xf]
      %v2305 = vld [vmem:[%s8 + $0x1c] sm:$0xf]
      %v2306 = vld [vmem:[%s8 + $0x20] sm:$0xf]
      %v2307 = vld [vmem:[%s8 + $0x24] sm:$0xf]
      %v2308 = vld [vmem:[%s8 + $0x28] sm:$0xf]
      %v2309 = vld [vmem:[%s8 + $0x2c] sm:$0xf]
      %v2310 = vld [vmem:[%s8 + $0x30] sm:$0xf]
      %v2311 = vld [vmem:[%s8 + $0x34] sm:$0xf]
      %v2312 = vld [vmem:[%s8 + $0x38] sm:$0xf]
      %v2313 = vld [vmem:[%s8 + $0x3c] sm:$0xf]
      %v2314 = vld [vmem:[%s8 + $0x40] sm:$0xf]
      %v2315 = vld [vmem:[%s8 + $0x44] sm:$0xf]
      %v2316 = vld [vmem:[%s8 + $0x48] sm:$0xf]
      %v2317 = vld [vmem:[%s8 + $0x4c] sm:$0xf]
      %v2318 = vld [vmem:[%s8 + $0x50] sm:$0xf]
      %v2319 = vld [vmem:[%s8 + $0x54] sm:$0xf]
      %v2320 = vld [vmem:[%s8 + $0x58] sm:$0xf]
      %v2321 = vld [vmem:[%s8 + $0x5c] sm:$0xf]
      %v2322 = vld [vmem:[%s9] sm:$0x1]
      %v2324 = vlaneseq
      %v2325 = vshrl.u32 %v2324, 7
      %v2326 = vsub.s32 0, %v2325
      %v2327 = vrot.slane %v2322, %v2326
      %v2353 = vunpack.c.l.b16 %v2298
      %v2354 = vunpack.c.l.b16 %v2299
      %v2355 = vunpack.c.l.b16 %v2300
      %v2356 = vunpack.c.l.b16 %v2301
      %v2357 = vunpack.c.l.b16 %v2302
      %v2358 = vunpack.c.l.b16 %v2303
      %v2359 = vunpack.c.l.b16 %v2304
      %v2360 = vunpack.c.l.b16 %v2305
      %v2361 = vunpack.c.l.b16 %v2306
      %v2362 = vunpack.c.l.b16 %v2307
      %v2363 = vunpack.c.l.b16 %v2308
      %v2364 = vunpack.c.l.b16 %v2309
      %v2365 = vunpack.c.l.b16 %v2310
      %v2366 = vunpack.c.l.b16 %v2311
      %v2367 = vunpack.c.l.b16 %v2312
      %v2368 = vunpack.c.l.b16 %v2313
      %v2369 = vunpack.c.l.b16 %v2314
      %v2370 = vunpack.c.l.b16 %v2315
      %v2371 = vunpack.c.l.b16 %v2316
      %v2372 = vunpack.c.l.b16 %v2317
      %v2373 = vunpack.c.l.b16 %v2318
      %v2374 = vunpack.c.l.b16 %v2319
      %v2375 = vunpack.c.l.b16 %v2320
      %v2376 = vunpack.c.l.b16 %v2321
      %v2377 = vpack.c.b16 %v2354, %v2353
      %v2378 = vpack.c.b16 %v2356, %v2355
      %v2379 = vpack.c.b16 %v2358, %v2357
      %v2380 = vpack.c.b16 %v2360, %v2359
      %v2381 = vpack.c.b16 %v2362, %v2361
      %v2382 = vpack.c.b16 %v2364, %v2363
      %v2383 = vpack.c.b16 %v2366, %v2365
      %v2384 = vpack.c.b16 %v2368, %v2367
      %v2385 = vpack.c.b16 %v2370, %v2369
      %v2386 = vpack.c.b16 %v2372, %v2371
      %v2387 = vpack.c.b16 %v2374, %v2373
      %v2388 = vpack.c.b16 %v2376, %v2375
      %vm2401 = vcmask 523264
      %v2403 = vsel %vm2401, %v2267, 0
      %v2406 = vsel %vm2401, %v2269, 0
      %v2409 = vsel %vm2401, %v2271, 0
      %v2412 = vsel %vm2401, %v2273, 0
      %v2415 = vsel %vm2401, %v2275, 0
      %v2418 = vsel %vm2401, %v2277, 0
      %v2421 = vsel %vm2401, %v2279, 0
      %v2424 = vsel %vm2401, %v2281, 0
      %v2427 = vsel %vm2401, %v2283, 0
      %v2430 = vsel %vm2401, %v2285, 0
      %v2433 = vsel %vm2401, %v2287, 0
      %v2436 = vsel %vm2401, %v2289, 0
      %v2439 = vsel %vm2401, %v2291, 0
      %v2442 = vsel %vm2401, %v2293, 0
      %v2445 = vsel %vm2401, %v2295, 0
      %v2448 = vsel %vm2401, %v2297, 0
      %2450 = vmatprep.subr.bf16.mxu0 0
      %2451 = vmatpush1.bf16.msra.mxu0 %v2384
      %2452 = vmatprep.subr.bf16.mxu0 0
      %2453 = vmatpush1.bf16.msra.mxu0 %v2383
      %2454 = vmatprep.subr.bf16.mxu0 0
      %2455 = vmatpush1.bf16.msra.mxu0 %v2382
      %2456 = vmatprep.subr.bf16.mxu0 0
      %2457 = vmatpush1.bf16.msra.mxu0 %v2381
      %2458 = vmatprep.subr.bf16.mxu0 0
      %2459 = vmatpush1.bf16.msra.mxu0 %v2380
      %2460 = vmatprep.subr.bf16.mxu0 0
      %2461 = vmatpush1.bf16.msra.mxu0 %v2379
      %2462 = vmatprep.subr.bf16.mxu0 0
      %2463 = vmatpush1.bf16.msra.mxu0 %v2378
      %2464 = vmatprep.subr.bf16.mxu0 0
      %2465 = vmatpush1.bf16.msra.mxu0 %v2377
      %2466 = vmatprep.subr.bf16.mxu0 0
      %2467 = vmatpush2.bf16.msra.mxu0 0
      %2468 = vmatprep.subr.bf16.mxu0 0
      %2469 = vmatpush2.bf16.msra.mxu0 0
      %2470 = vmatprep.subr.bf16.mxu0 0
      %2471 = vmatpush2.bf16.msra.mxu0 0
      %2472 = vmatprep.subr.bf16.mxu0 0
      %2473 = vmatpush2.bf16.msra.mxu0 0
      %2474 = vmatprep.subr.bf16.mxu0 0
      %2475 = vmatpush2.bf16.msra.mxu0 %v2388
      %2476 = vmatprep.subr.bf16.mxu0 0
      %2477 = vmatpush2.bf16.msra.mxu0 %v2387
      %2478 = vmatprep.subr.bf16.mxu0 0
      %2479 = vmatpush2.bf16.msra.mxu0 %v2386
      %2480 = vmatprep.subr.bf16.mxu0 0
      %2481 = vmatpush2.bf16.msra.mxu0 %v2385
      %2482 = vmatprep.mubr.bf16.mxu0 %v2403
      %2483 = vmatmul.mubr.bf16.gmra.mxu0 %v2266
      %v2484 = vpop.f32.mrf.mxu0
      %v2485 = vadd.f32 %v2327, %v2484
      %v2486 = vpop.f32.mrf.mxu0
      %v2487 = vpop.f32.mrf.mxu0
      %v2488 = vadd.f32 %v2327, %v2487
      %v2489 = vpop.f32.mrf.mxu0
      %2490 = vmatprep.mubr.bf16.mxu0 %v2406
      %2491 = vmatmul.mubr.bf16.gmra.mxu0 %v2268
      %v2492 = vpop.f32.mrf.mxu0
      %v2493 = vadd.f32 %v2327, %v2492
      %v2494 = vpop.f32.mrf.mxu0
      %v2495 = vpop.f32.mrf.mxu0
      %v2496 = vadd.f32 %v2327, %v2495
      %v2497 = vpop.f32.mrf.mxu0
      %2498 = vmatprep.mubr.bf16.mxu0 %v2409
      %2499 = vmatmul.mubr.bf16.gmra.mxu0 %v2270
      %v2500 = vpop.f32.mrf.mxu0
      %v2501 = vadd.f32 %v2327, %v2500
      %v2502 = vpop.f32.mrf.mxu0
      %v2503 = vpop.f32.mrf.mxu0
      %v2504 = vadd.f32 %v2327, %v2503
      %v2505 = vpop.f32.mrf.mxu0
      %2506 = vmatprep.mubr.bf16.mxu0 %v2412
      %2507 = vmatmul.mubr.bf16.gmra.mxu0 %v2272
      %v2508 = vpop.f32.mrf.mxu0
      %v2509 = vadd.f32 %v2327, %v2508
      %v2510 = vpop.f32.mrf.mxu0
      %v2511 = vpop.f32.mrf.mxu0
      %v2512 = vadd.f32 %v2327, %v2511
      %v2513 = vpop.f32.mrf.mxu0
      %2514 = vmatprep.mubr.bf16.mxu0 %v2415
      %2515 = vmatmul.mubr.bf16.gmra.mxu0 %v2274
      %v2516 = vpop.f32.mrf.mxu0
      %v2517 = vadd.f32 %v2327, %v2516
      %v2518 = vpop.f32.mrf.mxu0
      %v2519 = vpop.f32.mrf.mxu0
      %v2520 = vadd.f32 %v2327, %v2519
      %v2521 = vpop.f32.mrf.mxu0
      %2522 = vmatprep.mubr.bf16.mxu0 %v2418
      %2523 = vmatmul.mubr.bf16.gmra.mxu0 %v2276
      %v2524 = vpop.f32.mrf.mxu0
      %v2525 = vadd.f32 %v2327, %v2524
      %v2526 = vpop.f32.mrf.mxu0
      %v2527 = vpop.f32.mrf.mxu0
      %v2528 = vadd.f32 %v2327, %v2527
      %v2529 = vpop.f32.mrf.mxu0
      %2530 = vmatprep.mubr.bf16.mxu0 %v2421
      %2531 = vmatmul.mubr.bf16.gmra.mxu0 %v2278
      %v2532 = vpop.f32.mrf.mxu0
      %v2533 = vadd.f32 %v2327, %v2532
      %v2534 = vpop.f32.mrf.mxu0
      %v2535 = vpop.f32.mrf.mxu0
      %v2536 = vadd.f32 %v2327, %v2535
      %v2537 = vpop.f32.mrf.mxu0
      %2538 = vmatprep.mubr.bf16.mxu0 %v2424
      %2539 = vmatmul.mubr.bf16.gmra.mxu0 %v2280
      %v2540 = vpop.f32.mrf.mxu0
      %v2541 = vadd.f32 %v2327, %v2540
      %v2542 = vpop.f32.mrf.mxu0
      %v2543 = vpop.f32.mrf.mxu0
      %v2544 = vadd.f32 %v2327, %v2543
      %v2545 = vpop.f32.mrf.mxu0
      %2546 = vmatprep.mubr.bf16.mxu0 %v2427
      %2547 = vmatmul.mubr.bf16.gmra.mxu0 %v2282
      %v2548 = vpop.f32.mrf.mxu0
      %v2549 = vadd.f32 %v2327, %v2548
      %v2550 = vpop.f32.mrf.mxu0
      %v2551 = vpop.f32.mrf.mxu0
      %v2552 = vadd.f32 %v2327, %v2551
      %v2553 = vpop.f32.mrf.mxu0
      %2554 = vmatprep.mubr.bf16.mxu0 %v2430
      %2555 = vmatmul.mubr.bf16.gmra.mxu0 %v2284
      %v2556 = vpop.f32.mrf.mxu0
      %v2557 = vadd.f32 %v2327, %v2556
      %v2558 = vpop.f32.mrf.mxu0
      %v2559 = vpop.f32.mrf.mxu0
      %v2560 = vadd.f32 %v2327, %v2559
      %v2561 = vpop.f32.mrf.mxu0
      %2562 = vmatprep.mubr.bf16.mxu0 %v2433
      %2563 = vmatmul.mubr.bf16.gmra.mxu0 %v2286
      %v2564 = vpop.f32.mrf.mxu0
      %v2565 = vadd.f32 %v2327, %v2564
      %v2566 = vpop.f32.mrf.mxu0
      %v2567 = vpop.f32.mrf.mxu0
      %v2568 = vadd.f32 %v2327, %v2567
      %v2569 = vpop.f32.mrf.mxu0
      %2570 = vmatprep.mubr.bf16.mxu0 %v2436
      %2571 = vmatmul.mubr.bf16.gmra.mxu0 %v2288
      %v2572 = vpop.f32.mrf.mxu0
      %v2573 = vadd.f32 %v2327, %v2572
      %v2574 = vpop.f32.mrf.mxu0
      %v2575 = vpop.f32.mrf.mxu0
      %v2576 = vadd.f32 %v2327, %v2575
      %v2577 = vpop.f32.mrf.mxu0
      %2578 = vmatprep.mubr.bf16.mxu0 %v2439
      %2579 = vmatmul.mubr.bf16.gmra.mxu0 %v2290
      %v2580 = vpop.f32.mrf.mxu0
      %v2581 = vadd.f32 %v2327, %v2580
      %v2582 = vpop.f32.mrf.mxu0
      %v2583 = vpop.f32.mrf.mxu0
      %v2584 = vadd.f32 %v2327, %v2583
      %v2585 = vpop.f32.mrf.mxu0
      %2586 = vmatprep.mubr.bf16.mxu0 %v2442
      %2587 = vmatmul.mubr.bf16.gmra.mxu0 %v2292
      %v2588 = vpop.f32.mrf.mxu0
      %v2589 = vadd.f32 %v2327, %v2588
      %v2590 = vpop.f32.mrf.mxu0
      %v2591 = vpop.f32.mrf.mxu0
      %v2592 = vadd.f32 %v2327, %v2591
      %v2593 = vpop.f32.mrf.mxu0
      %2594 = vmatprep.mubr.bf16.mxu0 %v2445
      %2595 = vmatmul.mubr.bf16.gmra.mxu0 %v2294
      %v2596 = vpop.f32.mrf.mxu0
      %v2597 = vadd.f32 %v2327, %v2596
      %v2598 = vpop.f32.mrf.mxu0
      %v2599 = vpop.f32.mrf.mxu0
      %v2600 = vadd.f32 %v2327, %v2599
      %v2601 = vpop.f32.mrf.mxu0
      %2602 = vmatprep.mubr.bf16.mxu0 %v2448
      %2603 = vmatmul.mubr.bf16.gmra.mxu0 %v2296
      %v2604 = vpop.f32.mrf.mxu0
      %v2605 = vadd.f32 %v2327, %v2604
      %v2606 = vpop.f32.mrf.mxu0
      %v2607 = vpop.f32.mrf.mxu0
      %v2608 = vadd.f32 %v2327, %v2607
      %v2609 = vpop.f32.mrf.mxu0
      %2610 = vdwg.mxu0
      %vm2611 = vcmp.eq.s32.totalorder %v690, 0
      %2613 = vset.pattern.permute.xlu0 0
      %2614 = vperm.xlu0 %2613, %v1783
      %v2615 = vpop.permute.xlu0 %2614
      %2618 = vset.pattern.permute.xlu0 0
      %2619 = vperm.xlu0 %2618, %v1784
      %v2620 = vpop.permute.xlu0 %2619
      %2623 = vset.pattern.permute.xlu0 0
      %2624 = vperm.xlu0 %2623, %v1785
      %v2625 = vpop.permute.xlu0 %2624
      %2628 = vset.pattern.permute.xlu0 0
      %2629 = vperm.xlu0 %2628, %v1786
      %v2630 = vpop.permute.xlu0 %2629
      %2633 = vset.pattern.permute.xlu0 0
      %2634 = vperm.xlu0 %2633, %v1787
      %v2635 = vpop.permute.xlu0 %2634
      %2638 = vset.pattern.permute.xlu0 0
      %2639 = vperm.xlu0 %2638, %v1788
      %v2640 = vpop.permute.xlu0 %2639
      %2643 = vset.pattern.permute.xlu0 0
      %2644 = vperm.xlu0 %2643, %v1789
      %v2645 = vpop.permute.xlu0 %2644
      %2648 = vset.pattern.permute.xlu0 0
      %2649 = vperm.xlu0 %2648, %v1790
      %v2650 = vpop.permute.xlu0 %2649
      %2653 = vset.pattern.permute.xlu0 0
      %2654 = vperm.xlu0 %2653, %v1791
      %v2655 = vpop.permute.xlu0 %2654
      %2658 = vset.pattern.permute.xlu0 0
      %2659 = vperm.xlu0 %2658, %v1792
      %v2660 = vpop.permute.xlu0 %2659
      %2663 = vset.pattern.permute.xlu0 0
      %2664 = vperm.xlu0 %2663, %v1793
      %v2665 = vpop.permute.xlu0 %2664
      %2668 = vset.pattern.permute.xlu0 0
      %2669 = vperm.xlu0 %2668, %v1794
      %v2670 = vpop.permute.xlu0 %2669
      %2673 = vset.pattern.permute.xlu0 0
      %2674 = vperm.xlu0 %2673, %v1795
      %v2675 = vpop.permute.xlu0 %2674
      %2678 = vset.pattern.permute.xlu0 0
      %2679 = vperm.xlu0 %2678, %v1796
      %v2680 = vpop.permute.xlu0 %2679
      %2683 = vset.pattern.permute.xlu0 0
      %2684 = vperm.xlu0 %2683, %v1797
      %v2685 = vpop.permute.xlu0 %2684
      %2688 = vset.pattern.permute.xlu0 0
      %2689 = vperm.xlu0 %2688, %v1798
      %v2690 = vpop.permute.xlu0 %2689
      %2693 = vset.pattern.permute.xlu0 0
      %2694 = vperm.xlu0 %2693, %v1799
      %v2695 = vpop.permute.xlu0 %2694
      %2698 = vset.pattern.permute.xlu0 0
      %2699 = vperm.xlu0 %2698, %v1800
      %v2700 = vpop.permute.xlu0 %2699
      %2703 = vset.pattern.permute.xlu0 0
      %2704 = vperm.xlu0 %2703, %v1801
      %v2705 = vpop.permute.xlu0 %2704
      %2708 = vset.pattern.permute.xlu0 0
      %2709 = vperm.xlu0 %2708, %v1802
      %v2710 = vpop.permute.xlu0 %2709
      %2713 = vset.pattern.permute.xlu0 0
      %2714 = vperm.xlu0 %2713, %v1803
      %v2715 = vpop.permute.xlu0 %2714
      %2718 = vset.pattern.permute.xlu0 0
      %2719 = vperm.xlu0 %2718, %v1804
      %v2720 = vpop.permute.xlu0 %2719
      %2723 = vset.pattern.permute.xlu0 0
      %2724 = vperm.xlu0 %2723, %v1805
      %v2725 = vpop.permute.xlu0 %2724
      %2728 = vset.pattern.permute.xlu0 0
      %2729 = vperm.xlu0 %2728, %v1806
      %v2730 = vpop.permute.xlu0 %2729
      %2733 = vset.pattern.permute.xlu0 0
      %2734 = vperm.xlu0 %2733, %v1807
      %v2735 = vpop.permute.xlu0 %2734
      %2738 = vset.pattern.permute.xlu0 0
      %2739 = vperm.xlu0 %2738, %v1808
      %v2740 = vpop.permute.xlu0 %2739
      %2743 = vset.pattern.permute.xlu0 0
      %2744 = vperm.xlu0 %2743, %v1809
      %v2745 = vpop.permute.xlu0 %2744
      %2748 = vset.pattern.permute.xlu0 0
      %2749 = vperm.xlu0 %2748, %v1810
      %v2750 = vpop.permute.xlu0 %2749
      %2753 = vset.pattern.permute.xlu0 0
      %2754 = vperm.xlu0 %2753, %v1811
      %v2755 = vpop.permute.xlu0 %2754
      %2758 = vset.pattern.permute.xlu0 0
      %2759 = vperm.xlu0 %2758, %v1812
      %v2760 = vpop.permute.xlu0 %2759
      %2763 = vset.pattern.permute.xlu0 0
      %2764 = vperm.xlu0 %2763, %v1813
      %v2765 = vpop.permute.xlu0 %2764
      %2768 = vset.pattern.permute.xlu0 0
      %2769 = vperm.xlu0 %2768, %v1814
      %v2770 = vpop.permute.xlu0 %2769
      %v2772 = vsel %vm2611, %v2615, 0.0
      %v2773 = vsel %vm2611, %v2620, 0.0
      %v2774 = vsel %vm2611, %v2625, 0.0
      %v2775 = vsel %vm2611, %v2630, 0.0
      %v2776 = vsel %vm2611, %v2635, 0.0
      %v2777 = vsel %vm2611, %v2640, 0.0
      %v2778 = vsel %vm2611, %v2645, 0.0
      %v2779 = vsel %vm2611, %v2650, 0.0
      %v2780 = vsel %vm2611, %v2655, 0.0
      %v2781 = vsel %vm2611, %v2660, 0.0
      %v2782 = vsel %vm2611, %v2665, 0.0
      %v2783 = vsel %vm2611, %v2670, 0.0
      %v2784 = vsel %vm2611, %v2675, 0.0
      %v2785 = vsel %vm2611, %v2680, 0.0
      %v2786 = vsel %vm2611, %v2685, 0.0
      %v2787 = vsel %vm2611, %v2690, 0.0
      %v2788 = vsel %vm2611, %v2695, 0.0
      %v2789 = vsel %vm2611, %v2700, 0.0
      %v2790 = vsel %vm2611, %v2705, 0.0
      %v2791 = vsel %vm2611, %v2710, 0.0
      %v2792 = vsel %vm2611, %v2715, 0.0
      %v2793 = vsel %vm2611, %v2720, 0.0
      %v2794 = vsel %vm2611, %v2725, 0.0
      %v2795 = vsel %vm2611, %v2730, 0.0
      %v2796 = vsel %vm2611, %v2735, 0.0
      %v2797 = vsel %vm2611, %v2740, 0.0
      %v2798 = vsel %vm2611, %v2745, 0.0
      %v2799 = vsel %vm2611, %v2750, 0.0
      %v2800 = vsel %vm2611, %v2755, 0.0
      %v2801 = vsel %vm2611, %v2760, 0.0
      %v2802 = vsel %vm2611, %v2765, 0.0
      %v2803 = vsel %vm2611, %v2770, 0.0
      %v2804 = vadd.f32 %v2485, %v2772
      %v2805 = vadd.f32 %v2488, %v2773
      %v2806 = vadd.f32 %v2493, %v2774
      %v2807 = vadd.f32 %v2496, %v2775
      %v2808 = vadd.f32 %v2501, %v2776
      %v2809 = vadd.f32 %v2504, %v2777
      %v2810 = vadd.f32 %v2509, %v2778
      %v2811 = vadd.f32 %v2512, %v2779
      %v2812 = vadd.f32 %v2517, %v2780
      %v2813 = vadd.f32 %v2520, %v2781
      %v2814 = vadd.f32 %v2525, %v2782
      %v2815 = vadd.f32 %v2528, %v2783
      %v2816 = vadd.f32 %v2533, %v2784
      %v2817 = vadd.f32 %v2536, %v2785
      %v2818 = vadd.f32 %v2541, %v2786
      %v2819 = vadd.f32 %v2544, %v2787
      %v2820 = vadd.f32 %v2549, %v2788
      %v2821 = vadd.f32 %v2552, %v2789
      %v2822 = vadd.f32 %v2557, %v2790
      %v2823 = vadd.f32 %v2560, %v2791
      %v2824 = vadd.f32 %v2565, %v2792
      %v2825 = vadd.f32 %v2568, %v2793
      %v2826 = vadd.f32 %v2573, %v2794
      %v2827 = vadd.f32 %v2576, %v2795
      %v2828 = vadd.f32 %v2581, %v2796
      %v2829 = vadd.f32 %v2584, %v2797
      %v2830 = vadd.f32 %v2589, %v2798
      %v2831 = vadd.f32 %v2592, %v2799
      %v2832 = vadd.f32 %v2597, %v2800
      %v2833 = vadd.f32 %v2600, %v2801
      %v2834 = vadd.f32 %v2605, %v2802
      %v2835 = vadd.f32 %v2608, %v2803
      %vm2836 = vcmp.eq.s32.totalorder %v690, 1
      %2838 = vset.pattern.permute.xlu0 1
      %2839 = vperm.xlu0 %2838, %v1815
      %v2840 = vpop.permute.xlu0 %2839
      %2843 = vset.pattern.permute.xlu0 1
      %2844 = vperm.xlu0 %2843, %v1816
      %v2845 = vpop.permute.xlu0 %2844
      %2848 = vset.pattern.permute.xlu0 1
      %2849 = vperm.xlu0 %2848, %v1817
      %v2850 = vpop.permute.xlu0 %2849
      %2853 = vset.pattern.permute.xlu0 1
      %2854 = vperm.xlu0 %2853, %v1818
      %v2855 = vpop.permute.xlu0 %2854
      %2858 = vset.pattern.permute.xlu0 1
      %2859 = vperm.xlu0 %2858, %v1819
      %v2860 = vpop.permute.xlu0 %2859
      %2863 = vset.pattern.permute.xlu0 1
      %2864 = vperm.xlu0 %2863, %v1820
      %v2865 = vpop.permute.xlu0 %2864
      %2868 = vset.pattern.permute.xlu0 1
      %2869 = vperm.xlu0 %2868, %v1821
      %v2870 = vpop.permute.xlu0 %2869
      %2873 = vset.pattern.permute.xlu0 1
      %2874 = vperm.xlu0 %2873, %v1822
      %v2875 = vpop.permute.xlu0 %2874
      %2878 = vset.pattern.permute.xlu0 1
      %2879 = vperm.xlu0 %2878, %v1823
      %v2880 = vpop.permute.xlu0 %2879
      %2883 = vset.pattern.permute.xlu0 1
      %2884 = vperm.xlu0 %2883, %v1824
      %v2885 = vpop.permute.xlu0 %2884
      %2888 = vset.pattern.permute.xlu0 1
      %2889 = vperm.xlu0 %2888, %v1825
      %v2890 = vpop.permute.xlu0 %2889
      %2893 = vset.pattern.permute.xlu0 1
      %2894 = vperm.xlu0 %2893, %v1826
      %v2895 = vpop.permute.xlu0 %2894
      %2898 = vset.pattern.permute.xlu0 1
      %2899 = vperm.xlu0 %2898, %v1827
      %v2900 = vpop.permute.xlu0 %2899
      %2903 = vset.pattern.permute.xlu0 1
      %2904 = vperm.xlu0 %2903, %v1828
      %v2905 = vpop.permute.xlu0 %2904
      %2908 = vset.pattern.permute.xlu0 1
      %2909 = vperm.xlu0 %2908, %v1829
      %v2910 = vpop.permute.xlu0 %2909
      %2913 = vset.pattern.permute.xlu0 1
      %2914 = vperm.xlu0 %2913, %v1830
      %v2915 = vpop.permute.xlu0 %2914
      %2918 = vset.pattern.permute.xlu0 1
      %2919 = vperm.xlu0 %2918, %v1831
      %v2920 = vpop.permute.xlu0 %2919
      %2923 = vset.pattern.permute.xlu0 1
      %2924 = vperm.xlu0 %2923, %v1832
      %v2925 = vpop.permute.xlu0 %2924
      %2928 = vset.pattern.permute.xlu0 1
      %2929 = vperm.xlu0 %2928, %v1833
      %v2930 = vpop.permute.xlu0 %2929
      %2933 = vset.pattern.permute.xlu0 1
      %2934 = vperm.xlu0 %2933, %v1834
      %v2935 = vpop.permute.xlu0 %2934
      %2938 = vset.pattern.permute.xlu0 1
      %2939 = vperm.xlu0 %2938, %v1835
      %v2940 = vpop.permute.xlu0 %2939
      %2943 = vset.pattern.permute.xlu0 1
      %2944 = vperm.xlu0 %2943, %v1836
      %v2945 = vpop.permute.xlu0 %2944
      %2948 = vset.pattern.permute.xlu0 1
      %2949 = vperm.xlu0 %2948, %v1837
      %v2950 = vpop.permute.xlu0 %2949
      %2953 = vset.pattern.permute.xlu0 1
      %2954 = vperm.xlu0 %2953, %v1838
      %v2955 = vpop.permute.xlu0 %2954
      %2958 = vset.pattern.permute.xlu0 1
      %2959 = vperm.xlu0 %2958, %v1839
      %v2960 = vpop.permute.xlu0 %2959
      %2963 = vset.pattern.permute.xlu0 1
      %2964 = vperm.xlu0 %2963, %v1840
      %v2965 = vpop.permute.xlu0 %2964
      %2968 = vset.pattern.permute.xlu0 1
      %2969 = vperm.xlu0 %2968, %v1841
      %v2970 = vpop.permute.xlu0 %2969
      %2973 = vset.pattern.permute.xlu0 1
      %2974 = vperm.xlu0 %2973, %v1842
      %v2975 = vpop.permute.xlu0 %2974
      %2978 = vset.pattern.permute.xlu0 1
      %2979 = vperm.xlu0 %2978, %v1843
      %v2980 = vpop.permute.xlu0 %2979
      %2983 = vset.pattern.permute.xlu0 1
      %2984 = vperm.xlu0 %2983, %v1844
      %v2985 = vpop.permute.xlu0 %2984
      %2988 = vset.pattern.permute.xlu0 1
      %2989 = vperm.xlu0 %2988, %v1845
      %v2990 = vpop.permute.xlu0 %2989
      %2993 = vset.pattern.permute.xlu0 1
      %2994 = vperm.xlu0 %2993, %v1846
      %v2995 = vpop.permute.xlu0 %2994
      %v2997 = vsel %vm2836, %v2840, 0.0
      %v2998 = vsel %vm2836, %v2845, 0.0
      %v2999 = vsel %vm2836, %v2850, 0.0
      %v3000 = vsel %vm2836, %v2855, 0.0
      %v3001 = vsel %vm2836, %v2860, 0.0
      %v3002 = vsel %vm2836, %v2865, 0.0
      %v3003 = vsel %vm2836, %v2870, 0.0
      %v3004 = vsel %vm2836, %v2875, 0.0
      %v3005 = vsel %vm2836, %v2880, 0.0
      %v3006 = vsel %vm2836, %v2885, 0.0
      %v3007 = vsel %vm2836, %v2890, 0.0
      %v3008 = vsel %vm2836, %v2895, 0.0
      %v3009 = vsel %vm2836, %v2900, 0.0
      %v3010 = vsel %vm2836, %v2905, 0.0
      %v3011 = vsel %vm2836, %v2910, 0.0
      %v3012 = vsel %vm2836, %v2915, 0.0
      %v3013 = vsel %vm2836, %v2920, 0.0
      %v3014 = vsel %vm2836, %v2925, 0.0
      %v3015 = vsel %vm2836, %v2930, 0.0
      %v3016 = vsel %vm2836, %v2935, 0.0
      %v3017 = vsel %vm2836, %v2940, 0.0
      %v3018 = vsel %vm2836, %v2945, 0.0
      %v3019 = vsel %vm2836, %v2950, 0.0
      %v3020 = vsel %vm2836, %v2955, 0.0
      %v3021 = vsel %vm2836, %v2960, 0.0
      %v3022 = vsel %vm2836, %v2965, 0.0
      %v3023 = vsel %vm2836, %v2970, 0.0
      %v3024 = vsel %vm2836, %v2975, 0.0
      %v3025 = vsel %vm2836, %v2980, 0.0
      %v3026 = vsel %vm2836, %v2985, 0.0
      %v3027 = vsel %vm2836, %v2990, 0.0
      %v3028 = vsel %vm2836, %v2995, 0.0
      %v3029 = vadd.f32 %v2804, %v2997
      %v3030 = vadd.f32 %v2805, %v2998
      %v3031 = vadd.f32 %v2806, %v2999
      %v3032 = vadd.f32 %v2807, %v3000
      %v3033 = vadd.f32 %v2808, %v3001
      %v3034 = vadd.f32 %v2809, %v3002
      %v3035 = vadd.f32 %v2810, %v3003
      %v3036 = vadd.f32 %v2811, %v3004
      %v3037 = vadd.f32 %v2812, %v3005
      %v3038 = vadd.f32 %v2813, %v3006
      %v3039 = vadd.f32 %v2814, %v3007
      %v3040 = vadd.f32 %v2815, %v3008
      %v3041 = vadd.f32 %v2816, %v3009
      %v3042 = vadd.f32 %v2817, %v3010
      %v3043 = vadd.f32 %v2818, %v3011
      %v3044 = vadd.f32 %v2819, %v3012
      %v3045 = vadd.f32 %v2820, %v3013
      %v3046 = vadd.f32 %v2821, %v3014
      %v3047 = vadd.f32 %v2822, %v3015
      %v3048 = vadd.f32 %v2823, %v3016
      %v3049 = vadd.f32 %v2824, %v3017
      %v3050 = vadd.f32 %v2825, %v3018
      %v3051 = vadd.f32 %v2826, %v3019
      %v3052 = vadd.f32 %v2827, %v3020
      %v3053 = vadd.f32 %v2828, %v3021
      %v3054 = vadd.f32 %v2829, %v3022
      %v3055 = vadd.f32 %v2830, %v3023
      %v3056 = vadd.f32 %v2831, %v3024
      %v3057 = vadd.f32 %v2832, %v3025
      %v3058 = vadd.f32 %v2833, %v3026
      %v3059 = vadd.f32 %v2834, %v3027
      %v3060 = vadd.f32 %v2835, %v3028
      %v3061 = vsel %vm657, 1, 0
      %v3062 = vsel %vm658, 1, 0
      %v3063 = vsel %vm659, 1, 0
      %v3064 = vsel %vm660, 1, 0
      %v3065 = vsel %vm661, 1, 0
      %v3066 = vsel %vm662, 1, 0
      %v3067 = vsel %vm663, 1, 0
      %v3068 = vsel %vm664, 1, 0
      %v3069 = vsel %vm665, 1, 0
      %v3070 = vsel %vm666, 1, 0
      %v3071 = vsel %vm667, 1, 0
      %v3072 = vsel %vm668, 1, 0
      %v3073 = vsel %vm669, 1, 0
      %v3074 = vsel %vm670, 1, 0
      %v3075 = vsel %vm671, 1, 0
      %v3076 = vsel %vm672, 1, 0
      %v3077 = vsel %vm673, 1, 0
      %v3078 = vsel %vm674, 1, 0
      %v3079 = vsel %vm675, 1, 0
      %v3080 = vsel %vm676, 1, 0
      %v3081 = vsel %vm677, 1, 0
      %v3082 = vsel %vm678, 1, 0
      %v3083 = vsel %vm679, 1, 0
      %v3084 = vsel %vm680, 1, 0
      %v3085 = vsel %vm681, 1, 0
      %v3086 = vsel %vm682, 1, 0
      %v3087 = vsel %vm683, 1, 0
      %v3088 = vsel %vm684, 1, 0
      %v3089 = vsel %vm685, 1, 0
      %v3090 = vsel %vm686, 1, 0
      %v3091 = vsel %vm687, 1, 0
      %v3092 = vsel %vm688, 1, 0
      %vm3093 = vcmp.eq.s32.totalorder %v3061, 1
      %vm3094 = vcmp.eq.s32.totalorder %v3062, 1
      %vm3095 = vcmp.eq.s32.totalorder %v3063, 1
      %vm3096 = vcmp.eq.s32.totalorder %v3064, 1
      %vm3097 = vcmp.eq.s32.totalorder %v3065, 1
      %vm3098 = vcmp.eq.s32.totalorder %v3066, 1
      %vm3099 = vcmp.eq.s32.totalorder %v3067, 1
      %vm3100 = vcmp.eq.s32.totalorder %v3068, 1
      %vm3101 = vcmp.eq.s32.totalorder %v3069, 1
      %vm3102 = vcmp.eq.s32.totalorder %v3070, 1
      %vm3103 = vcmp.eq.s32.totalorder %v3071, 1
      %vm3104 = vcmp.eq.s32.totalorder %v3072, 1
      %vm3105 = vcmp.eq.s32.totalorder %v3073, 1
      %vm3106 = vcmp.eq.s32.totalorder %v3074, 1
      %vm3107 = vcmp.eq.s32.totalorder %v3075, 1
      %vm3108 = vcmp.eq.s32.totalorder %v3076, 1
      %vm3109 = vcmp.eq.s32.totalorder %v3077, 1
      %vm3110 = vcmp.eq.s32.totalorder %v3078, 1
      %vm3111 = vcmp.eq.s32.totalorder %v3079, 1
      %vm3112 = vcmp.eq.s32.totalorder %v3080, 1
      %vm3113 = vcmp.eq.s32.totalorder %v3081, 1
      %vm3114 = vcmp.eq.s32.totalorder %v3082, 1
      %vm3115 = vcmp.eq.s32.totalorder %v3083, 1
      %vm3116 = vcmp.eq.s32.totalorder %v3084, 1
      %vm3117 = vcmp.eq.s32.totalorder %v3085, 1
      %vm3118 = vcmp.eq.s32.totalorder %v3086, 1
      %vm3119 = vcmp.eq.s32.totalorder %v3087, 1
      %vm3120 = vcmp.eq.s32.totalorder %v3088, 1
      %vm3121 = vcmp.eq.s32.totalorder %v3089, 1
      %vm3122 = vcmp.eq.s32.totalorder %v3090, 1
      %vm3123 = vcmp.eq.s32.totalorder %v3091, 1
      %vm3124 = vcmp.eq.s32.totalorder %v3092, 1
      %v3125 = vsel %vm3093, 0.0, %v3029
      %v3126 = vsel %vm3094, 0.0, %v3030
      %v3127 = vsel %vm3095, 0.0, %v3031
      %v3128 = vsel %vm3096, 0.0, %v3032
      %v3129 = vsel %vm3097, 0.0, %v3033
      %v3130 = vsel %vm3098, 0.0, %v3034
      %v3131 = vsel %vm3099, 0.0, %v3035
      %v3132 = vsel %vm3100, 0.0, %v3036
      %v3133 = vsel %vm3101, 0.0, %v3037
      %v3134 = vsel %vm3102, 0.0, %v3038
      %v3135 = vsel %vm3103, 0.0, %v3039
      %v3136 = vsel %vm3104, 0.0, %v3040
      %v3137 = vsel %vm3105, 0.0, %v3041
      %v3138 = vsel %vm3106, 0.0, %v3042
      %v3139 = vsel %vm3107, 0.0, %v3043
      %v3140 = vsel %vm3108, 0.0, %v3044
      %v3141 = vsel %vm3109, 0.0, %v3045
      %v3142 = vsel %vm3110, 0.0, %v3046
      %v3143 = vsel %vm3111, 0.0, %v3047
      %v3144 = vsel %vm3112, 0.0, %v3048
      %v3145 = vsel %vm3113, 0.0, %v3049
      %v3146 = vsel %vm3114, 0.0, %v3050
      %v3147 = vsel %vm3115, 0.0, %v3051
      %v3148 = vsel %vm3116, 0.0, %v3052
      %v3149 = vsel %vm3117, 0.0, %v3053
      %v3150 = vsel %vm3118, 0.0, %v3054
      %v3151 = vsel %vm3119, 0.0, %v3055
      %v3152 = vsel %vm3120, 0.0, %v3056
      %v3153 = vsel %vm3121, 0.0, %v3057
      %v3154 = vsel %vm3122, 0.0, %v3058
      %v3155 = vsel %vm3123, 0.0, %v3059
      %v3156 = vsel %vm3124, 0.0, %v3060
      %3157 = vst [vmem:[%s486] sm:$0xff] %v3125
      %3158 = vst [vmem:[%s486 + $0x8] sm:$0xff] %v3126
      %3159 = vst [vmem:[%s486 + $0x10] sm:$0xff] %v3127
      %3160 = vst [vmem:[%s486 + $0x18] sm:$0xff] %v3128
      %3161 = vst [vmem:[%s486 + $0x20] sm:$0xff] %v3129
      %3162 = vst [vmem:[%s486 + $0x28] sm:$0xff] %v3130
      %3163 = vst [vmem:[%s486 + $0x30] sm:$0xff] %v3131
      %3164 = vst [vmem:[%s486 + $0x38] sm:$0xff] %v3132
      %3165 = vst [vmem:[%s486 + $0x40] sm:$0xff] %v3133
      %3166 = vst [vmem:[%s486 + $0x48] sm:$0xff] %v3134
      %3167 = vst [vmem:[%s486 + $0x50] sm:$0xff] %v3135
      %3168 = vst [vmem:[%s486 + $0x58] sm:$0xff] %v3136
      %3169 = vst [vmem:[%s486 + $0x60] sm:$0xff] %v3137
      %3170 = vst [vmem:[%s486 + $0x68] sm:$0xff] %v3138
      %3171 = vst [vmem:[%s486 + $0x70] sm:$0xff] %v3139
      %3172 = vst [vmem:[%s486 + $0x78] sm:$0xff] %v3140
      %3173 = vst [vmem:[%s486 + $0x80] sm:$0xff] %v3141
      %3174 = vst [vmem:[%s486 + $0x88] sm:$0xff] %v3142
      %3175 = vst [vmem:[%s486 + $0x90] sm:$0xff] %v3143
      %3176 = vst [vmem:[%s486 + $0x98] sm:$0xff] %v3144
      %3177 = vst [vmem:[%s486 + $0xa0] sm:$0xff] %v3145
      %3178 = vst [vmem:[%s486 + $0xa8] sm:$0xff] %v3146
      %3179 = vst [vmem:[%s486 + $0xb0] sm:$0xff] %v3147
      %3180 = vst [vmem:[%s486 + $0xb8] sm:$0xff] %v3148
      %3181 = vst [vmem:[%s486 + $0xc0] sm:$0xff] %v3149
      %3182 = vst [vmem:[%s486 + $0xc8] sm:$0xff] %v3150
      %3183 = vst [vmem:[%s486 + $0xd0] sm:$0xff] %v3151
      %3184 = vst [vmem:[%s486 + $0xd8] sm:$0xff] %v3152
      %3185 = vst [vmem:[%s486 + $0xe0] sm:$0xff] %v3153
      %3186 = vst [vmem:[%s486 + $0xe8] sm:$0xff] %v3154
      %3187 = vst [vmem:[%s486 + $0xf0] sm:$0xff] %v3155
      %3188 = vst [vmem:[%s486 + $0xf8] sm:$0xff] %v3156
      %v3189 = vlaneseq
      %v3190 = vshrl.u32 %v3189, 7
      %v3191 = vsub.s32 0, %v3190
      %v3192 = vrot.slane %v586, %v3191
      %v3193 = vmul.f32 %v2615, %v3192
      %v3194 = vmul.f32 %v2620, %v3192
      %v3195 = vmul.f32 %v2625, %v3192
      %v3196 = vmul.f32 %v2630, %v3192
      %v3197 = vmul.f32 %v2635, %v3192
      %v3198 = vmul.f32 %v2640, %v3192
      %v3199 = vmul.f32 %v2645, %v3192
      %v3200 = vmul.f32 %v2650, %v3192
      %v3201 = vmul.f32 %v2655, %v3192
      %v3202 = vmul.f32 %v2660, %v3192
      %v3203 = vmul.f32 %v2665, %v3192
      %v3204 = vmul.f32 %v2670, %v3192
      %v3205 = vmul.f32 %v2675, %v3192
      %v3206 = vmul.f32 %v2680, %v3192
      %v3207 = vmul.f32 %v2685, %v3192
      %v3208 = vmul.f32 %v2690, %v3192
      %v3209 = vmul.f32 %v2695, %v3192
      %v3210 = vmul.f32 %v2700, %v3192
      %v3211 = vmul.f32 %v2705, %v3192
      %v3212 = vmul.f32 %v2710, %v3192
      %v3213 = vmul.f32 %v2715, %v3192
      %v3214 = vmul.f32 %v2720, %v3192
      %v3215 = vmul.f32 %v2725, %v3192
      %v3216 = vmul.f32 %v2730, %v3192
      %v3217 = vmul.f32 %v2735, %v3192
      %v3218 = vmul.f32 %v2740, %v3192
      %v3219 = vmul.f32 %v2745, %v3192
      %v3220 = vmul.f32 %v2750, %v3192
      %v3221 = vmul.f32 %v2755, %v3192
      %v3222 = vmul.f32 %v2760, %v3192
      %v3223 = vmul.f32 %v2765, %v3192
      %v3224 = vmul.f32 %v2770, %v3192
      %v3225 = vlaneseq
      %v3226 = vshrl.u32 %v3225, 7
      %v3227 = vsub.s32 1, %v3226
      %v3228 = vrot.slane %v586, %v3227
      %v3229 = vadd.f32 %v3193, %v3228
      %v3230 = vadd.f32 %v3194, %v3228
      %v3231 = vadd.f32 %v3195, %v3228
      %v3232 = vadd.f32 %v3196, %v3228
      %v3233 = vadd.f32 %v3197, %v3228
      %v3234 = vadd.f32 %v3198, %v3228
      %v3235 = vadd.f32 %v3199, %v3228
      %v3236 = vadd.f32 %v3200, %v3228
      %v3237 = vadd.f32 %v3201, %v3228
      %v3238 = vadd.f32 %v3202, %v3228
      %v3239 = vadd.f32 %v3203, %v3228
      %v3240 = vadd.f32 %v3204, %v3228
      %v3241 = vadd.f32 %v3205, %v3228
      %v3242 = vadd.f32 %v3206, %v3228
      %v3243 = vadd.f32 %v3207, %v3228
      %v3244 = vadd.f32 %v3208, %v3228
      %v3245 = vadd.f32 %v3209, %v3228
      %v3246 = vadd.f32 %v3210, %v3228
      %v3247 = vadd.f32 %v3211, %v3228
      %v3248 = vadd.f32 %v3212, %v3228
      %v3249 = vadd.f32 %v3213, %v3228
      %v3250 = vadd.f32 %v3214, %v3228
      %v3251 = vadd.f32 %v3215, %v3228
      %v3252 = vadd.f32 %v3216, %v3228
      %v3253 = vadd.f32 %v3217, %v3228
      %v3254 = vadd.f32 %v3218, %v3228
      %v3255 = vadd.f32 %v3219, %v3228
      %v3256 = vadd.f32 %v3220, %v3228
      %v3257 = vadd.f32 %v3221, %v3228
      %v3258 = vadd.f32 %v3222, %v3228
      %v3259 = vadd.f32 %v3223, %v3228
      %v3260 = vadd.f32 %v3224, %v3228
      %v3261 = vlaneseq
      %v3262 = vshrl.u32 %v3261, 7
      %v3263 = vsub.s32 2, %v3262
      %v3264 = vrot.slane %v586, %v3263
      %v3265 = vmul.f32 %v2840, %v3264
      %v3266 = vmul.f32 %v2845, %v3264
      %v3267 = vmul.f32 %v2850, %v3264
      %v3268 = vmul.f32 %v2855, %v3264
      %v3269 = vmul.f32 %v2860, %v3264
      %v3270 = vmul.f32 %v2865, %v3264
      %v3271 = vmul.f32 %v2870, %v3264
      %v3272 = vmul.f32 %v2875, %v3264
      %v3273 = vmul.f32 %v2880, %v3264
      %v3274 = vmul.f32 %v2885, %v3264
      %v3275 = vmul.f32 %v2890, %v3264
      %v3276 = vmul.f32 %v2895, %v3264
      %v3277 = vmul.f32 %v2900, %v3264
      %v3278 = vmul.f32 %v2905, %v3264
      %v3279 = vmul.f32 %v2910, %v3264
      %v3280 = vmul.f32 %v2915, %v3264
      %v3281 = vmul.f32 %v2920, %v3264
      %v3282 = vmul.f32 %v2925, %v3264
      %v3283 = vmul.f32 %v2930, %v3264
      %v3284 = vmul.f32 %v2935, %v3264
      %v3285 = vmul.f32 %v2940, %v3264
      %v3286 = vmul.f32 %v2945, %v3264
      %v3287 = vmul.f32 %v2950, %v3264
      %v3288 = vmul.f32 %v2955, %v3264
      %v3289 = vmul.f32 %v2960, %v3264
      %v3290 = vmul.f32 %v2965, %v3264
      %v3291 = vmul.f32 %v2970, %v3264
      %v3292 = vmul.f32 %v2975, %v3264
      %v3293 = vmul.f32 %v2980, %v3264
      %v3294 = vmul.f32 %v2985, %v3264
      %v3295 = vmul.f32 %v2990, %v3264
      %v3296 = vmul.f32 %v2995, %v3264
      %v3297 = vlaneseq
      %v3298 = vshrl.u32 %v3297, 7
      %v3299 = vsub.s32 3, %v3298
      %v3300 = vrot.slane %v586, %v3299
      %v3301 = vadd.f32 %v3265, %v3300
      %v3302 = vadd.f32 %v3266, %v3300
      %v3303 = vadd.f32 %v3267, %v3300
      %v3304 = vadd.f32 %v3268, %v3300
      %v3305 = vadd.f32 %v3269, %v3300
      %v3306 = vadd.f32 %v3270, %v3300
      %v3307 = vadd.f32 %v3271, %v3300
      %v3308 = vadd.f32 %v3272, %v3300
      %v3309 = vadd.f32 %v3273, %v3300
      %v3310 = vadd.f32 %v3274, %v3300
      %v3311 = vadd.f32 %v3275, %v3300
      %v3312 = vadd.f32 %v3276, %v3300
      %v3313 = vadd.f32 %v3277, %v3300
      %v3314 = vadd.f32 %v3278, %v3300
      %v3315 = vadd.f32 %v3279, %v3300
      %v3316 = vadd.f32 %v3280, %v3300
      %v3317 = vadd.f32 %v3281, %v3300
      %v3318 = vadd.f32 %v3282, %v3300
      %v3319 = vadd.f32 %v3283, %v3300
      %v3320 = vadd.f32 %v3284, %v3300
      %v3321 = vadd.f32 %v3285, %v3300
      %v3322 = vadd.f32 %v3286, %v3300
      %v3323 = vadd.f32 %v3287, %v3300
      %v3324 = vadd.f32 %v3288, %v3300
      %v3325 = vadd.f32 %v3289, %v3300
      %v3326 = vadd.f32 %v3290, %v3300
      %v3327 = vadd.f32 %v3291, %v3300
      %v3328 = vadd.f32 %v3292, %v3300
      %v3329 = vadd.f32 %v3293, %v3300
      %v3330 = vadd.f32 %v3294, %v3300
      %v3331 = vadd.f32 %v3295, %v3300
      %v3332 = vadd.f32 %v3296, %v3300
      %v3333 = vadd.f32 %v1853, %v3229
      %v3334 = vadd.f32 %v1854, %v3230
      %v3335 = vadd.f32 %v1855, %v3231
      %v3336 = vadd.f32 %v1856, %v3232
      %v3337 = vadd.f32 %v1857, %v3233
      %v3338 = vadd.f32 %v1858, %v3234
      %v3339 = vadd.f32 %v1859, %v3235
      %v3340 = vadd.f32 %v1860, %v3236
      %v3341 = vadd.f32 %v1861, %v3237
      %v3342 = vadd.f32 %v1862, %v3238
      %v3343 = vadd.f32 %v1863, %v3239
      %v3344 = vadd.f32 %v1864, %v3240
      %v3345 = vadd.f32 %v1865, %v3241
      %v3346 = vadd.f32 %v1866, %v3242
      %v3347 = vadd.f32 %v1867, %v3243
      %v3348 = vadd.f32 %v1868, %v3244
      %v3349 = vadd.f32 %v1869, %v3245
      %v3350 = vadd.f32 %v1870, %v3246
      %v3351 = vadd.f32 %v1871, %v3247
      %v3352 = vadd.f32 %v1872, %v3248
      %v3353 = vadd.f32 %v1873, %v3249
      %v3354 = vadd.f32 %v1874, %v3250
      %v3355 = vadd.f32 %v1875, %v3251
      %v3356 = vadd.f32 %v1876, %v3252
      %v3357 = vadd.f32 %v1877, %v3253
      %v3358 = vadd.f32 %v1878, %v3254
      %v3359 = vadd.f32 %v1879, %v3255
      %v3360 = vadd.f32 %v1880, %v3256
      %v3361 = vadd.f32 %v1881, %v3257
      %v3362 = vadd.f32 %v1882, %v3258
      %v3363 = vadd.f32 %v1883, %v3259
      %v3364 = vadd.f32 %v1884, %v3260
      %v3365 = vadd.f32 %v3333, %v3301
      %v3366 = vadd.f32 %v3334, %v3302
      %v3367 = vadd.f32 %v3335, %v3303
      %v3368 = vadd.f32 %v3336, %v3304
      %v3369 = vadd.f32 %v3337, %v3305
      %v3370 = vadd.f32 %v3338, %v3306
      %v3371 = vadd.f32 %v3339, %v3307
      %v3372 = vadd.f32 %v3340, %v3308
      %v3373 = vadd.f32 %v3341, %v3309
      %v3374 = vadd.f32 %v3342, %v3310
      %v3375 = vadd.f32 %v3343, %v3311
      %v3376 = vadd.f32 %v3344, %v3312
      %v3377 = vadd.f32 %v3345, %v3313
      %v3378 = vadd.f32 %v3346, %v3314
      %v3379 = vadd.f32 %v3347, %v3315
      %v3380 = vadd.f32 %v3348, %v3316
      %v3381 = vadd.f32 %v3349, %v3317
      %v3382 = vadd.f32 %v3350, %v3318
      %v3383 = vadd.f32 %v3351, %v3319
      %v3384 = vadd.f32 %v3352, %v3320
      %v3385 = vadd.f32 %v3353, %v3321
      %v3386 = vadd.f32 %v3354, %v3322
      %v3387 = vadd.f32 %v3355, %v3323
      %v3388 = vadd.f32 %v3356, %v3324
      %v3389 = vadd.f32 %v3357, %v3325
      %v3390 = vadd.f32 %v3358, %v3326
      %v3391 = vadd.f32 %v3359, %v3327
      %v3392 = vadd.f32 %v3360, %v3328
      %v3393 = vadd.f32 %v3361, %v3329
      %v3394 = vadd.f32 %v3362, %v3330
      %v3395 = vadd.f32 %v3363, %v3331
      %v3396 = vadd.f32 %v3364, %v3332
      %v3397 = vpack.c.bf16 %v3366, %v3365
      %v3398 = vpack.c.bf16 %v3368, %v3367
      %v3399 = vpack.c.bf16 %v3370, %v3369
      %v3400 = vpack.c.bf16 %v3372, %v3371
      %v3401 = vpack.c.bf16 %v3374, %v3373
      %v3402 = vpack.c.bf16 %v3376, %v3375
      %v3403 = vpack.c.bf16 %v3378, %v3377
      %v3404 = vpack.c.bf16 %v3380, %v3379
      %v3405 = vpack.c.bf16 %v3382, %v3381
      %v3406 = vpack.c.bf16 %v3384, %v3383
      %v3407 = vpack.c.bf16 %v3386, %v3385
      %v3408 = vpack.c.bf16 %v3388, %v3387
      %v3409 = vpack.c.bf16 %v3390, %v3389
      %v3410 = vpack.c.bf16 %v3392, %v3391
      %v3411 = vpack.c.bf16 %v3394, %v3393
      %v3412 = vpack.c.bf16 %v3396, %v3395
      %v3429 = vunpack.c.l.b16 %v3397
      %v3430 = vunpack.c.h.b16 %v3397
      %v3431 = vunpack.c.l.b16 %v3398
      %v3432 = vunpack.c.h.b16 %v3398
      %v3433 = vunpack.c.l.b16 %v3399
      %v3434 = vunpack.c.h.b16 %v3399
      %v3435 = vunpack.c.l.b16 %v3400
      %v3436 = vunpack.c.h.b16 %v3400
      %v3437 = vunpack.c.l.b16 %v3401
      %v3438 = vunpack.c.h.b16 %v3401
      %v3439 = vunpack.c.l.b16 %v3402
      %v3440 = vunpack.c.h.b16 %v3402
      %v3441 = vunpack.c.l.b16 %v3403
      %v3442 = vunpack.c.h.b16 %v3403
      %v3443 = vunpack.c.l.b16 %v3404
      %v3444 = vunpack.c.h.b16 %v3404
      %v3445 = vunpack.c.l.b16 %v3405
      %v3446 = vunpack.c.h.b16 %v3405
      %v3447 = vunpack.c.l.b16 %v3406
      %v3448 = vunpack.c.h.b16 %v3406
      %v3449 = vunpack.c.l.b16 %v3407
      %v3450 = vunpack.c.h.b16 %v3407
      %v3451 = vunpack.c.l.b16 %v3408
      %v3452 = vunpack.c.h.b16 %v3408
      %v3453 = vunpack.c.l.b16 %v3409
      %v3454 = vunpack.c.h.b16 %v3409
      %v3455 = vunpack.c.l.b16 %v3410
      %v3456 = vunpack.c.h.b16 %v3410
      %v3457 = vunpack.c.l.b16 %v3411
      %v3458 = vunpack.c.h.b16 %v3411
      %v3459 = vunpack.c.l.b16 %v3412
      %v3460 = vunpack.c.h.b16 %v3412
      %v3461 = vpack.c.b16 %v3429, %v3429
      %v3462 = vpack.c.b16 %v3430, %v3430
      %v3463 = vpack.c.b16 %v3431, %v3431
      %v3464 = vpack.c.b16 %v3432, %v3432
      %v3465 = vpack.c.b16 %v3433, %v3433
      %v3466 = vpack.c.b16 %v3434, %v3434
      %v3467 = vpack.c.b16 %v3435, %v3435
      %v3468 = vpack.c.b16 %v3436, %v3436
      %v3469 = vpack.c.b16 %v3437, %v3437
      %v3470 = vpack.c.b16 %v3438, %v3438
      %v3471 = vpack.c.b16 %v3439, %v3439
      %v3472 = vpack.c.b16 %v3440, %v3440
      %v3473 = vpack.c.b16 %v3441, %v3441
      %v3474 = vpack.c.b16 %v3442, %v3442
      %v3475 = vpack.c.b16 %v3443, %v3443
      %v3476 = vpack.c.b16 %v3444, %v3444
      %v3477 = vpack.c.b16 %v3445, %v3445
      %v3478 = vpack.c.b16 %v3446, %v3446
      %v3479 = vpack.c.b16 %v3447, %v3447
      %v3480 = vpack.c.b16 %v3448, %v3448
      %v3481 = vpack.c.b16 %v3449, %v3449
      %v3482 = vpack.c.b16 %v3450, %v3450
      %v3483 = vpack.c.b16 %v3451, %v3451
      %v3484 = vpack.c.b16 %v3452, %v3452
      %v3485 = vpack.c.b16 %v3453, %v3453
      %v3486 = vpack.c.b16 %v3454, %v3454
      %v3487 = vpack.c.b16 %v3455, %v3455
      %v3488 = vpack.c.b16 %v3456, %v3456
      %v3489 = vpack.c.b16 %v3457, %v3457
      %v3490 = vpack.c.b16 %v3458, %v3458
      %v3491 = vpack.c.b16 %v3459, %v3459
      %v3492 = vpack.c.b16 %v3460, %v3460
      %3525 = vst [vmem:[%s476] sm:$0xf] %v3461
      %3526 = vst [vmem:[%s476 + $0x8] sm:$0xf] %v3462
      %3527 = vst [vmem:[%s476 + $0x10] sm:$0xf] %v3463
      %3528 = vst [vmem:[%s476 + $0x18] sm:$0xf] %v3464
      %3529 = vst [vmem:[%s476 + $0x20] sm:$0xf] %v3465
      %3530 = vst [vmem:[%s476 + $0x28] sm:$0xf] %v3466
      %3531 = vst [vmem:[%s476 + $0x30] sm:$0xf] %v3467
      %3532 = vst [vmem:[%s476 + $0x38] sm:$0xf] %v3468
      %3533 = vst [vmem:[%s476 + $0x40] sm:$0xf] %v3469
      %3534 = vst [vmem:[%s476 + $0x48] sm:$0xf] %v3470
      %3535 = vst [vmem:[%s476 + $0x50] sm:$0xf] %v3471
      %3536 = vst [vmem:[%s476 + $0x58] sm:$0xf] %v3472
      %3537 = vst [vmem:[%s476 + $0x60] sm:$0xf] %v3473
      %3538 = vst [vmem:[%s476 + $0x68] sm:$0xf] %v3474
      %3539 = vst [vmem:[%s476 + $0x70] sm:$0xf] %v3475
      %3540 = vst [vmem:[%s476 + $0x78] sm:$0xf] %v3476
      %3541 = vst [vmem:[%s476 + $0x80] sm:$0xf] %v3477
      %3542 = vst [vmem:[%s476 + $0x88] sm:$0xf] %v3478
      %3543 = vst [vmem:[%s476 + $0x90] sm:$0xf] %v3479
      %3544 = vst [vmem:[%s476 + $0x98] sm:$0xf] %v3480
      %3545 = vst [vmem:[%s476 + $0xa0] sm:$0xf] %v3481
      %3546 = vst [vmem:[%s476 + $0xa8] sm:$0xf] %v3482
      %3547 = vst [vmem:[%s476 + $0xb0] sm:$0xf] %v3483
      %3548 = vst [vmem:[%s476 + $0xb8] sm:$0xf] %v3484
      %3549 = vst [vmem:[%s476 + $0xc0] sm:$0xf] %v3485
      %3550 = vst [vmem:[%s476 + $0xc8] sm:$0xf] %v3486
      %3551 = vst [vmem:[%s476 + $0xd0] sm:$0xf] %v3487
      %3552 = vst [vmem:[%s476 + $0xd8] sm:$0xf] %v3488
      %3553 = vst [vmem:[%s476 + $0xe0] sm:$0xf] %v3489
      %3554 = vst [vmem:[%s476 + $0xe8] sm:$0xf] %v3490
      %3555 = vst [vmem:[%s476 + $0xf0] sm:$0xf] %v3491
      %3556 = vst [vmem:[%s476 + $0xf8] sm:$0xf] %v3492
      %v3557 = vpack.c.bf16 %v490, %v489
      %v3558 = vpack.c.bf16 %v492, %v491
      %v3559 = vpack.c.bf16 %v494, %v493
      %v3560 = vpack.c.bf16 %v496, %v495
      %v3561 = vpack.c.bf16 %v498, %v497
      %v3562 = vpack.c.bf16 %v500, %v499
      %v3563 = vpack.c.bf16 %v502, %v501
      %v3564 = vpack.c.bf16 %v504, %v503
      %v3565 = vpack.c.bf16 %v506, %v505
      %v3566 = vpack.c.bf16 %v508, %v507
      %v3567 = vpack.c.bf16 %v510, %v509
      %v3568 = vpack.c.bf16 %v512, %v511
      %v3569 = vpack.c.bf16 %v514, %v513
      %v3570 = vpack.c.bf16 %v516, %v515
      %v3571 = vpack.c.bf16 %v518, %v517
      %v3572 = vpack.c.bf16 %v520, %v519
      %v3589 = vunpack.c.l.b16 %v3557
      %v3590 = vunpack.c.h.b16 %v3557
      %v3591 = vunpack.c.l.b16 %v3558
      %v3592 = vunpack.c.h.b16 %v3558
      %v3593 = vunpack.c.l.b16 %v3559
      %v3594 = vunpack.c.h.b16 %v3559
      %v3595 = vunpack.c.l.b16 %v3560
      %v3596 = vunpack.c.h.b16 %v3560
      %v3597 = vunpack.c.l.b16 %v3561
      %v3598 = vunpack.c.h.b16 %v3561
      %v3599 = vunpack.c.l.b16 %v3562
      %v3600 = vunpack.c.h.b16 %v3562
      %v3601 = vunpack.c.l.b16 %v3563
      %v3602 = vunpack.c.h.b16 %v3563
      %v3603 = vunpack.c.l.b16 %v3564
      %v3604 = vunpack.c.h.b16 %v3564
      %v3605 = vunpack.c.l.b16 %v3565
      %v3606 = vunpack.c.h.b16 %v3565
      %v3607 = vunpack.c.l.b16 %v3566
      %v3608 = vunpack.c.h.b16 %v3566
      %v3609 = vunpack.c.l.b16 %v3567
      %v3610 = vunpack.c.h.b16 %v3567
      %v3611 = vunpack.c.l.b16 %v3568
      %v3612 = vunpack.c.h.b16 %v3568
      %v3613 = vunpack.c.l.b16 %v3569
      %v3614 = vunpack.c.h.b16 %v3569
      %v3615 = vunpack.c.l.b16 %v3570
      %v3616 = vunpack.c.h.b16 %v3570
      %v3617 = vunpack.c.l.b16 %v3571
      %v3618 = vunpack.c.h.b16 %v3571
      %v3619 = vunpack.c.l.b16 %v3572
      %v3620 = vunpack.c.h.b16 %v3572
      %v3621 = vpack.c.b16 %v3589, %v3589
      %v3622 = vpack.c.b16 %v3590, %v3590
      %v3623 = vpack.c.b16 %v3591, %v3591
      %v3624 = vpack.c.b16 %v3592, %v3592
      %v3625 = vpack.c.b16 %v3593, %v3593
      %v3626 = vpack.c.b16 %v3594, %v3594
      %v3627 = vpack.c.b16 %v3595, %v3595
      %v3628 = vpack.c.b16 %v3596, %v3596
      %v3629 = vpack.c.b16 %v3597, %v3597
      %v3630 = vpack.c.b16 %v3598, %v3598
      %v3631 = vpack.c.b16 %v3599, %v3599
      %v3632 = vpack.c.b16 %v3600, %v3600
      %v3633 = vpack.c.b16 %v3601, %v3601
      %v3634 = vpack.c.b16 %v3602, %v3602
      %v3635 = vpack.c.b16 %v3603, %v3603
      %v3636 = vpack.c.b16 %v3604, %v3604
      %v3637 = vpack.c.b16 %v3605, %v3605
      %v3638 = vpack.c.b16 %v3606, %v3606
      %v3639 = vpack.c.b16 %v3607, %v3607
      %v3640 = vpack.c.b16 %v3608, %v3608
      %v3641 = vpack.c.b16 %v3609, %v3609
      %v3642 = vpack.c.b16 %v3610, %v3610
      %v3643 = vpack.c.b16 %v3611, %v3611
      %v3644 = vpack.c.b16 %v3612, %v3612
      %v3645 = vpack.c.b16 %v3613, %v3613
      %v3646 = vpack.c.b16 %v3614, %v3614
      %v3647 = vpack.c.b16 %v3615, %v3615
      %v3648 = vpack.c.b16 %v3616, %v3616
      %v3649 = vpack.c.b16 %v3617, %v3617
      %v3650 = vpack.c.b16 %v3618, %v3618
      %v3651 = vpack.c.b16 %v3619, %v3619
      %v3652 = vpack.c.b16 %v3620, %v3620
      %3685 = vst [vmem:[%s476 + $0x4] sm:$0xf] %v3621
      %3686 = vst [vmem:[%s476 + $0xc] sm:$0xf] %v3622
      %3687 = vst [vmem:[%s476 + $0x14] sm:$0xf] %v3623
      %3688 = vst [vmem:[%s476 + $0x1c] sm:$0xf] %v3624
      %3689 = vst [vmem:[%s476 + $0x24] sm:$0xf] %v3625
      %3690 = vst [vmem:[%s476 + $0x2c] sm:$0xf] %v3626
      %3691 = vst [vmem:[%s476 + $0x34] sm:$0xf] %v3627
      %3692 = vst [vmem:[%s476 + $0x3c] sm:$0xf] %v3628
      %3693 = vst [vmem:[%s476 + $0x44] sm:$0xf] %v3629
      %3694 = vst [vmem:[%s476 + $0x4c] sm:$0xf] %v3630
      %3695 = vst [vmem:[%s476 + $0x54] sm:$0xf] %v3631
      %3696 = vst [vmem:[%s476 + $0x5c] sm:$0xf] %v3632
      %3697 = vst [vmem:[%s476 + $0x64] sm:$0xf] %v3633
      %3698 = vst [vmem:[%s476 + $0x6c] sm:$0xf] %v3634
      %3699 = vst [vmem:[%s476 + $0x74] sm:$0xf] %v3635
      %3700 = vst [vmem:[%s476 + $0x7c] sm:$0xf] %v3636
      %3701 = vst [vmem:[%s476 + $0x84] sm:$0xf] %v3637
      %3702 = vst [vmem:[%s476 + $0x8c] sm:$0xf] %v3638
      %3703 = vst [vmem:[%s476 + $0x94] sm:$0xf] %v3639
      %3704 = vst [vmem:[%s476 + $0x9c] sm:$0xf] %v3640
      %3705 = vst [vmem:[%s476 + $0xa4] sm:$0xf] %v3641
      %3706 = vst [vmem:[%s476 + $0xac] sm:$0xf] %v3642
      %3707 = vst [vmem:[%s476 + $0xb4] sm:$0xf] %v3643
      %3708 = vst [vmem:[%s476 + $0xbc] sm:$0xf] %v3644
      %3709 = vst [vmem:[%s476 + $0xc4] sm:$0xf] %v3645
      %3710 = vst [vmem:[%s476 + $0xcc] sm:$0xf] %v3646
      %3711 = vst [vmem:[%s476 + $0xd4] sm:$0xf] %v3647
      %3712 = vst [vmem:[%s476 + $0xdc] sm:$0xf] %v3648
      %3713 = vst [vmem:[%s476 + $0xe4] sm:$0xf] %v3649
      %3714 = vst [vmem:[%s476 + $0xec] sm:$0xf] %v3650
      %3715 = vst [vmem:[%s476 + $0xf4] sm:$0xf] %v3651
      %3716 = vst [vmem:[%s476 + $0xfc] sm:$0xf] %v3652
      %s3717 = smul.u32 32, %s34
      %p3718 = scmp.lt.s32.totalorder %s33, 1
      %s3719 = scalar_select %p3718, %s33, 1
      %p3720 = scmp.lt.s32.totalorder %s3717, 31
      %s3721 = scalar_select %p3720, %s3717, 31
      %s3722 = smul.addr %s3721, 2
      %s3723 = smul.addr %s3719, 64
      %s3724 = sadd.s32 %s3722, %s3723
      %s3725 = smul.addr %s3724, 4
      %s3726 = scalar_lea.vmem %s10, %s3725
      %s3727 = smul.u32 32, %s34
      %p3728 = scmp.lt.s32.totalorder %s33, 1
      %s3729 = scalar_select %p3728, %s33, 1
      %p3730 = scmp.lt.s32.totalorder %s3727, 31
      %s3731 = scalar_select %p3730, %s3727, 31
      %s3732 = smul.addr %s3729, 32
      %s3733 = sadd.s32 %s3731, %s3732
      %s3734 = smul.addr %s3733, 8
      %s3735 = scalar_lea.vmem %s11, %s3734
      // Predicated region
      $region57: #{frontend_forward.2} parent=55 // pred_check
        %p3736 = pneg %p269
      $region58: #{frontend_forward.2} parent=55 // pred_check_branch
        %3738 = sbr.rel (%p3736) target = $region60
      $region59: #{frontend_forward.2} parent=55 // pred_region
        %s3739 = smul.u32 32, %s34
      $region60: #{frontend_forward.2} parent=55 // pred_fallthru
        _
      // Predicated region
      $region61: #{frontend_forward.2} parent=55 // pred_check
        %p3740 = pneg %p297
      $region62: #{frontend_forward.2} parent=55 // pred_check_branch
        %3742 = sbr.rel (%p3740) target = $region64
      $region63: #{frontend_forward.2} parent=55 // pred_region
        %s3743 = smul.u32 32, %s34
      $region64: #{frontend_forward.2} parent=55 // pred_fallthru
        _
    $region56: #{frontend_forward.2} parent=5 // pred_fallthru
      _
    %p3744 = scmp.le.s32.totalorder 2, %s24
    // Predicated region
    $region65: #{frontend_forward.2} parent=5 // pred_check
      %p3745 = pneg %p3744
    $region66: #{frontend_forward.2} parent=5 // pred_check_branch
      %3747 = sbr.rel (%p3745) target = $region68
    $region67: #{frontend_forward.2} parent=5 // pred_region
      %s3748 = ssub.s32 %s24, 2
      // Predicated region
      $region69: #{frontend_forward.2} parent=67 // pred_check
        %p3749 = pneg %p275
      $region70: #{frontend_forward.2} parent=67 // pred_check_branch
        %3751 = sbr.rel (%p3749) target = $region72
      $region71: #{frontend_forward.2} parent=67 // pred_region
        %s3752 = smul.u32 32, %s36
        %p3753 = scmp.lt.s32.totalorder %s35, 1
        %s3754 = scalar_select %p3753, %s35, 1
        %p3755 = scmp.lt.s32.totalorder %s3752, 31
        %s3756 = scalar_select %p3755, %s3752, 31
        %s3757 = smul.addr %s3756, 2
        %s3758 = smul.addr %s3754, 64
        %s3759 = sadd.s32 %s3757, %s3758
        %s3760 = smul.addr %s3759, 4
        %s3761 = scalar_lea.vmem %s10, %s3760
      $region72: #{frontend_forward.2} parent=67 // pred_fallthru
        _
      // Predicated region
      $region73: #{frontend_forward.2} parent=67 // pred_check
        %p3762 = pneg %p303
      $region74: #{frontend_forward.2} parent=67 // pred_check_branch
        %3764 = sbr.rel (%p3762) target = $region76
      $region75: #{frontend_forward.2} parent=67 // pred_region
        %s3765 = smul.u32 32, %s36
        %p3766 = scmp.lt.s32.totalorder %s35, 1
        %s3767 = scalar_select %p3766, %s35, 1
        %p3768 = scmp.lt.s32.totalorder %s3765, 31
        %s3769 = scalar_select %p3768, %s3765, 31
        %s3770 = smul.addr %s3767, 32
        %s3771 = sadd.s32 %s3769, %s3770
        %s3772 = smul.addr %s3771, 8
        %s3773 = scalar_lea.vmem %s11, %s3772
      $region76: #{frontend_forward.2} parent=67 // pred_fallthru
        _
    $region68: #{frontend_forward.2} parent=5 // pred_fallthru
      _
  $region6: #{frontend_forward.2} parent=0 // loop_footer
    %s28 = sadd.s32 1, %s24
  $region7: #{frontend_forward.2} parent=0 // loop_footer_branch
    %23 = sbr.rel target = $region3
  $region8: #{frontend_forward.2} parent=0 // loop_exit
    _

</llo_original>
